<compile_context>
chip_gen: v7x
topology: tpu7x:2x2x1
jax: 0.10.0
libtpu: 0.0.40
codegen_flags: <defaults>
</compile_context>

<pallas_src>
import jax
import jax.numpy as jnp
from jax.experimental import pallas as pl
from jax.experimental.pallas import tpu as pltpu

INPUT_DIM = 1000
INPUT_PAD = 1024          # next multiple of 128 (lane-aligned)
LATENT_DIM = 128
H1 = 512
H2 = 256


def _vae_kernel(
    x_ref, eps_ref,
    we1_ref, be1_ref, we2_ref, be2_ref,
    wml_ref, bml_ref,                      # fused mu|logvar head
    wd1_ref, bd1_ref, wd2_ref, bd2_ref,
    wo_ref, bo_ref,
    recon_ref, mu_ref, logvar_ref,
):
    bf16 = jnp.bfloat16

    # ---- encode (bf16 MXU operands, f32 accumulate, f32 elementwise) ----
    h = jnp.dot(x_ref[...], we1_ref[...],
                preferred_element_type=jnp.float32) + be1_ref[...]
    h = jnp.maximum(h, 0.0)
    h = jnp.dot(h.astype(bf16), we2_ref[...],
                preferred_element_type=jnp.float32) + be2_ref[...]
    h = jnp.maximum(h, 0.0)

    # fused mu|logvar: single N=256 matmul, split on lane-aligned boundary
    ml = jnp.dot(h.astype(bf16), wml_ref[...],
                 preferred_element_type=jnp.float32) + bml_ref[...]
    mu = ml[:, :LATENT_DIM]
    logvar = ml[:, LATENT_DIM:]

    # ---- reparameterize: z = mu + eps * exp(0.5 * logvar)  (f32) ----
    std = jnp.exp(0.5 * logvar)
    z = mu + eps_ref[...] * std

    # ---- decode ----
    d = jnp.dot(z.astype(bf16), wd1_ref[...],
                preferred_element_type=jnp.float32) + bd1_ref[...]
    d = jnp.maximum(d, 0.0)
    d = jnp.dot(d.astype(bf16), wd2_ref[...],
                preferred_element_type=jnp.float32) + bd2_ref[...]
    d = jnp.maximum(d, 0.0)
    logits = jnp.dot(d.astype(bf16), wo_ref[...],
                     preferred_element_type=jnp.float32) + bo_ref[...]

    recon_ref[...] = jax.nn.sigmoid(logits)
    mu_ref[...] = mu
    logvar_ref[...] = logvar


def _round_up(v, m):
    return (v + m - 1) // m * m


def vae_forward(x, eps, params, *, batch_tile=128):
    """x: (B, INPUT_DIM) f32, eps: (B, LATENT_DIM) f32, params: f32 dict."""
    B = x.shape[0]
    TB = min(batch_tile, _round_up(B, 8))      # batch tile, multiple of 8
    Bp = _round_up(B, TB)

    # ---- pad batch / input-feature dims (zero padding keeps math exact).
    # x is cast to bf16 here: the kernel would cast it anyway for the MXU,
    # so this is numerically identical but halves the activation DMA.
    xp = (jnp.zeros((Bp, INPUT_PAD), jnp.float32)
          .at[:B, :INPUT_DIM].set(x)).astype(jnp.bfloat16)
    epsp = jnp.zeros((Bp, LATENT_DIM), jnp.float32).at[:B].set(eps)

    # ---- pack / pad / cast weights: bf16 weights, f32 biases ----
    we1 = (jnp.zeros((INPUT_PAD, H1), jnp.float32)
           .at[:INPUT_DIM].set(params["we1"])).astype(jnp.bfloat16)
    be1 = params["be1"]
    we2 = params["we2"].astype(jnp.bfloat16)
    be2 = params["be2"]
    wml = jnp.concatenate([params["wmu"], params["wlv"]], axis=1).astype(jnp.bfloat16)
    bml = jnp.concatenate([params["bmu"], params["blv"]], axis=1)
    wd1 = params["wd1"].astype(jnp.bfloat16)
    bd1 = params["bd1"]
    wd2 = params["wd2"].astype(jnp.bfloat16)
    bd2 = params["bd2"]
    wo = (jnp.zeros((H1, INPUT_PAD), jnp.float32)
          .at[:, :INPUT_DIM].set(params["wo"])).astype(jnp.bfloat16)
    bo = jnp.zeros((1, INPUT_PAD), jnp.float32).at[:, :INPUT_DIM].set(params["bo"])

    args = (xp, epsp, we1, be1, we2, be2, wml, bml, wd1, bd1, wd2, bd2, wo, bo)

    # ---- specs: batch-tiled activations, weight blocks resident across grid ----
    def batch_spec(width):
        return pl.BlockSpec((TB, width), lambda i: (i, 0))

    def resident_spec(arr):
        return pl.BlockSpec(arr.shape, lambda i: (0, 0))

    in_specs = ([batch_spec(INPUT_PAD), batch_spec(LATENT_DIM)]
                + [resident_spec(a) for a in args[2:]])
    out_specs = (batch_spec(INPUT_PAD), batch_spec(LATENT_DIM),
                 batch_spec(LATENT_DIM))
    out_shapes = (
        jax.ShapeDtypeStruct((Bp, INPUT_PAD), jnp.float32),   # recon (padded)
        jax.ShapeDtypeStruct((Bp, LATENT_DIM), jnp.float32),  # mu
        jax.ShapeDtypeStruct((Bp, LATENT_DIM), jnp.float32),  # logvar
    )

    # ---- advisory cost estimate for the XLA scheduler ----
    flops = 2 * Bp * (INPUT_PAD * H1 + H1 * H2 + H2 * (2 * LATENT_DIM)
                      + LATENT_DIM * H2 + H2 * H1 + H1 * INPUT_PAD)
    weight_bytes = sum(int(a.size) * a.dtype.itemsize for a in args[2:])
    act_bytes = int(xp.size) * 2 + int(epsp.size) * 4                 # inputs
    act_bytes += (Bp * INPUT_PAD + 2 * Bp * LATENT_DIM) * 4           # outputs
    cost = pl.CostEstimate(
        flops=flops,
        transcendentals=Bp * (LATENT_DIM + INPUT_PAD),                # exp + sigmoid
        bytes_accessed=weight_bytes + act_bytes,
    )

    recon, mu, logvar = pl.pallas_call(
        _vae_kernel,
        out_shape=out_shapes,
        grid=(Bp // TB,),
        in_specs=in_specs,
        out_specs=out_specs,
        compiler_params=pltpu.CompilerParams(
            dimension_semantics=("parallel",),
            vmem_limit_bytes=32 << 20,        # fits v7x's 64 MiB/TC with headroom
        ),
        cost_estimate=cost,
    )(*args)

    return recon[:B, :INPUT_DIM], mu[:B], logvar[:B]


def init_params(key):
    """Deterministic synthetic weights, shapes matching the PyTorch module.

    Stored as (in, out); PyTorch nn.Linear stores (out, in)."""
    def linear(k, fan_in, fan_out):
        kw, kb = jax.random.split(k)
        scale = 1.0 / jnp.sqrt(fan_in)
        w = jax.random.uniform(kw, (fan_in, fan_out), jnp.float32, -scale, scale)
        b = jax.random.uniform(kb, (1, fan_out), jnp.float32, -scale, scale)
        return w, b

    keys = jax.random.split(key, 7)
    p = {}
    p["we1"], p["be1"] = linear(keys[0], INPUT_DIM, H1)
    p["we2"], p["be2"] = linear(keys[1], H1, H2)
    p["wmu"], p["bmu"] = linear(keys[2], H2, LATENT_DIM)
    p["wlv"], p["blv"] = linear(keys[3], H2, LATENT_DIM)
    p["wd1"], p["bd1"] = linear(keys[4], LATENT_DIM, H2)
    p["wd2"], p["bd2"] = linear(keys[5], H2, H1)
    p["wo"], p["bo"] = linear(keys[6], H1, INPUT_DIM)
    return p


def vae_forward_ref(x, eps, p):
    """Pure-JAX f32 reference for correctness check."""
    h = jax.nn.relu(x @ p["we1"] + p["be1"])
    h = jax.nn.relu(h @ p["we2"] + p["be2"])
    mu = h @ p["wmu"] + p["bmu"]
    logvar = h @ p["wlv"] + p["blv"]
    z = mu + eps * jnp.exp(0.5 * logvar)
    d = jax.nn.relu(z @ p["wd1"] + p["bd1"])
    d = jax.nn.relu(d @ p["wd2"] + p["bd2"])
    recon = jax.nn.sigmoid(d @ p["wo"] + p["bo"])
    return recon, mu, logvar


if __name__ == "__main__":
    key = jax.random.PRNGKey(0)
    k_param, k_x, k_eps = jax.random.split(key, 3)

    B = 8
    params = init_params(k_param)
    x = jax.random.normal(k_x, (B, INPUT_DIM), jnp.float32)
    # eps plays the role of torch.randn_like(std) — drawn deterministically here.
    eps = jax.random.normal(k_eps, (B, LATENT_DIM), jnp.float32)

    recon, mu, logvar = jax.block_until_ready(vae_forward(x, eps, params))

    # f32 reference; tolerances loosened for bf16 matmul operands.
    recon_r, mu_r, logvar_r = vae_forward_ref(x, eps, params)
    assert recon.shape == (B, INPUT_DIM)
    assert mu.shape == (B, LATENT_DIM) and logvar.shape == (B, LATENT_DIM)
    assert jnp.allclose(recon, recon_r, atol=5e-2, rtol=5e-2)
    assert jnp.allclose(mu, mu_r, atol=5e-2, rtol=5e-2)
    assert jnp.allclose(logvar, logvar_r, atol=5e-2, rtol=5e-2)

    print("KERNEL_OK")
</pallas_src>

<mosaic_0001>
module attributes {stable_mosaic.version = 11 : i64} {
  func.func @_vae_kernel(%arg0: i32, %arg1: memref<8x1024xbf16, #tpu.memory_space<vmem>>, %arg2: memref<8x128xf32, #tpu.memory_space<vmem>>, %arg3: memref<1024x512xbf16, #tpu.memory_space<vmem>>, %arg4: memref<1x512xf32, #tpu.memory_space<vmem>>, %arg5: memref<512x256xbf16, #tpu.memory_space<vmem>>, %arg6: memref<1x256xf32, #tpu.memory_space<vmem>>, %arg7: memref<256x256xbf16, #tpu.memory_space<vmem>>, %arg8: memref<1x256xf32, #tpu.memory_space<vmem>>, %arg9: memref<128x256xbf16, #tpu.memory_space<vmem>>, %arg10: memref<1x256xf32, #tpu.memory_space<vmem>>, %arg11: memref<256x512xbf16, #tpu.memory_space<vmem>>, %arg12: memref<1x512xf32, #tpu.memory_space<vmem>>, %arg13: memref<512x1024xbf16, #tpu.memory_space<vmem>>, %arg14: memref<1x1024xf32, #tpu.memory_space<vmem>>, %arg15: memref<8x1024xf32, #tpu.memory_space<vmem>>, %arg16: memref<8x128xf32, #tpu.memory_space<vmem>>, %arg17: memref<8x128xf32, #tpu.memory_space<vmem>>) attributes {dimension_semantics = [#tpu.dimension_semantics<parallel>], iteration_bounds = array<i64: 1>, scalar_prefetch = 0 : i64, scratch_operands = 0 : i64, tpu.core_type = #tpu.core_type<tc>, window_params = [{transform_indices = @transform_0, window_bounds = array<i64: 8, 1024>}, {transform_indices = @transform_1, window_bounds = array<i64: 8, 128>}, {pipeline_mode = #tpu.pipeline_mode<synchronous>, transform_indices = @transform_2, window_bounds = array<i64: 1024, 512>}, {pipeline_mode = #tpu.pipeline_mode<synchronous>, transform_indices = @transform_3, window_bounds = array<i64: 1, 512>}, {pipeline_mode = #tpu.pipeline_mode<synchronous>, transform_indices = @transform_4, window_bounds = array<i64: 512, 256>}, {pipeline_mode = #tpu.pipeline_mode<synchronous>, transform_indices = @transform_5, window_bounds = array<i64: 1, 256>}, {pipeline_mode = #tpu.pipeline_mode<synchronous>, transform_indices = @transform_6, window_bounds = array<i64: 256, 256>}, {pipeline_mode = #tpu.pipeline_mode<synchronous>, transform_indices = @transform_7, window_bounds = array<i64: 1, 256>}, {pipeline_mode = #tpu.pipeline_mode<synchronous>, transform_indices = @transform_8, window_bounds = array<i64: 128, 256>}, {pipeline_mode = #tpu.pipeline_mode<synchronous>, transform_indices = @transform_9, window_bounds = array<i64: 1, 256>}, {pipeline_mode = #tpu.pipeline_mode<synchronous>, transform_indices = @transform_10, window_bounds = array<i64: 256, 512>}, {pipeline_mode = #tpu.pipeline_mode<synchronous>, transform_indices = @transform_11, window_bounds = array<i64: 1, 512>}, {pipeline_mode = #tpu.pipeline_mode<synchronous>, transform_indices = @transform_12, window_bounds = array<i64: 512, 1024>}, {pipeline_mode = #tpu.pipeline_mode<synchronous>, transform_indices = @transform_13, window_bounds = array<i64: 1, 1024>}, {transform_indices = @transform_14, window_bounds = array<i64: 8, 1024>}, {transform_indices = @transform_15, window_bounds = array<i64: 8, 128>}, {transform_indices = @transform_16, window_bounds = array<i64: 8, 128>}]} {
    %c0 = arith.constant 0 : index
    %c0_0 = arith.constant 0 : index
    %0 = vector.load %arg1[%c0, %c0_0] : memref<8x1024xbf16, #tpu.memory_space<vmem>>, vector<8x1024xbf16>
    %c0_1 = arith.constant 0 : index
    %c0_2 = arith.constant 0 : index
    %1 = vector.load %arg3[%c0_1, %c0_2] : memref<1024x512xbf16, #tpu.memory_space<vmem>>, vector<1024x512xbf16>
    %cst = arith.constant dense<0.000000e+00> : vector<8x512xf32>
    %2 = tpu.matmul %0, %1, %cst {dimension_numbers = #tpu.dot_dimension_numbers<[1], [0], [0], [1], [0, 0, 1, 1], [], []>} : vector<8x1024xbf16>, vector<1024x512xbf16>, vector<8x512xf32> -> vector<8x512xf32>
    %c0_3 = arith.constant 0 : index
    %c0_4 = arith.constant 0 : index
    %3 = vector.load %arg4[%c0_3, %c0_4] : memref<1x512xf32, #tpu.memory_space<vmem>>, vector<1x512xf32>
    %4 = vector.broadcast %3 : vector<1x512xf32> to vector<8x512xf32>
    %5 = arith.addf %2, %4 : vector<8x512xf32>
    %cst_5 = arith.constant 0.000000e+00 : f32
    %6 = vector.broadcast %cst_5 : f32 to vector<8x512xf32>
    %7 = arith.maximumf %5, %6 : vector<8x512xf32>
    %8 = arith.truncf %7 : vector<8x512xf32> to vector<8x512xbf16>
    %c0_6 = arith.constant 0 : index
    %c0_7 = arith.constant 0 : index
    %9 = vector.load %arg5[%c0_6, %c0_7] : memref<512x256xbf16, #tpu.memory_space<vmem>>, vector<512x256xbf16>
    %cst_8 = arith.constant dense<0.000000e+00> : vector<8x256xf32>
    %10 = tpu.matmul %8, %9, %cst_8 {dimension_numbers = #tpu.dot_dimension_numbers<[1], [0], [0], [1], [0, 0, 1, 1], [], []>} : vector<8x512xbf16>, vector<512x256xbf16>, vector<8x256xf32> -> vector<8x256xf32>
    %c0_9 = arith.constant 0 : index
    %c0_10 = arith.constant 0 : index
    %11 = vector.load %arg6[%c0_9, %c0_10] : memref<1x256xf32, #tpu.memory_space<vmem>>, vector<1x256xf32>
    %12 = vector.broadcast %11 : vector<1x256xf32> to vector<8x256xf32>
    %13 = arith.addf %10, %12 : vector<8x256xf32>
    %cst_11 = arith.constant 0.000000e+00 : f32
    %14 = vector.broadcast %cst_11 : f32 to vector<8x256xf32>
    %15 = arith.maximumf %13, %14 : vector<8x256xf32>
    %16 = arith.truncf %15 : vector<8x256xf32> to vector<8x256xbf16>
    %c0_12 = arith.constant 0 : index
    %c0_13 = arith.constant 0 : index
    %17 = vector.load %arg7[%c0_12, %c0_13] : memref<256x256xbf16, #tpu.memory_space<vmem>>, vector<256x256xbf16>
    %cst_14 = arith.constant dense<0.000000e+00> : vector<8x256xf32>
    %18 = tpu.matmul %16, %17, %cst_14 {dimension_numbers = #tpu.dot_dimension_numbers<[1], [0], [0], [1], [0, 0, 1, 1], [], []>} : vector<8x256xbf16>, vector<256x256xbf16>, vector<8x256xf32> -> vector<8x256xf32>
    %c0_15 = arith.constant 0 : index
    %c0_16 = arith.constant 0 : index
    %19 = vector.load %arg8[%c0_15, %c0_16] : memref<1x256xf32, #tpu.memory_space<vmem>>, vector<1x256xf32>
    %20 = vector.broadcast %19 : vector<1x256xf32> to vector<8x256xf32>
    %21 = arith.addf %18, %20 : vector<8x256xf32>
    %22 = vector.extract_strided_slice %21 {offsets = [0, 0], sizes = [8, 128], strides = [1, 1]} : vector<8x256xf32> to vector<8x128xf32>
    %23 = vector.extract_strided_slice %21 {offsets = [0, 128], sizes = [8, 128], strides = [1, 1]} : vector<8x256xf32> to vector<8x128xf32>
    %cst_17 = arith.constant 5.000000e-01 : f32
    %24 = vector.broadcast %cst_17 : f32 to vector<8x128xf32>
    %25 = arith.mulf %24, %23 : vector<8x128xf32>
    %26 = math.exp %25 : vector<8x128xf32>
    %c0_18 = arith.constant 0 : index
    %c0_19 = arith.constant 0 : index
    %27 = vector.load %arg2[%c0_18, %c0_19] : memref<8x128xf32, #tpu.memory_space<vmem>>, vector<8x128xf32>
    %28 = arith.mulf %27, %26 : vector<8x128xf32>
    %29 = arith.addf %22, %28 : vector<8x128xf32>
    %30 = arith.truncf %29 : vector<8x128xf32> to vector<8x128xbf16>
    %c0_20 = arith.constant 0 : index
    %c0_21 = arith.constant 0 : index
    %31 = vector.load %arg9[%c0_20, %c0_21] : memref<128x256xbf16, #tpu.memory_space<vmem>>, vector<128x256xbf16>
    %cst_22 = arith.constant dense<0.000000e+00> : vector<8x256xf32>
    %32 = tpu.matmul %30, %31, %cst_22 {dimension_numbers = #tpu.dot_dimension_numbers<[1], [0], [0], [1], [0, 0, 1, 1], [], []>} : vector<8x128xbf16>, vector<128x256xbf16>, vector<8x256xf32> -> vector<8x256xf32>
    %c0_23 = arith.constant 0 : index
    %c0_24 = arith.constant 0 : index
    %33 = vector.load %arg10[%c0_23, %c0_24] : memref<1x256xf32, #tpu.memory_space<vmem>>, vector<1x256xf32>
    %34 = vector.broadcast %33 : vector<1x256xf32> to vector<8x256xf32>
    %35 = arith.addf %32, %34 : vector<8x256xf32>
    %cst_25 = arith.constant 0.000000e+00 : f32
    %36 = vector.broadcast %cst_25 : f32 to vector<8x256xf32>
    %37 = arith.maximumf %35, %36 : vector<8x256xf32>
    %38 = arith.truncf %37 : vector<8x256xf32> to vector<8x256xbf16>
    %c0_26 = arith.constant 0 : index
    %c0_27 = arith.constant 0 : index
    %39 = vector.load %arg11[%c0_26, %c0_27] : memref<256x512xbf16, #tpu.memory_space<vmem>>, vector<256x512xbf16>
    %cst_28 = arith.constant dense<0.000000e+00> : vector<8x512xf32>
    %40 = tpu.matmul %38, %39, %cst_28 {dimension_numbers = #tpu.dot_dimension_numbers<[1], [0], [0], [1], [0, 0, 1, 1], [], []>} : vector<8x256xbf16>, vector<256x512xbf16>, vector<8x512xf32> -> vector<8x512xf32>
    %c0_29 = arith.constant 0 : index
    %c0_30 = arith.constant 0 : index
    %41 = vector.load %arg12[%c0_29, %c0_30] : memref<1x512xf32, #tpu.memory_space<vmem>>, vector<1x512xf32>
    %42 = vector.broadcast %41 : vector<1x512xf32> to vector<8x512xf32>
    %43 = arith.addf %40, %42 : vector<8x512xf32>
    %cst_31 = arith.constant 0.000000e+00 : f32
    %44 = vector.broadcast %cst_31 : f32 to vector<8x512xf32>
    %45 = arith.maximumf %43, %44 : vector<8x512xf32>
    %46 = arith.truncf %45 : vector<8x512xf32> to vector<8x512xbf16>
    %c0_32 = arith.constant 0 : index
    %c0_33 = arith.constant 0 : index
    %47 = vector.load %arg13[%c0_32, %c0_33] : memref<512x1024xbf16, #tpu.memory_space<vmem>>, vector<512x1024xbf16>
    %cst_34 = arith.constant dense<0.000000e+00> : vector<8x1024xf32>
    %48 = tpu.matmul %46, %47, %cst_34 {dimension_numbers = #tpu.dot_dimension_numbers<[1], [0], [0], [1], [0, 0, 1, 1], [], []>} : vector<8x512xbf16>, vector<512x1024xbf16>, vector<8x1024xf32> -> vector<8x1024xf32>
    %c0_35 = arith.constant 0 : index
    %c0_36 = arith.constant 0 : index
    %49 = vector.load %arg14[%c0_35, %c0_36] : memref<1x1024xf32, #tpu.memory_space<vmem>>, vector<1x1024xf32>
    %50 = vector.broadcast %49 : vector<1x1024xf32> to vector<8x1024xf32>
    %51 = arith.addf %48, %50 : vector<8x1024xf32>
    %52 = arith.negf %51 : vector<8x1024xf32>
    %53 = math.exp %52 : vector<8x1024xf32>
    %cst_37 = arith.constant 1.000000e+00 : f32
    %54 = vector.broadcast %cst_37 : f32 to vector<8x1024xf32>
    %55 = arith.addf %54, %53 : vector<8x1024xf32>
    %56 = arith.divf %54, %55 : vector<8x1024xf32>
    %c0_38 = arith.constant 0 : index
    %c0_39 = arith.constant 0 : index
    %57 = vector.load %arg15[%c0_38, %c0_39] : memref<8x1024xf32, #tpu.memory_space<vmem>>, vector<8x1024xf32>
    tpu.vector_store %arg15[%c0_38, %c0_39], %56 {strides = array<i32>} : memref<8x1024xf32, #tpu.memory_space<vmem>>, vector<8x1024xf32>,
    %c0_40 = arith.constant 0 : index
    %c0_41 = arith.constant 0 : index
    %58 = vector.load %arg16[%c0_40, %c0_41] : memref<8x128xf32, #tpu.memory_space<vmem>>, vector<8x128xf32>
    tpu.vector_store %arg16[%c0_40, %c0_41], %22 {strides = array<i32>} : memref<8x128xf32, #tpu.memory_space<vmem>>, vector<8x128xf32>,
    %c0_42 = arith.constant 0 : index
    %c0_43 = arith.constant 0 : index
    %59 = vector.load %arg17[%c0_42, %c0_43] : memref<8x128xf32, #tpu.memory_space<vmem>>, vector<8x128xf32>
    tpu.vector_store %arg17[%c0_42, %c0_43], %23 {strides = array<i32>} : memref<8x128xf32, #tpu.memory_space<vmem>>, vector<8x128xf32>,
    return
  }
  func.func @transform_0(%arg0: i32) -> (i32, i32) {
    %c0_i32 = arith.constant 0 : i32
    %c0_i32_0 = arith.constant 0 : i32
    return %arg0, %c0_i32 : i32, i32
  }
  func.func @transform_1(%arg0: i32) -> (i32, i32) {
    %c0_i32 = arith.constant 0 : i32
    %c0_i32_0 = arith.constant 0 : i32
    return %arg0, %c0_i32 : i32, i32
  }
  func.func @transform_2(%arg0: i32) -> (i32, i32) {
    %c0_i32 = arith.constant 0 : i32
    %c0_i32_0 = arith.constant 0 : i32
    %c0_i32_1 = arith.constant 0 : i32
    return %c0_i32, %c0_i32_0 : i32, i32
  }
  func.func @transform_3(%arg0: i32) -> (i32, i32) {
    %c0_i32 = arith.constant 0 : i32
    %c0_i32_0 = arith.constant 0 : i32
    %c0_i32_1 = arith.constant 0 : i32
    return %c0_i32, %c0_i32_0 : i32, i32
  }
  func.func @transform_4(%arg0: i32) -> (i32, i32) {
    %c0_i32 = arith.constant 0 : i32
    %c0_i32_0 = arith.constant 0 : i32
    %c0_i32_1 = arith.constant 0 : i32
    return %c0_i32, %c0_i32_0 : i32, i32
  }
  func.func @transform_5(%arg0: i32) -> (i32, i32) {
    %c0_i32 = arith.constant 0 : i32
    %c0_i32_0 = arith.constant 0 : i32
    %c0_i32_1 = arith.constant 0 : i32
    return %c0_i32, %c0_i32_0 : i32, i32
  }
  func.func @transform_6(%arg0: i32) -> (i32, i32) {
    %c0_i32 = arith.constant 0 : i32
    %c0_i32_0 = arith.constant 0 : i32
    %c0_i32_1 = arith.constant 0 : i32
    return %c0_i32, %c0_i32_0 : i32, i32
  }
  func.func @transform_7(%arg0: i32) -> (i32, i32) {
    %c0_i32 = arith.constant 0 : i32
    %c0_i32_0 = arith.constant 0 : i32
    %c0_i32_1 = arith.constant 0 : i32
    return %c0_i32, %c0_i32_0 : i32, i32
  }
  func.func @transform_8(%arg0: i32) -> (i32, i32) {
    %c0_i32 = arith.constant 0 : i32
    %c0_i32_0 = arith.constant 0 : i32
    %c0_i32_1 = arith.constant 0 : i32
    return %c0_i32, %c0_i32_0 : i32, i32
  }
  func.func @transform_9(%arg0: i32) -> (i32, i32) {
    %c0_i32 = arith.constant 0 : i32
    %c0_i32_0 = arith.constant 0 : i32
    %c0_i32_1 = arith.constant 0 : i32
    return %c0_i32, %c0_i32_0 : i32, i32
  }
  func.func @transform_10(%arg0: i32) -> (i32, i32) {
    %c0_i32 = arith.constant 0 : i32
    %c0_i32_0 = arith.constant 0 : i32
    %c0_i32_1 = arith.constant 0 : i32
    return %c0_i32, %c0_i32_0 : i32, i32
  }
  func.func @transform_11(%arg0: i32) -> (i32, i32) {
    %c0_i32 = arith.constant 0 : i32
    %c0_i32_0 = arith.constant 0 : i32
    %c0_i32_1 = arith.constant 0 : i32
    return %c0_i32, %c0_i32_0 : i32, i32
  }
  func.func @transform_12(%arg0: i32) -> (i32, i32) {
    %c0_i32 = arith.constant 0 : i32
    %c0_i32_0 = arith.constant 0 : i32
    %c0_i32_1 = arith.constant 0 : i32
    return %c0_i32, %c0_i32_0 : i32, i32
  }
  func.func @transform_13(%arg0: i32) -> (i32, i32) {
    %c0_i32 = arith.constant 0 : i32
    %c0_i32_0 = arith.constant 0 : i32
    %c0_i32_1 = arith.constant 0 : i32
    return %c0_i32, %c0_i32_0 : i32, i32
  }
  func.func @transform_14(%arg0: i32) -> (i32, i32) {
    %c0_i32 = arith.constant 0 : i32
    %c0_i32_0 = arith.constant 0 : i32
    return %arg0, %c0_i32 : i32, i32
  }
  func.func @transform_15(%arg0: i32) -> (i32, i32) {
    %c0_i32 = arith.constant 0 : i32
    %c0_i32_0 = arith.constant 0 : i32
    return %arg0, %c0_i32 : i32, i32
  }
  func.func @transform_16(%arg0: i32) -> (i32, i32) {
    %c0_i32 = arith.constant 0 : i32
    %c0_i32_0 = arith.constant 0 : i32
    return %arg0, %c0_i32 : i32, i32
  }
}

</mosaic_0001>

<llo_original>
// kernel: tpu_custom_call.1
$region0: #{tpu_custom_call.1}
  #allocation0 [shape = 'u32[]', space=smem, size = 0x4, offset = 0x4, fixed_abs, tag = 'smem constant byte address 0x4 - core index']
  #allocation1 [shape = 'u32[144,128]{1,0:T(1,128)}', space=vmem, size = 0x12000, scoped, tag = 'internal scratch']
  %s0 = inlined_call_operand.hbm [shape: bf16[8,1024], index: 0, kind: input, shape index: {}]
  %s1 = inlined_call_operand.hbm [shape: f32[8,128], index: 1, kind: input, shape index: {}]
  %s2 = inlined_call_operand.hbm [shape: bf16[1024,512], index: 2, kind: input, shape index: {}]
  %s3 = inlined_call_operand.vmem [shape: f32[1,512], index: 3, kind: input, shape index: {}]
  %s4 = inlined_call_operand.hbm [shape: bf16[512,256], index: 4, kind: input, shape index: {}]
  %s5 = inlined_call_operand.vmem [shape: f32[1,256], index: 5, kind: input, shape index: {}]
  %s6 = inlined_call_operand.hbm [shape: bf16[256,256], index: 6, kind: input, shape index: {}]
  %s7 = inlined_call_operand.vmem [shape: f32[1,256], index: 7, kind: input, shape index: {}]
  %s8 = inlined_call_operand.hbm [shape: bf16[128,256], index: 8, kind: input, shape index: {}]
  %s9 = inlined_call_operand.vmem [shape: f32[1,256], index: 9, kind: input, shape index: {}]
  %s10 = inlined_call_operand.hbm [shape: bf16[256,512], index: 10, kind: input, shape index: {}]
  %s11 = inlined_call_operand.vmem [shape: f32[1,512], index: 11, kind: input, shape index: {}]
  %s12 = inlined_call_operand.hbm [shape: bf16[512,1024], index: 12, kind: input, shape index: {}]
  %s13 = inlined_call_operand.vmem [shape: f32[1,1024], index: 13, kind: input, shape index: {}]
  %s14 = inlined_call_operand.hbm [shape: f32[8,1024], index: 14, kind: output, shape index: {0}]
  %s15 = inlined_call_operand.hbm [shape: f32[8,128], index: 15, kind: output, shape index: {1}]
  %s16 = inlined_call_operand.hbm [shape: f32[8,128], index: 16, kind: output, shape index: {2}]
  %17 = xla_tuple %s14, %s15, %s16
  %s18 = sld [smem:[#allocation0]]
  $region114: #{tpu_custom_call.1} parent=0
    _
  %s20 = ssub.s32 1, %s18
  %s21 = scalar_select 0, %s20, %s18
  $region1: #{tpu_custom_call.1} parent=0
    #allocation2 [shape = 'u8[16384]{0}', space=vmem, size = 0x4000, scoped, tag = 'input window, operand 0, single buffered']
    #allocation3 [shape = 's32[1]{0}', space=sflag, size = 0x4, scoped, tag = 'scoped memory for tpu_custom_call.1']
    #allocation4 [shape = 's32[1]{0}', space=sflag, size = 0x4, scoped, tag = 'scoped memory for tpu_custom_call.1']
    #allocation5 [shape = 'u8[4096]{0}', space=vmem, size = 0x1000, scoped, tag = 'input window, operand 1, single buffered']
    #allocation6 [shape = 's32[1]{0}', space=sflag, size = 0x4, scoped, tag = 'scoped memory for tpu_custom_call.1']
    #allocation7 [shape = 'u8[1048576]{0}', space=vmem, size = 0x100000, scoped, tag = 'input window, operand 2, single buffered']
    #allocation8 [shape = 'u8[262144]{0}', space=vmem, size = 0x40000, scoped, tag = 'input window, operand 4, single buffered']
    #allocation9 [shape = 's32[1]{0}', space=sflag, size = 0x4, scoped, tag = 'scoped memory for tpu_custom_call.1']
    #allocation10 [shape = 'u8[131072]{0}', space=vmem, size = 0x20000, scoped, tag = 'input window, operand 6, single buffered']
    #allocation11 [shape = 'u8[65536]{0}', space=vmem, size = 0x10000, scoped, tag = 'input window, operand 8, single buffered']
    #allocation12 [shape = 's32[1]{0}', space=sflag, size = 0x4, scoped, tag = 'scoped memory for tpu_custom_call.1']
    #allocation13 [shape = 'u8[262144]{0}', space=vmem, size = 0x40000, scoped, tag = 'input window, operand 10, single buffered']
    #allocation14 [shape = 'u8[1048576]{0}', space=vmem, size = 0x100000, scoped, tag = 'input window, operand 12, single buffered']
    #allocation15 [shape = 's32[1]{0}', space=sflag, size = 0x4, scoped, tag = 'scoped memory for tpu_custom_call.1']
    #allocation16 [shape = 'u8[32768]{0}', space=vmem, size = 0x8000, scoped, tag = 'output window, operand 0, single buffered']
    #allocation17 [shape = 'u8[4096]{0}', space=vmem, size = 0x1000, scoped, tag = 'output window, operand 1, single buffered']
    #allocation18 [shape = 's32[1]{0}', space=sflag, size = 0x4, scoped, tag = 'scoped memory for tpu_custom_call.1']
    #allocation19 [shape = 'u8[4096]{0}', space=vmem, size = 0x1000, scoped, tag = 'output window, operand 2, single buffered']
    %22 = vsyncpa [#allocation3], 0
    %23 = vsyncpa [#allocation6], 0
    %24 = vsyncpa [#allocation9], 0
    %25 = vsyncpa [#allocation12], 0
    %26 = vsyncpa [#allocation15], 0
    %27 = vsyncpa [#allocation4], 0
    %28 = vsyncpa [#allocation18], 0
    // Predicated region
    $region2: #{tpu_custom_call.1} parent=1 // pred_check
      _
    $region3: #{tpu_custom_call.1} parent=1 // pred_check_branch
      %30 = sbr.rel (0) target = $region5
    $region4: #{tpu_custom_call.1} parent=1 // pred_region
      %s32 = ssub.s32 512, 512
      %33 = vsyncadd [#allocation3], %s32
      %s35 = sshll.u32 [#allocation2], 4
      %s36 = int_to_ptr.vmem [resolvable:$true] %s35
      %38 = dma.hbm_to_vmem [thread:$0]  %s0, 512, %s36, [#allocation3]
    $region5: #{tpu_custom_call.1} parent=1 // pred_fallthru
      _
    // Predicated region
    $region6: #{tpu_custom_call.1} parent=1 // pred_check
      _
    $region7: #{tpu_custom_call.1} parent=1 // pred_check_branch
      %40 = sbr.rel (0) target = $region9
    $region8: #{tpu_custom_call.1} parent=1 // pred_region
      %s42 = ssub.s32 128, 128
      %43 = vsyncadd [#allocation6], %s42
      %s45 = sshll.u32 [#allocation5], 4
      %s46 = int_to_ptr.vmem [resolvable:$true] %s45
      %48 = dma.hbm_to_vmem [thread:$0]  %s1, 128, %s46, [#allocation6]
    $region9: #{tpu_custom_call.1} parent=1 // pred_fallthru
      _
    // Predicated region
    $region10: #{tpu_custom_call.1} parent=1 // pred_check
      _
    $region11: #{tpu_custom_call.1} parent=1 // pred_check_branch
      %50 = sbr.rel (0) target = $region13
    $region12: #{tpu_custom_call.1} parent=1 // pred_region
      %s52 = ssub.s32 32768, 32768
      %53 = vsyncadd [#allocation6], %s52
      %s54 = sshll.u32 [#allocation7], 4
      %s55 = int_to_ptr.vmem [resolvable:$true] %s54
      %60 = dma.hbm_to_vmem [thread:$0]  %s2, 32768, %s55, [#allocation6], 256, 256, 16
    $region13: #{tpu_custom_call.1} parent=1 // pred_fallthru
      _
    // Predicated region
    $region14: #{tpu_custom_call.1} parent=1 // pred_check
      _
    $region15: #{tpu_custom_call.1} parent=1 // pred_check_branch
      %62 = sbr.rel (0) target = $region17
    $region16: #{tpu_custom_call.1} parent=1 // pred_region
      _
    $region17: #{tpu_custom_call.1} parent=1 // pred_fallthru
      _
    // Predicated region
    $region18: #{tpu_custom_call.1} parent=1 // pred_check
      _
    $region19: #{tpu_custom_call.1} parent=1 // pred_check_branch
      %64 = sbr.rel (0) target = $region21
    $region20: #{tpu_custom_call.1} parent=1 // pred_region
      %s66 = ssub.s32 8192, 8192
      %67 = vsyncadd [#allocation9], %s66
      %s68 = sshll.u32 [#allocation8], 4
      %s69 = int_to_ptr.vmem [resolvable:$true] %s68
      %74 = dma.hbm_to_vmem [thread:$0]  %s4, 8192, %s69, [#allocation9], 128, 128, 8
    $region21: #{tpu_custom_call.1} parent=1 // pred_fallthru
      _
    // Predicated region
    $region22: #{tpu_custom_call.1} parent=1 // pred_check
      _
    $region23: #{tpu_custom_call.1} parent=1 // pred_check_branch
      %76 = sbr.rel (0) target = $region25
    $region24: #{tpu_custom_call.1} parent=1 // pred_region
      _
    $region25: #{tpu_custom_call.1} parent=1 // pred_fallthru
      _
    // Predicated region
    $region26: #{tpu_custom_call.1} parent=1 // pred_check
      _
    $region27: #{tpu_custom_call.1} parent=1 // pred_check_branch
      %78 = sbr.rel (0) target = $region29
    $region28: #{tpu_custom_call.1} parent=1 // pred_region
      %s80 = ssub.s32 4096, 4096
      %81 = vsyncadd [#allocation9], %s80
      %s82 = sshll.u32 [#allocation10], 4
      %s83 = int_to_ptr.vmem [resolvable:$true] %s82
      %88 = dma.hbm_to_vmem [thread:$0]  %s6, 4096, %s83, [#allocation9], 128, 128, 8
    $region29: #{tpu_custom_call.1} parent=1 // pred_fallthru
      _
    // Predicated region
    $region30: #{tpu_custom_call.1} parent=1 // pred_check
      _
    $region31: #{tpu_custom_call.1} parent=1 // pred_check_branch
      %90 = sbr.rel (0) target = $region33
    $region32: #{tpu_custom_call.1} parent=1 // pred_region
      _
    $region33: #{tpu_custom_call.1} parent=1 // pred_fallthru
      _
    // Predicated region
    $region34: #{tpu_custom_call.1} parent=1 // pred_check
      _
    $region35: #{tpu_custom_call.1} parent=1 // pred_check_branch
      %92 = sbr.rel (0) target = $region37
    $region36: #{tpu_custom_call.1} parent=1 // pred_region
      %s94 = ssub.s32 2048, 2048
      %95 = vsyncadd [#allocation12], %s94
      %s96 = sshll.u32 [#allocation11], 4
      %s97 = int_to_ptr.vmem [resolvable:$true] %s96
      %102 = dma.hbm_to_vmem [thread:$0]  %s8, 2048, %s97, [#allocation12], 128, 128, 8
    $region37: #{tpu_custom_call.1} parent=1 // pred_fallthru
      _
    // Predicated region
    $region38: #{tpu_custom_call.1} parent=1 // pred_check
      _
    $region39: #{tpu_custom_call.1} parent=1 // pred_check_branch
      %104 = sbr.rel (0) target = $region41
    $region40: #{tpu_custom_call.1} parent=1 // pred_region
      _
    $region41: #{tpu_custom_call.1} parent=1 // pred_fallthru
      _
    // Predicated region
    $region42: #{tpu_custom_call.1} parent=1 // pred_check
      _
    $region43: #{tpu_custom_call.1} parent=1 // pred_check_branch
      %106 = sbr.rel (0) target = $region45
    $region44: #{tpu_custom_call.1} parent=1 // pred_region
      %s108 = ssub.s32 8192, 8192
      %109 = vsyncadd [#allocation12], %s108
      %s110 = sshll.u32 [#allocation13], 4
      %s111 = int_to_ptr.vmem [resolvable:$true] %s110
      %116 = dma.hbm_to_vmem [thread:$0]  %s10, 8192, %s111, [#allocation12], 256, 256, 16
    $region45: #{tpu_custom_call.1} parent=1 // pred_fallthru
      _
    // Predicated region
    $region46: #{tpu_custom_call.1} parent=1 // pred_check
      _
    $region47: #{tpu_custom_call.1} parent=1 // pred_check_branch
      %118 = sbr.rel (0) target = $region49
    $region48: #{tpu_custom_call.1} parent=1 // pred_region
      _
    $region49: #{tpu_custom_call.1} parent=1 // pred_fallthru
      _
    // Predicated region
    $region50: #{tpu_custom_call.1} parent=1 // pred_check
      _
    $region51: #{tpu_custom_call.1} parent=1 // pred_check_branch
      %120 = sbr.rel (0) target = $region53
    $region52: #{tpu_custom_call.1} parent=1 // pred_region
      %s122 = ssub.s32 32768, 32768
      %123 = vsyncadd [#allocation15], %s122
      %s124 = sshll.u32 [#allocation14], 4
      %s125 = int_to_ptr.vmem [resolvable:$true] %s124
      %130 = dma.hbm_to_vmem [thread:$0]  %s12, 32768, %s125, [#allocation15], 512, 512, 32
    $region53: #{tpu_custom_call.1} parent=1 // pred_fallthru
      _
    // Predicated region
    $region54: #{tpu_custom_call.1} parent=1 // pred_check
      _
    $region55: #{tpu_custom_call.1} parent=1 // pred_check_branch
      %132 = sbr.rel (0) target = $region57
    $region56: #{tpu_custom_call.1} parent=1 // pred_region
      _
    $region57: #{tpu_custom_call.1} parent=1 // pred_fallthru
      _
    // Predicated region
    $region58: #{tpu_custom_call.1} parent=1 // pred_check
      _
    $region59: #{tpu_custom_call.1} parent=1 // pred_check_branch
      %134 = sbr.rel (0) target = $region61
    $region60: #{tpu_custom_call.1} parent=1 // pred_region
      %135 = dma.done [#allocation3], 512
    $region61: #{tpu_custom_call.1} parent=1 // pred_fallthru
      _
    // Predicated region
    $region62: #{tpu_custom_call.1} parent=1 // pred_check
      _
    $region63: #{tpu_custom_call.1} parent=1 // pred_check_branch
      %137 = sbr.rel (0) target = $region65
    $region64: #{tpu_custom_call.1} parent=1 // pred_region
      %138 = dma.done [#allocation6], 128
    $region65: #{tpu_custom_call.1} parent=1 // pred_fallthru
      _
    // Predicated region
    $region66: #{tpu_custom_call.1} parent=1 // pred_check
      _
    $region67: #{tpu_custom_call.1} parent=1 // pred_check_branch
      %140 = sbr.rel (0) target = $region69
    $region68: #{tpu_custom_call.1} parent=1 // pred_region
      %141 = dma.done [#allocation6], 32768
    $region69: #{tpu_custom_call.1} parent=1 // pred_fallthru
      _
    // Predicated region
    $region70: #{tpu_custom_call.1} parent=1 // pred_check
      _
    $region71: #{tpu_custom_call.1} parent=1 // pred_check_branch
      %143 = sbr.rel (0) target = $region73
    $region72: #{tpu_custom_call.1} parent=1 // pred_region
      %144 = dma.done [#allocation9], 8192
    $region73: #{tpu_custom_call.1} parent=1 // pred_fallthru
      _
    // Predicated region
    $region74: #{tpu_custom_call.1} parent=1 // pred_check
      _
    $region75: #{tpu_custom_call.1} parent=1 // pred_check_branch
      %146 = sbr.rel (0) target = $region77
    $region76: #{tpu_custom_call.1} parent=1 // pred_region
      %147 = dma.done [#allocation9], 4096
    $region77: #{tpu_custom_call.1} parent=1 // pred_fallthru
      _
    // Predicated region
    $region78: #{tpu_custom_call.1} parent=1 // pred_check
      _
    $region79: #{tpu_custom_call.1} parent=1 // pred_check_branch
      %149 = sbr.rel (0) target = $region81
    $region80: #{tpu_custom_call.1} parent=1 // pred_region
      %150 = dma.done [#allocation12], 2048
    $region81: #{tpu_custom_call.1} parent=1 // pred_fallthru
      _
    // Predicated region
    $region82: #{tpu_custom_call.1} parent=1 // pred_check
      _
    $region83: #{tpu_custom_call.1} parent=1 // pred_check_branch
      %152 = sbr.rel (0) target = $region85
    $region84: #{tpu_custom_call.1} parent=1 // pred_region
      %153 = dma.done [#allocation12], 8192
    $region85: #{tpu_custom_call.1} parent=1 // pred_fallthru
      _
    // Predicated region
    $region86: #{tpu_custom_call.1} parent=1 // pred_check
      _
    $region87: #{tpu_custom_call.1} parent=1 // pred_check_branch
      %155 = sbr.rel (0) target = $region89
    $region88: #{tpu_custom_call.1} parent=1 // pred_region
      %156 = dma.done [#allocation15], 32768
    $region89: #{tpu_custom_call.1} parent=1 // pred_fallthru
      _
    %v158 = vld [vmem:[#allocation2] sm:$0xff]
    %v159 = vld [vmem:[#allocation2 + $0x8] sm:$0xff]
    %v160 = vld [vmem:[#allocation2 + $0x10] sm:$0xff]
    %v161 = vld [vmem:[#allocation2 + $0x18] sm:$0xff]
    %v162 = vld [vmem:[#allocation7] sm:$0xff]
    %v163 = vld [vmem:[#allocation7 + $0x8] sm:$0xff]
    %v164 = vld [vmem:[#allocation7 + $0x10] sm:$0xff]
    %v165 = vld [vmem:[#allocation7 + $0x18] sm:$0xff]
    %v166 = vld [vmem:[#allocation7 + $0x20] sm:$0xff]
    %v167 = vld [vmem:[#allocation7 + $0x28] sm:$0xff]
    %v168 = vld [vmem:[#allocation7 + $0x30] sm:$0xff]
    %v169 = vld [vmem:[#allocation7 + $0x38] sm:$0xff]
    %v170 = vld [vmem:[#allocation7 + $0x40] sm:$0xff]
    %v171 = vld [vmem:[#allocation7 + $0x48] sm:$0xff]
    %v172 = vld [vmem:[#allocation7 + $0x50] sm:$0xff]
    %v173 = vld [vmem:[#allocation7 + $0x58] sm:$0xff]
    %v174 = vld [vmem:[#allocation7 + $0x60] sm:$0xff]
    %v175 = vld [vmem:[#allocation7 + $0x68] sm:$0xff]
    %v176 = vld [vmem:[#allocation7 + $0x70] sm:$0xff]
    %v177 = vld [vmem:[#allocation7 + $0x78] sm:$0xff]
    %v178 = vld [vmem:[#allocation7 + $0x80] sm:$0xff]
    %v179 = vld [vmem:[#allocation7 + $0x88] sm:$0xff]
    %v180 = vld [vmem:[#allocation7 + $0x90] sm:$0xff]
    %v181 = vld [vmem:[#allocation7 + $0x98] sm:$0xff]
    %v182 = vld [vmem:[#allocation7 + $0xa0] sm:$0xff]
    %v183 = vld [vmem:[#allocation7 + $0xa8] sm:$0xff]
    %v184 = vld [vmem:[#allocation7 + $0xb0] sm:$0xff]
    %v185 = vld [vmem:[#allocation7 + $0xb8] sm:$0xff]
    %v186 = vld [vmem:[#allocation7 + $0xc0] sm:$0xff]
    %v187 = vld [vmem:[#allocation7 + $0xc8] sm:$0xff]
    %v188 = vld [vmem:[#allocation7 + $0xd0] sm:$0xff]
    %v189 = vld [vmem:[#allocation7 + $0xd8] sm:$0xff]
    %v190 = vld [vmem:[#allocation7 + $0xe0] sm:$0xff]
    %v191 = vld [vmem:[#allocation7 + $0xe8] sm:$0xff]
    %v192 = vld [vmem:[#allocation7 + $0xf0] sm:$0xff]
    %v193 = vld [vmem:[#allocation7 + $0xf8] sm:$0xff]
    %v194 = vld [vmem:[#allocation7 + $0x100] sm:$0xff]
    %v195 = vld [vmem:[#allocation7 + $0x108] sm:$0xff]
    %v196 = vld [vmem:[#allocation7 + $0x110] sm:$0xff]
    %v197 = vld [vmem:[#allocation7 + $0x118] sm:$0xff]
    %v198 = vld [vmem:[#allocation7 + $0x120] sm:$0xff]
    %v199 = vld [vmem:[#allocation7 + $0x128] sm:$0xff]
    %v200 = vld [vmem:[#allocation7 + $0x130] sm:$0xff]
    %v201 = vld [vmem:[#allocation7 + $0x138] sm:$0xff]
    %v202 = vld [vmem:[#allocation7 + $0x140] sm:$0xff]
    %v203 = vld [vmem:[#allocation7 + $0x148] sm:$0xff]
    %v204 = vld [vmem:[#allocation7 + $0x150] sm:$0xff]
    %v205 = vld [vmem:[#allocation7 + $0x158] sm:$0xff]
    %v206 = vld [vmem:[#allocation7 + $0x160] sm:$0xff]
    %v207 = vld [vmem:[#allocation7 + $0x168] sm:$0xff]
    %v208 = vld [vmem:[#allocation7 + $0x170] sm:$0xff]
    %v209 = vld [vmem:[#allocation7 + $0x178] sm:$0xff]
    %v210 = vld [vmem:[#allocation7 + $0x180] sm:$0xff]
    %v211 = vld [vmem:[#allocation7 + $0x188] sm:$0xff]
    %v212 = vld [vmem:[#allocation7 + $0x190] sm:$0xff]
    %v213 = vld [vmem:[#allocation7 + $0x198] sm:$0xff]
    %v214 = vld [vmem:[#allocation7 + $0x1a0] sm:$0xff]
    %v215 = vld [vmem:[#allocation7 + $0x1a8] sm:$0xff]
    %v216 = vld [vmem:[#allocation7 + $0x1b0] sm:$0xff]
    %v217 = vld [vmem:[#allocation7 + $0x1b8] sm:$0xff]
    %v218 = vld [vmem:[#allocation7 + $0x1c0] sm:$0xff]
    %v219 = vld [vmem:[#allocation7 + $0x1c8] sm:$0xff]
    %v220 = vld [vmem:[#allocation7 + $0x1d0] sm:$0xff]
    %v221 = vld [vmem:[#allocation7 + $0x1d8] sm:$0xff]
    %v222 = vld [vmem:[#allocation7 + $0x1e0] sm:$0xff]
    %v223 = vld [vmem:[#allocation7 + $0x1e8] sm:$0xff]
    %v224 = vld [vmem:[#allocation7 + $0x1f0] sm:$0xff]
    %v225 = vld [vmem:[#allocation7 + $0x1f8] sm:$0xff]
    %v226 = vld [vmem:[#allocation7 + $0x200] sm:$0xff]
    %v227 = vld [vmem:[#allocation7 + $0x208] sm:$0xff]
    %v228 = vld [vmem:[#allocation7 + $0x210] sm:$0xff]
    %v229 = vld [vmem:[#allocation7 + $0x218] sm:$0xff]
    %v230 = vld [vmem:[#allocation7 + $0x220] sm:$0xff]
    %v231 = vld [vmem:[#allocation7 + $0x228] sm:$0xff]
    %v232 = vld [vmem:[#allocation7 + $0x230] sm:$0xff]
    %v233 = vld [vmem:[#allocation7 + $0x238] sm:$0xff]
    %v234 = vld [vmem:[#allocation7 + $0x240] sm:$0xff]
    %v235 = vld [vmem:[#allocation7 + $0x248] sm:$0xff]
    %v236 = vld [vmem:[#allocation7 + $0x250] sm:$0xff]
    %v237 = vld [vmem:[#allocation7 + $0x258] sm:$0xff]
    %v238 = vld [vmem:[#allocation7 + $0x260] sm:$0xff]
    %v239 = vld [vmem:[#allocation7 + $0x268] sm:$0xff]
    %v240 = vld [vmem:[#allocation7 + $0x270] sm:$0xff]
    %v241 = vld [vmem:[#allocation7 + $0x278] sm:$0xff]
    %v242 = vld [vmem:[#allocation7 + $0x280] sm:$0xff]
    %v243 = vld [vmem:[#allocation7 + $0x288] sm:$0xff]
    %v244 = vld [vmem:[#allocation7 + $0x290] sm:$0xff]
    %v245 = vld [vmem:[#allocation7 + $0x298] sm:$0xff]
    %v246 = vld [vmem:[#allocation7 + $0x2a0] sm:$0xff]
    %v247 = vld [vmem:[#allocation7 + $0x2a8] sm:$0xff]
    %v248 = vld [vmem:[#allocation7 + $0x2b0] sm:$0xff]
    %v249 = vld [vmem:[#allocation7 + $0x2b8] sm:$0xff]
    %v250 = vld [vmem:[#allocation7 + $0x2c0] sm:$0xff]
    %v251 = vld [vmem:[#allocation7 + $0x2c8] sm:$0xff]
    %v252 = vld [vmem:[#allocation7 + $0x2d0] sm:$0xff]
    %v253 = vld [vmem:[#allocation7 + $0x2d8] sm:$0xff]
    %v254 = vld [vmem:[#allocation7 + $0x2e0] sm:$0xff]
    %v255 = vld [vmem:[#allocation7 + $0x2e8] sm:$0xff]
    %v256 = vld [vmem:[#allocation7 + $0x2f0] sm:$0xff]
    %v257 = vld [vmem:[#allocation7 + $0x2f8] sm:$0xff]
    %v258 = vld [vmem:[#allocation7 + $0x300] sm:$0xff]
    %v259 = vld [vmem:[#allocation7 + $0x308] sm:$0xff]
    %v260 = vld [vmem:[#allocation7 + $0x310] sm:$0xff]
    %v261 = vld [vmem:[#allocation7 + $0x318] sm:$0xff]
    %v262 = vld [vmem:[#allocation7 + $0x320] sm:$0xff]
    %v263 = vld [vmem:[#allocation7 + $0x328] sm:$0xff]
    %v264 = vld [vmem:[#allocation7 + $0x330] sm:$0xff]
    %v265 = vld [vmem:[#allocation7 + $0x338] sm:$0xff]
    %v266 = vld [vmem:[#allocation7 + $0x340] sm:$0xff]
    %v267 = vld [vmem:[#allocation7 + $0x348] sm:$0xff]
    %v268 = vld [vmem:[#allocation7 + $0x350] sm:$0xff]
    %v269 = vld [vmem:[#allocation7 + $0x358] sm:$0xff]
    %v270 = vld [vmem:[#allocation7 + $0x360] sm:$0xff]
    %v271 = vld [vmem:[#allocation7 + $0x368] sm:$0xff]
    %v272 = vld [vmem:[#allocation7 + $0x370] sm:$0xff]
    %v273 = vld [vmem:[#allocation7 + $0x378] sm:$0xff]
    %v274 = vld [vmem:[#allocation7 + $0x380] sm:$0xff]
    %v275 = vld [vmem:[#allocation7 + $0x388] sm:$0xff]
    %v276 = vld [vmem:[#allocation7 + $0x390] sm:$0xff]
    %v277 = vld [vmem:[#allocation7 + $0x398] sm:$0xff]
    %v278 = vld [vmem:[#allocation7 + $0x3a0] sm:$0xff]
    %v279 = vld [vmem:[#allocation7 + $0x3a8] sm:$0xff]
    %v280 = vld [vmem:[#allocation7 + $0x3b0] sm:$0xff]
    %v281 = vld [vmem:[#allocation7 + $0x3b8] sm:$0xff]
    %v282 = vld [vmem:[#allocation7 + $0x3c0] sm:$0xff]
    %v283 = vld [vmem:[#allocation7 + $0x3c8] sm:$0xff]
    %v284 = vld [vmem:[#allocation7 + $0x3d0] sm:$0xff]
    %v285 = vld [vmem:[#allocation7 + $0x3d8] sm:$0xff]
    %v286 = vld [vmem:[#allocation7 + $0x3e0] sm:$0xff]
    %v287 = vld [vmem:[#allocation7 + $0x3e8] sm:$0xff]
    %v288 = vld [vmem:[#allocation7 + $0x3f0] sm:$0xff]
    %v289 = vld [vmem:[#allocation7 + $0x3f8] sm:$0xff]
    %v290 = vld [vmem:[#allocation7 + $0x400] sm:$0xff]
    %v291 = vld [vmem:[#allocation7 + $0x408] sm:$0xff]
    %v292 = vld [vmem:[#allocation7 + $0x410] sm:$0xff]
    %v293 = vld [vmem:[#allocation7 + $0x418] sm:$0xff]
    %v294 = vld [vmem:[#allocation7 + $0x420] sm:$0xff]
    %v295 = vld [vmem:[#allocation7 + $0x428] sm:$0xff]
    %v296 = vld [vmem:[#allocation7 + $0x430] sm:$0xff]
    %v297 = vld [vmem:[#allocation7 + $0x438] sm:$0xff]
    %v298 = vld [vmem:[#allocation7 + $0x440] sm:$0xff]
    %v299 = vld [vmem:[#allocation7 + $0x448] sm:$0xff]
    %v300 = vld [vmem:[#allocation7 + $0x450] sm:$0xff]
    %v301 = vld [vmem:[#allocation7 + $0x458] sm:$0xff]
    %v302 = vld [vmem:[#allocation7 + $0x460] sm:$0xff]
    %v303 = vld [vmem:[#allocation7 + $0x468] sm:$0xff]
    %v304 = vld [vmem:[#allocation7 + $0x470] sm:$0xff]
    %v305 = vld [vmem:[#allocation7 + $0x478] sm:$0xff]
    %v306 = vld [vmem:[#allocation7 + $0x480] sm:$0xff]
    %v307 = vld [vmem:[#allocation7 + $0x488] sm:$0xff]
    %v308 = vld [vmem:[#allocation7 + $0x490] sm:$0xff]
    %v309 = vld [vmem:[#allocation7 + $0x498] sm:$0xff]
    %v310 = vld [vmem:[#allocation7 + $0x4a0] sm:$0xff]
    %v311 = vld [vmem:[#allocation7 + $0x4a8] sm:$0xff]
    %v312 = vld [vmem:[#allocation7 + $0x4b0] sm:$0xff]
    %v313 = vld [vmem:[#allocation7 + $0x4b8] sm:$0xff]
    %v314 = vld [vmem:[#allocation7 + $0x4c0] sm:$0xff]
    %v315 = vld [vmem:[#allocation7 + $0x4c8] sm:$0xff]
    %v316 = vld [vmem:[#allocation7 + $0x4d0] sm:$0xff]
    %v317 = vld [vmem:[#allocation7 + $0x4d8] sm:$0xff]
    %v318 = vld [vmem:[#allocation7 + $0x4e0] sm:$0xff]
    %v319 = vld [vmem:[#allocation7 + $0x4e8] sm:$0xff]
    %v320 = vld [vmem:[#allocation7 + $0x4f0] sm:$0xff]
    %v321 = vld [vmem:[#allocation7 + $0x4f8] sm:$0xff]
    %v322 = vld [vmem:[#allocation7 + $0x500] sm:$0xff]
    %v323 = vld [vmem:[#allocation7 + $0x508] sm:$0xff]
    %v324 = vld [vmem:[#allocation7 + $0x510] sm:$0xff]
    %v325 = vld [vmem:[#allocation7 + $0x518] sm:$0xff]
    %v326 = vld [vmem:[#allocation7 + $0x520] sm:$0xff]
    %v327 = vld [vmem:[#allocation7 + $0x528] sm:$0xff]
    %v328 = vld [vmem:[#allocation7 + $0x530] sm:$0xff]
    %v329 = vld [vmem:[#allocation7 + $0x538] sm:$0xff]
    %v330 = vld [vmem:[#allocation7 + $0x540] sm:$0xff]
    %v331 = vld [vmem:[#allocation7 + $0x548] sm:$0xff]
    %v332 = vld [vmem:[#allocation7 + $0x550] sm:$0xff]
    %v333 = vld [vmem:[#allocation7 + $0x558] sm:$0xff]
    %v334 = vld [vmem:[#allocation7 + $0x560] sm:$0xff]
    %v335 = vld [vmem:[#allocation7 + $0x568] sm:$0xff]
    %v336 = vld [vmem:[#allocation7 + $0x570] sm:$0xff]
    %v337 = vld [vmem:[#allocation7 + $0x578] sm:$0xff]
    %v338 = vld [vmem:[#allocation7 + $0x580] sm:$0xff]
    %v339 = vld [vmem:[#allocation7 + $0x588] sm:$0xff]
    %v340 = vld [vmem:[#allocation7 + $0x590] sm:$0xff]
    %v341 = vld [vmem:[#allocation7 + $0x598] sm:$0xff]
    %v342 = vld [vmem:[#allocation7 + $0x5a0] sm:$0xff]
    %v343 = vld [vmem:[#allocation7 + $0x5a8] sm:$0xff]
    %v344 = vld [vmem:[#allocation7 + $0x5b0] sm:$0xff]
    %v345 = vld [vmem:[#allocation7 + $0x5b8] sm:$0xff]
    %v346 = vld [vmem:[#allocation7 + $0x5c0] sm:$0xff]
    %v347 = vld [vmem:[#allocation7 + $0x5c8] sm:$0xff]
    %v348 = vld [vmem:[#allocation7 + $0x5d0] sm:$0xff]
    %v349 = vld [vmem:[#allocation7 + $0x5d8] sm:$0xff]
    %v350 = vld [vmem:[#allocation7 + $0x5e0] sm:$0xff]
    %v351 = vld [vmem:[#allocation7 + $0x5e8] sm:$0xff]
    %v352 = vld [vmem:[#allocation7 + $0x5f0] sm:$0xff]
    %v353 = vld [vmem:[#allocation7 + $0x5f8] sm:$0xff]
    %v354 = vld [vmem:[#allocation7 + $0x600] sm:$0xff]
    %v355 = vld [vmem:[#allocation7 + $0x608] sm:$0xff]
    %v356 = vld [vmem:[#allocation7 + $0x610] sm:$0xff]
    %v357 = vld [vmem:[#allocation7 + $0x618] sm:$0xff]
    %v358 = vld [vmem:[#allocation7 + $0x620] sm:$0xff]
    %v359 = vld [vmem:[#allocation7 + $0x628] sm:$0xff]
    %v360 = vld [vmem:[#allocation7 + $0x630] sm:$0xff]
    %v361 = vld [vmem:[#allocation7 + $0x638] sm:$0xff]
    %v362 = vld [vmem:[#allocation7 + $0x640] sm:$0xff]
    %v363 = vld [vmem:[#allocation7 + $0x648] sm:$0xff]
    %v364 = vld [vmem:[#allocation7 + $0x650] sm:$0xff]
    %v365 = vld [vmem:[#allocation7 + $0x658] sm:$0xff]
    %v366 = vld [vmem:[#allocation7 + $0x660] sm:$0xff]
    %v367 = vld [vmem:[#allocation7 + $0x668] sm:$0xff]
    %v368 = vld [vmem:[#allocation7 + $0x670] sm:$0xff]
    %v369 = vld [vmem:[#allocation7 + $0x678] sm:$0xff]
    %v370 = vld [vmem:[#allocation7 + $0x680] sm:$0xff]
    %v371 = vld [vmem:[#allocation7 + $0x688] sm:$0xff]
    %v372 = vld [vmem:[#allocation7 + $0x690] sm:$0xff]
    %v373 = vld [vmem:[#allocation7 + $0x698] sm:$0xff]
    %v374 = vld [vmem:[#allocation7 + $0x6a0] sm:$0xff]
    %v375 = vld [vmem:[#allocation7 + $0x6a8] sm:$0xff]
    %v376 = vld [vmem:[#allocation7 + $0x6b0] sm:$0xff]
    %v377 = vld [vmem:[#allocation7 + $0x6b8] sm:$0xff]
    %v378 = vld [vmem:[#allocation7 + $0x6c0] sm:$0xff]
    %v379 = vld [vmem:[#allocation7 + $0x6c8] sm:$0xff]
    %v380 = vld [vmem:[#allocation7 + $0x6d0] sm:$0xff]
    %v381 = vld [vmem:[#allocation7 + $0x6d8] sm:$0xff]
    %v382 = vld [vmem:[#allocation7 + $0x6e0] sm:$0xff]
    %v383 = vld [vmem:[#allocation7 + $0x6e8] sm:$0xff]
    %v384 = vld [vmem:[#allocation7 + $0x6f0] sm:$0xff]
    %v385 = vld [vmem:[#allocation7 + $0x6f8] sm:$0xff]
    %v386 = vld [vmem:[#allocation7 + $0x700] sm:$0xff]
    %v387 = vld [vmem:[#allocation7 + $0x708] sm:$0xff]
    %v388 = vld [vmem:[#allocation7 + $0x710] sm:$0xff]
    %v389 = vld [vmem:[#allocation7 + $0x718] sm:$0xff]
    %v390 = vld [vmem:[#allocation7 + $0x720] sm:$0xff]
    %v391 = vld [vmem:[#allocation7 + $0x728] sm:$0xff]
    %v392 = vld [vmem:[#allocation7 + $0x730] sm:$0xff]
    %v393 = vld [vmem:[#allocation7 + $0x738] sm:$0xff]
    %v394 = vld [vmem:[#allocation7 + $0x740] sm:$0xff]
    %v395 = vld [vmem:[#allocation7 + $0x748] sm:$0xff]
    %v396 = vld [vmem:[#allocation7 + $0x750] sm:$0xff]
    %v397 = vld [vmem:[#allocation7 + $0x758] sm:$0xff]
    %v398 = vld [vmem:[#allocation7 + $0x760] sm:$0xff]
    %v399 = vld [vmem:[#allocation7 + $0x768] sm:$0xff]
    %v400 = vld [vmem:[#allocation7 + $0x770] sm:$0xff]
    %v401 = vld [vmem:[#allocation7 + $0x778] sm:$0xff]
    %v402 = vld [vmem:[#allocation7 + $0x780] sm:$0xff]
    %v403 = vld [vmem:[#allocation7 + $0x788] sm:$0xff]
    %v404 = vld [vmem:[#allocation7 + $0x790] sm:$0xff]
    %v405 = vld [vmem:[#allocation7 + $0x798] sm:$0xff]
    %v406 = vld [vmem:[#allocation7 + $0x7a0] sm:$0xff]
    %v407 = vld [vmem:[#allocation7 + $0x7a8] sm:$0xff]
    %v408 = vld [vmem:[#allocation7 + $0x7b0] sm:$0xff]
    %v409 = vld [vmem:[#allocation7 + $0x7b8] sm:$0xff]
    %v410 = vld [vmem:[#allocation7 + $0x7c0] sm:$0xff]
    %v411 = vld [vmem:[#allocation7 + $0x7c8] sm:$0xff]
    %v412 = vld [vmem:[#allocation7 + $0x7d0] sm:$0xff]
    %v413 = vld [vmem:[#allocation7 + $0x7d8] sm:$0xff]
    %v414 = vld [vmem:[#allocation7 + $0x7e0] sm:$0xff]
    %v415 = vld [vmem:[#allocation7 + $0x7e8] sm:$0xff]
    %v416 = vld [vmem:[#allocation7 + $0x7f0] sm:$0xff]
    %v417 = vld [vmem:[#allocation7 + $0x7f8] sm:$0xff]
    %v418 = vld [vmem:[%s3] sm:$0xf]
    %v420 = vlaneseq
    %v421 = vshrl.u32 %v420, 7
    %v422 = vsub.s32 0, %v421
    %v423 = vrot.slane %v418, %v422
    %v424 = vlaneseq
    %v425 = vshrl.u32 %v424, 7
    %v426 = vsub.s32 1, %v425
    %v427 = vrot.slane %v418, %v426
    %v428 = vlaneseq
    %v429 = vshrl.u32 %v428, 7
    %v430 = vsub.s32 2, %v429
    %v431 = vrot.slane %v418, %v430
    %v432 = vlaneseq
    %v433 = vshrl.u32 %v432, 7
    %v434 = vsub.s32 3, %v433
    %v435 = vrot.slane %v418, %v434
    %v444 = vunpack.c.l.b16 %v158
    %v445 = vunpack.c.h.b16 %v158
    %v446 = vunpack.c.l.b16 %v159
    %v447 = vunpack.c.h.b16 %v159
    %v448 = vunpack.c.l.b16 %v160
    %v449 = vunpack.c.h.b16 %v160
    %v450 = vunpack.c.l.b16 %v161
    %v451 = vunpack.c.h.b16 %v161
    %v452 = vpack.c.b16 %v444, %v444
    %v453 = vpack.c.b16 %v445, %v445
    %v454 = vpack.c.b16 %v446, %v446
    %v455 = vpack.c.b16 %v447, %v447
    %v456 = vpack.c.b16 %v448, %v448
    %v457 = vpack.c.b16 %v449, %v449
    %v458 = vpack.c.b16 %v450, %v450
    %v459 = vpack.c.b16 %v451, %v451
    %v724 = vunpack.c.l.b16 %v162
    %v725 = vunpack.c.h.b16 %v162
    %v726 = vunpack.c.l.b16 %v163
    %v727 = vunpack.c.h.b16 %v163
    %v728 = vunpack.c.l.b16 %v164
    %v729 = vunpack.c.h.b16 %v164
    %v730 = vunpack.c.l.b16 %v165
    %v731 = vunpack.c.h.b16 %v165
    %v732 = vunpack.c.l.b16 %v166
    %v733 = vunpack.c.h.b16 %v166
    %v734 = vunpack.c.l.b16 %v167
    %v735 = vunpack.c.h.b16 %v167
    %v736 = vunpack.c.l.b16 %v168
    %v737 = vunpack.c.h.b16 %v168
    %v738 = vunpack.c.l.b16 %v169
    %v739 = vunpack.c.h.b16 %v169
    %v740 = vunpack.c.l.b16 %v170
    %v741 = vunpack.c.h.b16 %v170
    %v742 = vunpack.c.l.b16 %v171
    %v743 = vunpack.c.h.b16 %v171
    %v744 = vunpack.c.l.b16 %v172
    %v745 = vunpack.c.h.b16 %v172
    %v746 = vunpack.c.l.b16 %v173
    %v747 = vunpack.c.h.b16 %v173
    %v748 = vunpack.c.l.b16 %v174
    %v749 = vunpack.c.h.b16 %v174
    %v750 = vunpack.c.l.b16 %v175
    %v751 = vunpack.c.h.b16 %v175
    %v752 = vunpack.c.l.b16 %v176
    %v753 = vunpack.c.h.b16 %v176
    %v754 = vunpack.c.l.b16 %v177
    %v755 = vunpack.c.h.b16 %v177
    %v756 = vunpack.c.l.b16 %v178
    %v757 = vunpack.c.h.b16 %v178
    %v758 = vunpack.c.l.b16 %v179
    %v759 = vunpack.c.h.b16 %v179
    %v760 = vunpack.c.l.b16 %v180
    %v761 = vunpack.c.h.b16 %v180
    %v762 = vunpack.c.l.b16 %v181
    %v763 = vunpack.c.h.b16 %v181
    %v764 = vunpack.c.l.b16 %v182
    %v765 = vunpack.c.h.b16 %v182
    %v766 = vunpack.c.l.b16 %v183
    %v767 = vunpack.c.h.b16 %v183
    %v768 = vunpack.c.l.b16 %v184
    %v769 = vunpack.c.h.b16 %v184
    %v770 = vunpack.c.l.b16 %v185
    %v771 = vunpack.c.h.b16 %v185
    %v772 = vunpack.c.l.b16 %v186
    %v773 = vunpack.c.h.b16 %v186
    %v774 = vunpack.c.l.b16 %v187
    %v775 = vunpack.c.h.b16 %v187
    %v776 = vunpack.c.l.b16 %v188
    %v777 = vunpack.c.h.b16 %v188
    %v778 = vunpack.c.l.b16 %v189
    %v779 = vunpack.c.h.b16 %v189
    %v780 = vunpack.c.l.b16 %v190
    %v781 = vunpack.c.h.b16 %v190
    %v782 = vunpack.c.l.b16 %v191
    %v783 = vunpack.c.h.b16 %v191
    %v784 = vunpack.c.l.b16 %v192
    %v785 = vunpack.c.h.b16 %v192
    %v786 = vunpack.c.l.b16 %v193
    %v787 = vunpack.c.h.b16 %v193
    %v788 = vunpack.c.l.b16 %v194
    %v789 = vunpack.c.h.b16 %v194
    %v790 = vunpack.c.l.b16 %v195
    %v791 = vunpack.c.h.b16 %v195
    %v792 = vunpack.c.l.b16 %v196
    %v793 = vunpack.c.h.b16 %v196
    %v794 = vunpack.c.l.b16 %v197
    %v795 = vunpack.c.h.b16 %v197
    %v796 = vunpack.c.l.b16 %v198
    %v797 = vunpack.c.h.b16 %v198
    %v798 = vunpack.c.l.b16 %v199
    %v799 = vunpack.c.h.b16 %v199
    %v800 = vunpack.c.l.b16 %v200
    %v801 = vunpack.c.h.b16 %v200
    %v802 = vunpack.c.l.b16 %v201
    %v803 = vunpack.c.h.b16 %v201
    %v804 = vunpack.c.l.b16 %v202
    %v805 = vunpack.c.h.b16 %v202
    %v806 = vunpack.c.l.b16 %v203
    %v807 = vunpack.c.h.b16 %v203
    %v808 = vunpack.c.l.b16 %v204
    %v809 = vunpack.c.h.b16 %v204
    %v810 = vunpack.c.l.b16 %v205
    %v811 = vunpack.c.h.b16 %v205
    %v812 = vunpack.c.l.b16 %v206
    %v813 = vunpack.c.h.b16 %v206
    %v814 = vunpack.c.l.b16 %v207
    %v815 = vunpack.c.h.b16 %v207
    %v816 = vunpack.c.l.b16 %v208
    %v817 = vunpack.c.h.b16 %v208
    %v818 = vunpack.c.l.b16 %v209
    %v819 = vunpack.c.h.b16 %v209
    %v820 = vunpack.c.l.b16 %v210
    %v821 = vunpack.c.h.b16 %v210
    %v822 = vunpack.c.l.b16 %v211
    %v823 = vunpack.c.h.b16 %v211
    %v824 = vunpack.c.l.b16 %v212
    %v825 = vunpack.c.h.b16 %v212
    %v826 = vunpack.c.l.b16 %v213
    %v827 = vunpack.c.h.b16 %v213
    %v828 = vunpack.c.l.b16 %v214
    %v829 = vunpack.c.h.b16 %v214
    %v830 = vunpack.c.l.b16 %v215
    %v831 = vunpack.c.h.b16 %v215
    %v832 = vunpack.c.l.b16 %v216
    %v833 = vunpack.c.h.b16 %v216
    %v834 = vunpack.c.l.b16 %v217
    %v835 = vunpack.c.h.b16 %v217
    %v836 = vunpack.c.l.b16 %v218
    %v837 = vunpack.c.h.b16 %v218
    %v838 = vunpack.c.l.b16 %v219
    %v839 = vunpack.c.h.b16 %v219
    %v840 = vunpack.c.l.b16 %v220
    %v841 = vunpack.c.h.b16 %v220
    %v842 = vunpack.c.l.b16 %v221
    %v843 = vunpack.c.h.b16 %v221
    %v844 = vunpack.c.l.b16 %v222
    %v845 = vunpack.c.h.b16 %v222
    %v846 = vunpack.c.l.b16 %v223
    %v847 = vunpack.c.h.b16 %v223
    %v848 = vunpack.c.l.b16 %v224
    %v849 = vunpack.c.h.b16 %v224
    %v850 = vunpack.c.l.b16 %v225
    %v851 = vunpack.c.h.b16 %v225
    %v852 = vunpack.c.l.b16 %v226
    %v853 = vunpack.c.h.b16 %v226
    %v854 = vunpack.c.l.b16 %v227
    %v855 = vunpack.c.h.b16 %v227
    %v856 = vunpack.c.l.b16 %v228
    %v857 = vunpack.c.h.b16 %v228
    %v858 = vunpack.c.l.b16 %v229
    %v859 = vunpack.c.h.b16 %v229
    %v860 = vunpack.c.l.b16 %v230
    %v861 = vunpack.c.h.b16 %v230
    %v862 = vunpack.c.l.b16 %v231
    %v863 = vunpack.c.h.b16 %v231
    %v864 = vunpack.c.l.b16 %v232
    %v865 = vunpack.c.h.b16 %v232
    %v866 = vunpack.c.l.b16 %v233
    %v867 = vunpack.c.h.b16 %v233
    %v868 = vunpack.c.l.b16 %v234
    %v869 = vunpack.c.h.b16 %v234
    %v870 = vunpack.c.l.b16 %v235
    %v871 = vunpack.c.h.b16 %v235
    %v872 = vunpack.c.l.b16 %v236
    %v873 = vunpack.c.h.b16 %v236
    %v874 = vunpack.c.l.b16 %v237
    %v875 = vunpack.c.h.b16 %v237
    %v876 = vunpack.c.l.b16 %v238
    %v877 = vunpack.c.h.b16 %v238
    %v878 = vunpack.c.l.b16 %v239
    %v879 = vunpack.c.h.b16 %v239
    %v880 = vunpack.c.l.b16 %v240
    %v881 = vunpack.c.h.b16 %v240
    %v882 = vunpack.c.l.b16 %v241
    %v883 = vunpack.c.h.b16 %v241
    %v884 = vunpack.c.l.b16 %v242
    %v885 = vunpack.c.h.b16 %v242
    %v886 = vunpack.c.l.b16 %v243
    %v887 = vunpack.c.h.b16 %v243
    %v888 = vunpack.c.l.b16 %v244
    %v889 = vunpack.c.h.b16 %v244
    %v890 = vunpack.c.l.b16 %v245
    %v891 = vunpack.c.h.b16 %v245
    %v892 = vunpack.c.l.b16 %v246
    %v893 = vunpack.c.h.b16 %v246
    %v894 = vunpack.c.l.b16 %v247
    %v895 = vunpack.c.h.b16 %v247
    %v896 = vunpack.c.l.b16 %v248
    %v897 = vunpack.c.h.b16 %v248
    %v898 = vunpack.c.l.b16 %v249
    %v899 = vunpack.c.h.b16 %v249
    %v900 = vunpack.c.l.b16 %v250
    %v901 = vunpack.c.h.b16 %v250
    %v902 = vunpack.c.l.b16 %v251
    %v903 = vunpack.c.h.b16 %v251
    %v904 = vunpack.c.l.b16 %v252
    %v905 = vunpack.c.h.b16 %v252
    %v906 = vunpack.c.l.b16 %v253
    %v907 = vunpack.c.h.b16 %v253
    %v908 = vunpack.c.l.b16 %v254
    %v909 = vunpack.c.h.b16 %v254
    %v910 = vunpack.c.l.b16 %v255
    %v911 = vunpack.c.h.b16 %v255
    %v912 = vunpack.c.l.b16 %v256
    %v913 = vunpack.c.h.b16 %v256
    %v914 = vunpack.c.l.b16 %v257
    %v915 = vunpack.c.h.b16 %v257
    %v916 = vunpack.c.l.b16 %v258
    %v917 = vunpack.c.h.b16 %v258
    %v918 = vunpack.c.l.b16 %v259
    %v919 = vunpack.c.h.b16 %v259
    %v920 = vunpack.c.l.b16 %v260
    %v921 = vunpack.c.h.b16 %v260
    %v922 = vunpack.c.l.b16 %v261
    %v923 = vunpack.c.h.b16 %v261
    %v924 = vunpack.c.l.b16 %v262
    %v925 = vunpack.c.h.b16 %v262
    %v926 = vunpack.c.l.b16 %v263
    %v927 = vunpack.c.h.b16 %v263
    %v928 = vunpack.c.l.b16 %v264
    %v929 = vunpack.c.h.b16 %v264
    %v930 = vunpack.c.l.b16 %v265
    %v931 = vunpack.c.h.b16 %v265
    %v932 = vunpack.c.l.b16 %v266
    %v933 = vunpack.c.h.b16 %v266
    %v934 = vunpack.c.l.b16 %v267
    %v935 = vunpack.c.h.b16 %v267
    %v936 = vunpack.c.l.b16 %v268
    %v937 = vunpack.c.h.b16 %v268
    %v938 = vunpack.c.l.b16 %v269
    %v939 = vunpack.c.h.b16 %v269
    %v940 = vunpack.c.l.b16 %v270
    %v941 = vunpack.c.h.b16 %v270
    %v942 = vunpack.c.l.b16 %v271
    %v943 = vunpack.c.h.b16 %v271
    %v944 = vunpack.c.l.b16 %v272
    %v945 = vunpack.c.h.b16 %v272
    %v946 = vunpack.c.l.b16 %v273
    %v947 = vunpack.c.h.b16 %v273
    %v948 = vunpack.c.l.b16 %v274
    %v949 = vunpack.c.h.b16 %v274
    %v950 = vunpack.c.l.b16 %v275
    %v951 = vunpack.c.h.b16 %v275
    %v952 = vunpack.c.l.b16 %v276
    %v953 = vunpack.c.h.b16 %v276
    %v954 = vunpack.c.l.b16 %v277
    %v955 = vunpack.c.h.b16 %v277
    %v956 = vunpack.c.l.b16 %v278
    %v957 = vunpack.c.h.b16 %v278
    %v958 = vunpack.c.l.b16 %v279
    %v959 = vunpack.c.h.b16 %v279
    %v960 = vunpack.c.l.b16 %v280
    %v961 = vunpack.c.h.b16 %v280
    %v962 = vunpack.c.l.b16 %v281
    %v963 = vunpack.c.h.b16 %v281
    %v964 = vunpack.c.l.b16 %v282
    %v965 = vunpack.c.h.b16 %v282
    %v966 = vunpack.c.l.b16 %v283
    %v967 = vunpack.c.h.b16 %v283
    %v968 = vunpack.c.l.b16 %v284
    %v969 = vunpack.c.h.b16 %v284
    %v970 = vunpack.c.l.b16 %v285
    %v971 = vunpack.c.h.b16 %v285
    %v972 = vunpack.c.l.b16 %v286
    %v973 = vunpack.c.h.b16 %v286
    %v974 = vunpack.c.l.b16 %v287
    %v975 = vunpack.c.h.b16 %v287
    %v976 = vunpack.c.l.b16 %v288
    %v977 = vunpack.c.h.b16 %v288
    %v978 = vunpack.c.l.b16 %v289
    %v979 = vunpack.c.h.b16 %v289
    %v980 = vunpack.c.l.b16 %v290
    %v981 = vunpack.c.h.b16 %v290
    %v982 = vunpack.c.l.b16 %v291
    %v983 = vunpack.c.h.b16 %v291
    %v984 = vunpack.c.l.b16 %v292
    %v985 = vunpack.c.h.b16 %v292
    %v986 = vunpack.c.l.b16 %v293
    %v987 = vunpack.c.h.b16 %v293
    %v988 = vunpack.c.l.b16 %v294
    %v989 = vunpack.c.h.b16 %v294
    %v990 = vunpack.c.l.b16 %v295
    %v991 = vunpack.c.h.b16 %v295
    %v992 = vunpack.c.l.b16 %v296
    %v993 = vunpack.c.h.b16 %v296
    %v994 = vunpack.c.l.b16 %v297
    %v995 = vunpack.c.h.b16 %v297
    %v996 = vunpack.c.l.b16 %v298
    %v997 = vunpack.c.h.b16 %v298
    %v998 = vunpack.c.l.b16 %v299
    %v999 = vunpack.c.h.b16 %v299
    %v1000 = vunpack.c.l.b16 %v300
    %v1001 = vunpack.c.h.b16 %v300
    %v1002 = vunpack.c.l.b16 %v301
    %v1003 = vunpack.c.h.b16 %v301
    %v1004 = vunpack.c.l.b16 %v302
    %v1005 = vunpack.c.h.b16 %v302
    %v1006 = vunpack.c.l.b16 %v303
    %v1007 = vunpack.c.h.b16 %v303
    %v1008 = vunpack.c.l.b16 %v304
    %v1009 = vunpack.c.h.b16 %v304
    %v1010 = vunpack.c.l.b16 %v305
    %v1011 = vunpack.c.h.b16 %v305
    %v1012 = vunpack.c.l.b16 %v306
    %v1013 = vunpack.c.h.b16 %v306
    %v1014 = vunpack.c.l.b16 %v307
    %v1015 = vunpack.c.h.b16 %v307
    %v1016 = vunpack.c.l.b16 %v308
    %v1017 = vunpack.c.h.b16 %v308
    %v1018 = vunpack.c.l.b16 %v309
    %v1019 = vunpack.c.h.b16 %v309
    %v1020 = vunpack.c.l.b16 %v310
    %v1021 = vunpack.c.h.b16 %v310
    %v1022 = vunpack.c.l.b16 %v311
    %v1023 = vunpack.c.h.b16 %v311
    %v1024 = vunpack.c.l.b16 %v312
    %v1025 = vunpack.c.h.b16 %v312
    %v1026 = vunpack.c.l.b16 %v313
    %v1027 = vunpack.c.h.b16 %v313
    %v1028 = vunpack.c.l.b16 %v314
    %v1029 = vunpack.c.h.b16 %v314
    %v1030 = vunpack.c.l.b16 %v315
    %v1031 = vunpack.c.h.b16 %v315
    %v1032 = vunpack.c.l.b16 %v316
    %v1033 = vunpack.c.h.b16 %v316
    %v1034 = vunpack.c.l.b16 %v317
    %v1035 = vunpack.c.h.b16 %v317
    %v1036 = vunpack.c.l.b16 %v318
    %v1037 = vunpack.c.h.b16 %v318
    %v1038 = vunpack.c.l.b16 %v319
    %v1039 = vunpack.c.h.b16 %v319
    %v1040 = vunpack.c.l.b16 %v320
    %v1041 = vunpack.c.h.b16 %v320
    %v1042 = vunpack.c.l.b16 %v321
    %v1043 = vunpack.c.h.b16 %v321
    %v1044 = vunpack.c.l.b16 %v322
    %v1045 = vunpack.c.h.b16 %v322
    %v1046 = vunpack.c.l.b16 %v323
    %v1047 = vunpack.c.h.b16 %v323
    %v1048 = vunpack.c.l.b16 %v324
    %v1049 = vunpack.c.h.b16 %v324
    %v1050 = vunpack.c.l.b16 %v325
    %v1051 = vunpack.c.h.b16 %v325
    %v1052 = vunpack.c.l.b16 %v326
    %v1053 = vunpack.c.h.b16 %v326
    %v1054 = vunpack.c.l.b16 %v327
    %v1055 = vunpack.c.h.b16 %v327
    %v1056 = vunpack.c.l.b16 %v328
    %v1057 = vunpack.c.h.b16 %v328
    %v1058 = vunpack.c.l.b16 %v329
    %v1059 = vunpack.c.h.b16 %v329
    %v1060 = vunpack.c.l.b16 %v330
    %v1061 = vunpack.c.h.b16 %v330
    %v1062 = vunpack.c.l.b16 %v331
    %v1063 = vunpack.c.h.b16 %v331
    %v1064 = vunpack.c.l.b16 %v332
    %v1065 = vunpack.c.h.b16 %v332
    %v1066 = vunpack.c.l.b16 %v333
    %v1067 = vunpack.c.h.b16 %v333
    %v1068 = vunpack.c.l.b16 %v334
    %v1069 = vunpack.c.h.b16 %v334
    %v1070 = vunpack.c.l.b16 %v335
    %v1071 = vunpack.c.h.b16 %v335
    %v1072 = vunpack.c.l.b16 %v336
    %v1073 = vunpack.c.h.b16 %v336
    %v1074 = vunpack.c.l.b16 %v337
    %v1075 = vunpack.c.h.b16 %v337
    %v1076 = vunpack.c.l.b16 %v338
    %v1077 = vunpack.c.h.b16 %v338
    %v1078 = vunpack.c.l.b16 %v339
    %v1079 = vunpack.c.h.b16 %v339
    %v1080 = vunpack.c.l.b16 %v340
    %v1081 = vunpack.c.h.b16 %v340
    %v1082 = vunpack.c.l.b16 %v341
    %v1083 = vunpack.c.h.b16 %v341
    %v1084 = vunpack.c.l.b16 %v342
    %v1085 = vunpack.c.h.b16 %v342
    %v1086 = vunpack.c.l.b16 %v343
    %v1087 = vunpack.c.h.b16 %v343
    %v1088 = vunpack.c.l.b16 %v344
    %v1089 = vunpack.c.h.b16 %v344
    %v1090 = vunpack.c.l.b16 %v345
    %v1091 = vunpack.c.h.b16 %v345
    %v1092 = vunpack.c.l.b16 %v346
    %v1093 = vunpack.c.h.b16 %v346
    %v1094 = vunpack.c.l.b16 %v347
    %v1095 = vunpack.c.h.b16 %v347
    %v1096 = vunpack.c.l.b16 %v348
    %v1097 = vunpack.c.h.b16 %v348
    %v1098 = vunpack.c.l.b16 %v349
    %v1099 = vunpack.c.h.b16 %v349
    %v1100 = vunpack.c.l.b16 %v350
    %v1101 = vunpack.c.h.b16 %v350
    %v1102 = vunpack.c.l.b16 %v351
    %v1103 = vunpack.c.h.b16 %v351
    %v1104 = vunpack.c.l.b16 %v352
    %v1105 = vunpack.c.h.b16 %v352
    %v1106 = vunpack.c.l.b16 %v353
    %v1107 = vunpack.c.h.b16 %v353
    %v1108 = vunpack.c.l.b16 %v354
    %v1109 = vunpack.c.h.b16 %v354
    %v1110 = vunpack.c.l.b16 %v355
    %v1111 = vunpack.c.h.b16 %v355
    %v1112 = vunpack.c.l.b16 %v356
    %v1113 = vunpack.c.h.b16 %v356
    %v1114 = vunpack.c.l.b16 %v357
    %v1115 = vunpack.c.h.b16 %v357
    %v1116 = vunpack.c.l.b16 %v358
    %v1117 = vunpack.c.h.b16 %v358
    %v1118 = vunpack.c.l.b16 %v359
    %v1119 = vunpack.c.h.b16 %v359
    %v1120 = vunpack.c.l.b16 %v360
    %v1121 = vunpack.c.h.b16 %v360
    %v1122 = vunpack.c.l.b16 %v361
    %v1123 = vunpack.c.h.b16 %v361
    %v1124 = vunpack.c.l.b16 %v362
    %v1125 = vunpack.c.h.b16 %v362
    %v1126 = vunpack.c.l.b16 %v363
    %v1127 = vunpack.c.h.b16 %v363
    %v1128 = vunpack.c.l.b16 %v364
    %v1129 = vunpack.c.h.b16 %v364
    %v1130 = vunpack.c.l.b16 %v365
    %v1131 = vunpack.c.h.b16 %v365
    %v1132 = vunpack.c.l.b16 %v366
    %v1133 = vunpack.c.h.b16 %v366
    %v1134 = vunpack.c.l.b16 %v367
    %v1135 = vunpack.c.h.b16 %v367
    %v1136 = vunpack.c.l.b16 %v368
    %v1137 = vunpack.c.h.b16 %v368
    %v1138 = vunpack.c.l.b16 %v369
    %v1139 = vunpack.c.h.b16 %v369
    %v1140 = vunpack.c.l.b16 %v370
    %v1141 = vunpack.c.h.b16 %v370
    %v1142 = vunpack.c.l.b16 %v371
    %v1143 = vunpack.c.h.b16 %v371
    %v1144 = vunpack.c.l.b16 %v372
    %v1145 = vunpack.c.h.b16 %v372
    %v1146 = vunpack.c.l.b16 %v373
    %v1147 = vunpack.c.h.b16 %v373
    %v1148 = vunpack.c.l.b16 %v374
    %v1149 = vunpack.c.h.b16 %v374
    %v1150 = vunpack.c.l.b16 %v375
    %v1151 = vunpack.c.h.b16 %v375
    %v1152 = vunpack.c.l.b16 %v376
    %v1153 = vunpack.c.h.b16 %v376
    %v1154 = vunpack.c.l.b16 %v377
    %v1155 = vunpack.c.h.b16 %v377
    %v1156 = vunpack.c.l.b16 %v378
    %v1157 = vunpack.c.h.b16 %v378
    %v1158 = vunpack.c.l.b16 %v379
    %v1159 = vunpack.c.h.b16 %v379
    %v1160 = vunpack.c.l.b16 %v380
    %v1161 = vunpack.c.h.b16 %v380
    %v1162 = vunpack.c.l.b16 %v381
    %v1163 = vunpack.c.h.b16 %v381
    %v1164 = vunpack.c.l.b16 %v382
    %v1165 = vunpack.c.h.b16 %v382
    %v1166 = vunpack.c.l.b16 %v383
    %v1167 = vunpack.c.h.b16 %v383
    %v1168 = vunpack.c.l.b16 %v384
    %v1169 = vunpack.c.h.b16 %v384
    %v1170 = vunpack.c.l.b16 %v385
    %v1171 = vunpack.c.h.b16 %v385
    %v1172 = vunpack.c.l.b16 %v386
    %v1173 = vunpack.c.h.b16 %v386
    %v1174 = vunpack.c.l.b16 %v387
    %v1175 = vunpack.c.h.b16 %v387
    %v1176 = vunpack.c.l.b16 %v388
    %v1177 = vunpack.c.h.b16 %v388
    %v1178 = vunpack.c.l.b16 %v389
    %v1179 = vunpack.c.h.b16 %v389
    %v1180 = vunpack.c.l.b16 %v390
    %v1181 = vunpack.c.h.b16 %v390
    %v1182 = vunpack.c.l.b16 %v391
    %v1183 = vunpack.c.h.b16 %v391
    %v1184 = vunpack.c.l.b16 %v392
    %v1185 = vunpack.c.h.b16 %v392
    %v1186 = vunpack.c.l.b16 %v393
    %v1187 = vunpack.c.h.b16 %v393
    %v1188 = vunpack.c.l.b16 %v394
    %v1189 = vunpack.c.h.b16 %v394
    %v1190 = vunpack.c.l.b16 %v395
    %v1191 = vunpack.c.h.b16 %v395
    %v1192 = vunpack.c.l.b16 %v396
    %v1193 = vunpack.c.h.b16 %v396
    %v1194 = vunpack.c.l.b16 %v397
    %v1195 = vunpack.c.h.b16 %v397
    %v1196 = vunpack.c.l.b16 %v398
    %v1197 = vunpack.c.h.b16 %v398
    %v1198 = vunpack.c.l.b16 %v399
    %v1199 = vunpack.c.h.b16 %v399
    %v1200 = vunpack.c.l.b16 %v400
    %v1201 = vunpack.c.h.b16 %v400
    %v1202 = vunpack.c.l.b16 %v401
    %v1203 = vunpack.c.h.b16 %v401
    %v1204 = vunpack.c.l.b16 %v402
    %v1205 = vunpack.c.h.b16 %v402
    %v1206 = vunpack.c.l.b16 %v403
    %v1207 = vunpack.c.h.b16 %v403
    %v1208 = vunpack.c.l.b16 %v404
    %v1209 = vunpack.c.h.b16 %v404
    %v1210 = vunpack.c.l.b16 %v405
    %v1211 = vunpack.c.h.b16 %v405
    %v1212 = vunpack.c.l.b16 %v406
    %v1213 = vunpack.c.h.b16 %v406
    %v1214 = vunpack.c.l.b16 %v407
    %v1215 = vunpack.c.h.b16 %v407
    %v1216 = vunpack.c.l.b16 %v408
    %v1217 = vunpack.c.h.b16 %v408
    %v1218 = vunpack.c.l.b16 %v409
    %v1219 = vunpack.c.h.b16 %v409
    %v1220 = vunpack.c.l.b16 %v410
    %v1221 = vunpack.c.h.b16 %v410
    %v1222 = vunpack.c.l.b16 %v411
    %v1223 = vunpack.c.h.b16 %v411
    %v1224 = vunpack.c.l.b16 %v412
    %v1225 = vunpack.c.h.b16 %v412
    %v1226 = vunpack.c.l.b16 %v413
    %v1227 = vunpack.c.h.b16 %v413
    %v1228 = vunpack.c.l.b16 %v414
    %v1229 = vunpack.c.h.b16 %v414
    %v1230 = vunpack.c.l.b16 %v415
    %v1231 = vunpack.c.h.b16 %v415
    %v1232 = vunpack.c.l.b16 %v416
    %v1233 = vunpack.c.h.b16 %v416
    %v1234 = vunpack.c.l.b16 %v417
    %v1235 = vunpack.c.h.b16 %v417
    %v1236 = vpack.c.b16 %v728, %v724
    %v1237 = vpack.c.b16 %v729, %v725
    %v1238 = vpack.c.b16 %v730, %v726
    %v1239 = vpack.c.b16 %v731, %v727
    %v1240 = vpack.c.b16 %v736, %v732
    %v1241 = vpack.c.b16 %v737, %v733
    %v1242 = vpack.c.b16 %v738, %v734
    %v1243 = vpack.c.b16 %v739, %v735
    %v1244 = vpack.c.b16 %v744, %v740
    %v1245 = vpack.c.b16 %v745, %v741
    %v1246 = vpack.c.b16 %v746, %v742
    %v1247 = vpack.c.b16 %v747, %v743
    %v1248 = vpack.c.b16 %v752, %v748
    %v1249 = vpack.c.b16 %v753, %v749
    %v1250 = vpack.c.b16 %v754, %v750
    %v1251 = vpack.c.b16 %v755, %v751
    %v1252 = vpack.c.b16 %v760, %v756
    %v1253 = vpack.c.b16 %v761, %v757
    %v1254 = vpack.c.b16 %v762, %v758
    %v1255 = vpack.c.b16 %v763, %v759
    %v1256 = vpack.c.b16 %v768, %v764
    %v1257 = vpack.c.b16 %v769, %v765
    %v1258 = vpack.c.b16 %v770, %v766
    %v1259 = vpack.c.b16 %v771, %v767
    %v1260 = vpack.c.b16 %v776, %v772
    %v1261 = vpack.c.b16 %v777, %v773
    %v1262 = vpack.c.b16 %v778, %v774
    %v1263 = vpack.c.b16 %v779, %v775
    %v1264 = vpack.c.b16 %v784, %v780
    %v1265 = vpack.c.b16 %v785, %v781
    %v1266 = vpack.c.b16 %v786, %v782
    %v1267 = vpack.c.b16 %v787, %v783
    %v1268 = vpack.c.b16 %v792, %v788
    %v1269 = vpack.c.b16 %v793, %v789
    %v1270 = vpack.c.b16 %v794, %v790
    %v1271 = vpack.c.b16 %v795, %v791
    %v1272 = vpack.c.b16 %v800, %v796
    %v1273 = vpack.c.b16 %v801, %v797
    %v1274 = vpack.c.b16 %v802, %v798
    %v1275 = vpack.c.b16 %v803, %v799
    %v1276 = vpack.c.b16 %v808, %v804
    %v1277 = vpack.c.b16 %v809, %v805
    %v1278 = vpack.c.b16 %v810, %v806
    %v1279 = vpack.c.b16 %v811, %v807
    %v1280 = vpack.c.b16 %v816, %v812
    %v1281 = vpack.c.b16 %v817, %v813
    %v1282 = vpack.c.b16 %v818, %v814
    %v1283 = vpack.c.b16 %v819, %v815
    %v1284 = vpack.c.b16 %v824, %v820
    %v1285 = vpack.c.b16 %v825, %v821
    %v1286 = vpack.c.b16 %v826, %v822
    %v1287 = vpack.c.b16 %v827, %v823
    %v1288 = vpack.c.b16 %v832, %v828
    %v1289 = vpack.c.b16 %v833, %v829
    %v1290 = vpack.c.b16 %v834, %v830
    %v1291 = vpack.c.b16 %v835, %v831
    %v1292 = vpack.c.b16 %v840, %v836
    %v1293 = vpack.c.b16 %v841, %v837
    %v1294 = vpack.c.b16 %v842, %v838
    %v1295 = vpack.c.b16 %v843, %v839
    %v1296 = vpack.c.b16 %v848, %v844
    %v1297 = vpack.c.b16 %v849, %v845
    %v1298 = vpack.c.b16 %v850, %v846
    %v1299 = vpack.c.b16 %v851, %v847
    %v1300 = vpack.c.b16 %v856, %v852
    %v1301 = vpack.c.b16 %v857, %v853
    %v1302 = vpack.c.b16 %v858, %v854
    %v1303 = vpack.c.b16 %v859, %v855
    %v1304 = vpack.c.b16 %v864, %v860
    %v1305 = vpack.c.b16 %v865, %v861
    %v1306 = vpack.c.b16 %v866, %v862
    %v1307 = vpack.c.b16 %v867, %v863
    %v1308 = vpack.c.b16 %v872, %v868
    %v1309 = vpack.c.b16 %v873, %v869
    %v1310 = vpack.c.b16 %v874, %v870
    %v1311 = vpack.c.b16 %v875, %v871
    %v1312 = vpack.c.b16 %v880, %v876
    %v1313 = vpack.c.b16 %v881, %v877
    %v1314 = vpack.c.b16 %v882, %v878
    %v1315 = vpack.c.b16 %v883, %v879
    %v1316 = vpack.c.b16 %v888, %v884
    %v1317 = vpack.c.b16 %v889, %v885
    %v1318 = vpack.c.b16 %v890, %v886
    %v1319 = vpack.c.b16 %v891, %v887
    %v1320 = vpack.c.b16 %v896, %v892
    %v1321 = vpack.c.b16 %v897, %v893
    %v1322 = vpack.c.b16 %v898, %v894
    %v1323 = vpack.c.b16 %v899, %v895
    %v1324 = vpack.c.b16 %v904, %v900
    %v1325 = vpack.c.b16 %v905, %v901
    %v1326 = vpack.c.b16 %v906, %v902
    %v1327 = vpack.c.b16 %v907, %v903
    %v1328 = vpack.c.b16 %v912, %v908
    %v1329 = vpack.c.b16 %v913, %v909
    %v1330 = vpack.c.b16 %v914, %v910
    %v1331 = vpack.c.b16 %v915, %v911
    %v1332 = vpack.c.b16 %v920, %v916
    %v1333 = vpack.c.b16 %v921, %v917
    %v1334 = vpack.c.b16 %v922, %v918
    %v1335 = vpack.c.b16 %v923, %v919
    %v1336 = vpack.c.b16 %v928, %v924
    %v1337 = vpack.c.b16 %v929, %v925
    %v1338 = vpack.c.b16 %v930, %v926
    %v1339 = vpack.c.b16 %v931, %v927
    %v1340 = vpack.c.b16 %v936, %v932
    %v1341 = vpack.c.b16 %v937, %v933
    %v1342 = vpack.c.b16 %v938, %v934
    %v1343 = vpack.c.b16 %v939, %v935
    %v1344 = vpack.c.b16 %v944, %v940
    %v1345 = vpack.c.b16 %v945, %v941
    %v1346 = vpack.c.b16 %v946, %v942
    %v1347 = vpack.c.b16 %v947, %v943
    %v1348 = vpack.c.b16 %v952, %v948
    %v1349 = vpack.c.b16 %v953, %v949
    %v1350 = vpack.c.b16 %v954, %v950
    %v1351 = vpack.c.b16 %v955, %v951
    %v1352 = vpack.c.b16 %v960, %v956
    %v1353 = vpack.c.b16 %v961, %v957
    %v1354 = vpack.c.b16 %v962, %v958
    %v1355 = vpack.c.b16 %v963, %v959
    %v1356 = vpack.c.b16 %v968, %v964
    %v1357 = vpack.c.b16 %v969, %v965
    %v1358 = vpack.c.b16 %v970, %v966
    %v1359 = vpack.c.b16 %v971, %v967
    %v1360 = vpack.c.b16 %v976, %v972
    %v1361 = vpack.c.b16 %v977, %v973
    %v1362 = vpack.c.b16 %v978, %v974
    %v1363 = vpack.c.b16 %v979, %v975
    %v1364 = vpack.c.b16 %v984, %v980
    %v1365 = vpack.c.b16 %v985, %v981
    %v1366 = vpack.c.b16 %v986, %v982
    %v1367 = vpack.c.b16 %v987, %v983
    %v1368 = vpack.c.b16 %v992, %v988
    %v1369 = vpack.c.b16 %v993, %v989
    %v1370 = vpack.c.b16 %v994, %v990
    %v1371 = vpack.c.b16 %v995, %v991
    %v1372 = vpack.c.b16 %v1000, %v996
    %v1373 = vpack.c.b16 %v1001, %v997
    %v1374 = vpack.c.b16 %v1002, %v998
    %v1375 = vpack.c.b16 %v1003, %v999
    %v1376 = vpack.c.b16 %v1008, %v1004
    %v1377 = vpack.c.b16 %v1009, %v1005
    %v1378 = vpack.c.b16 %v1010, %v1006
    %v1379 = vpack.c.b16 %v1011, %v1007
    %v1380 = vpack.c.b16 %v1016, %v1012
    %v1381 = vpack.c.b16 %v1017, %v1013
    %v1382 = vpack.c.b16 %v1018, %v1014
    %v1383 = vpack.c.b16 %v1019, %v1015
    %v1384 = vpack.c.b16 %v1024, %v1020
    %v1385 = vpack.c.b16 %v1025, %v1021
    %v1386 = vpack.c.b16 %v1026, %v1022
    %v1387 = vpack.c.b16 %v1027, %v1023
    %v1388 = vpack.c.b16 %v1032, %v1028
    %v1389 = vpack.c.b16 %v1033, %v1029
    %v1390 = vpack.c.b16 %v1034, %v1030
    %v1391 = vpack.c.b16 %v1035, %v1031
    %v1392 = vpack.c.b16 %v1040, %v1036
    %v1393 = vpack.c.b16 %v1041, %v1037
    %v1394 = vpack.c.b16 %v1042, %v1038
    %v1395 = vpack.c.b16 %v1043, %v1039
    %v1396 = vpack.c.b16 %v1048, %v1044
    %v1397 = vpack.c.b16 %v1049, %v1045
    %v1398 = vpack.c.b16 %v1050, %v1046
    %v1399 = vpack.c.b16 %v1051, %v1047
    %v1400 = vpack.c.b16 %v1056, %v1052
    %v1401 = vpack.c.b16 %v1057, %v1053
    %v1402 = vpack.c.b16 %v1058, %v1054
    %v1403 = vpack.c.b16 %v1059, %v1055
    %v1404 = vpack.c.b16 %v1064, %v1060
    %v1405 = vpack.c.b16 %v1065, %v1061
    %v1406 = vpack.c.b16 %v1066, %v1062
    %v1407 = vpack.c.b16 %v1067, %v1063
    %v1408 = vpack.c.b16 %v1072, %v1068
    %v1409 = vpack.c.b16 %v1073, %v1069
    %v1410 = vpack.c.b16 %v1074, %v1070
    %v1411 = vpack.c.b16 %v1075, %v1071
    %v1412 = vpack.c.b16 %v1080, %v1076
    %v1413 = vpack.c.b16 %v1081, %v1077
    %v1414 = vpack.c.b16 %v1082, %v1078
    %v1415 = vpack.c.b16 %v1083, %v1079
    %v1416 = vpack.c.b16 %v1088, %v1084
    %v1417 = vpack.c.b16 %v1089, %v1085
    %v1418 = vpack.c.b16 %v1090, %v1086
    %v1419 = vpack.c.b16 %v1091, %v1087
    %v1420 = vpack.c.b16 %v1096, %v1092
    %v1421 = vpack.c.b16 %v1097, %v1093
    %v1422 = vpack.c.b16 %v1098, %v1094
    %v1423 = vpack.c.b16 %v1099, %v1095
    %v1424 = vpack.c.b16 %v1104, %v1100
    %v1425 = vpack.c.b16 %v1105, %v1101
    %v1426 = vpack.c.b16 %v1106, %v1102
    %v1427 = vpack.c.b16 %v1107, %v1103
    %v1428 = vpack.c.b16 %v1112, %v1108
    %v1429 = vpack.c.b16 %v1113, %v1109
    %v1430 = vpack.c.b16 %v1114, %v1110
    %v1431 = vpack.c.b16 %v1115, %v1111
    %v1432 = vpack.c.b16 %v1120, %v1116
    %v1433 = vpack.c.b16 %v1121, %v1117
    %v1434 = vpack.c.b16 %v1122, %v1118
    %v1435 = vpack.c.b16 %v1123, %v1119
    %v1436 = vpack.c.b16 %v1128, %v1124
    %v1437 = vpack.c.b16 %v1129, %v1125
    %v1438 = vpack.c.b16 %v1130, %v1126
    %v1439 = vpack.c.b16 %v1131, %v1127
    %v1440 = vpack.c.b16 %v1136, %v1132
    %v1441 = vpack.c.b16 %v1137, %v1133
    %v1442 = vpack.c.b16 %v1138, %v1134
    %v1443 = vpack.c.b16 %v1139, %v1135
    %v1444 = vpack.c.b16 %v1144, %v1140
    %v1445 = vpack.c.b16 %v1145, %v1141
    %v1446 = vpack.c.b16 %v1146, %v1142
    %v1447 = vpack.c.b16 %v1147, %v1143
    %v1448 = vpack.c.b16 %v1152, %v1148
    %v1449 = vpack.c.b16 %v1153, %v1149
    %v1450 = vpack.c.b16 %v1154, %v1150
    %v1451 = vpack.c.b16 %v1155, %v1151
    %v1452 = vpack.c.b16 %v1160, %v1156
    %v1453 = vpack.c.b16 %v1161, %v1157
    %v1454 = vpack.c.b16 %v1162, %v1158
    %v1455 = vpack.c.b16 %v1163, %v1159
    %v1456 = vpack.c.b16 %v1168, %v1164
    %v1457 = vpack.c.b16 %v1169, %v1165
    %v1458 = vpack.c.b16 %v1170, %v1166
    %v1459 = vpack.c.b16 %v1171, %v1167
    %v1460 = vpack.c.b16 %v1176, %v1172
    %v1461 = vpack.c.b16 %v1177, %v1173
    %v1462 = vpack.c.b16 %v1178, %v1174
    %v1463 = vpack.c.b16 %v1179, %v1175
    %v1464 = vpack.c.b16 %v1184, %v1180
    %v1465 = vpack.c.b16 %v1185, %v1181
    %v1466 = vpack.c.b16 %v1186, %v1182
    %v1467 = vpack.c.b16 %v1187, %v1183
    %v1468 = vpack.c.b16 %v1192, %v1188
    %v1469 = vpack.c.b16 %v1193, %v1189
    %v1470 = vpack.c.b16 %v1194, %v1190
    %v1471 = vpack.c.b16 %v1195, %v1191
    %v1472 = vpack.c.b16 %v1200, %v1196
    %v1473 = vpack.c.b16 %v1201, %v1197
    %v1474 = vpack.c.b16 %v1202, %v1198
    %v1475 = vpack.c.b16 %v1203, %v1199
    %v1476 = vpack.c.b16 %v1208, %v1204
    %v1477 = vpack.c.b16 %v1209, %v1205
    %v1478 = vpack.c.b16 %v1210, %v1206
    %v1479 = vpack.c.b16 %v1211, %v1207
    %v1480 = vpack.c.b16 %v1216, %v1212
    %v1481 = vpack.c.b16 %v1217, %v1213
    %v1482 = vpack.c.b16 %v1218, %v1214
    %v1483 = vpack.c.b16 %v1219, %v1215
    %v1484 = vpack.c.b16 %v1224, %v1220
    %v1485 = vpack.c.b16 %v1225, %v1221
    %v1486 = vpack.c.b16 %v1226, %v1222
    %v1487 = vpack.c.b16 %v1227, %v1223
    %v1488 = vpack.c.b16 %v1232, %v1228
    %v1489 = vpack.c.b16 %v1233, %v1229
    %v1490 = vpack.c.b16 %v1234, %v1230
    %v1491 = vpack.c.b16 %v1235, %v1231
    %1748 = vmatprep.subr.bf16.mxu0 %v1237
    %1749 = vmatpush1.bf16.msra.mxu0 %v1236
    %1750 = vmatprep.subr.bf16.mxu0 %v1241
    %1751 = vmatpush1.bf16.msra.mxu0 %v1240
    %1752 = vmatprep.subr.bf16.mxu0 %v1245
    %1753 = vmatpush1.bf16.msra.mxu0 %v1244
    %1754 = vmatprep.subr.bf16.mxu0 %v1249
    %1755 = vmatpush1.bf16.msra.mxu0 %v1248
    %1756 = vmatprep.subr.bf16.mxu0 %v1253
    %1757 = vmatpush1.bf16.msra.mxu0 %v1252
    %1758 = vmatprep.subr.bf16.mxu0 %v1257
    %1759 = vmatpush1.bf16.msra.mxu0 %v1256
    %1760 = vmatprep.subr.bf16.mxu0 %v1261
    %1761 = vmatpush1.bf16.msra.mxu0 %v1260
    %1762 = vmatprep.subr.bf16.mxu0 %v1265
    %1763 = vmatpush1.bf16.msra.mxu0 %v1264
    %1764 = vmatprep.subr.bf16.mxu0 %v1269
    %1765 = vmatpush1.bf16.msra.mxu0 %v1268
    %1766 = vmatprep.subr.bf16.mxu0 %v1273
    %1767 = vmatpush1.bf16.msra.mxu0 %v1272
    %1768 = vmatprep.subr.bf16.mxu0 %v1277
    %1769 = vmatpush1.bf16.msra.mxu0 %v1276
    %1770 = vmatprep.subr.bf16.mxu0 %v1281
    %1771 = vmatpush1.bf16.msra.mxu0 %v1280
    %1772 = vmatprep.subr.bf16.mxu0 %v1285
    %1773 = vmatpush1.bf16.msra.mxu0 %v1284
    %1774 = vmatprep.subr.bf16.mxu0 %v1289
    %1775 = vmatpush1.bf16.msra.mxu0 %v1288
    %1776 = vmatprep.subr.bf16.mxu0 %v1293
    %1777 = vmatpush1.bf16.msra.mxu0 %v1292
    %1778 = vmatprep.subr.bf16.mxu0 %v1297
    %1779 = vmatpush1.bf16.msra.mxu0 %v1296
    %1780 = vmatprep.mubr.bf16.mxu0 %v453
    %1781 = vmatmul.mubr.bf16.gmra.mrb[0].mxu0 %v452
    %v1782 = vpop.f32.mrb[0].mxu0
    %v1783 = vadd.f32 %v423, %v1782
    %v1784 = vpop.f32.mrb[0].mxu0
    %v1785 = vadd.f32 %v427, %v1784
    %v1786 = vpop.f32.mrb[0].mxu0
    %v1787 = vpop.f32.mrb[0].mxu0
    %1788 = vdwg.mxu0
    %1789 = vmatprep.subr.bf16.mxu0 %v1301
    %1790 = vmatpush1.bf16.msra.mxu0 %v1300
    %1791 = vmatprep.subr.bf16.mxu0 %v1305
    %1792 = vmatpush1.bf16.msra.mxu0 %v1304
    %1793 = vmatprep.subr.bf16.mxu0 %v1309
    %1794 = vmatpush1.bf16.msra.mxu0 %v1308
    %1795 = vmatprep.subr.bf16.mxu0 %v1313
    %1796 = vmatpush1.bf16.msra.mxu0 %v1312
    %1797 = vmatprep.subr.bf16.mxu0 %v1317
    %1798 = vmatpush1.bf16.msra.mxu0 %v1316
    %1799 = vmatprep.subr.bf16.mxu0 %v1321
    %1800 = vmatpush1.bf16.msra.mxu0 %v1320
    %1801 = vmatprep.subr.bf16.mxu0 %v1325
    %1802 = vmatpush1.bf16.msra.mxu0 %v1324
    %1803 = vmatprep.subr.bf16.mxu0 %v1329
    %1804 = vmatpush1.bf16.msra.mxu0 %v1328
    %1805 = vmatprep.subr.bf16.mxu0 %v1333
    %1806 = vmatpush1.bf16.msra.mxu0 %v1332
    %1807 = vmatprep.subr.bf16.mxu0 %v1337
    %1808 = vmatpush1.bf16.msra.mxu0 %v1336
    %1809 = vmatprep.subr.bf16.mxu0 %v1341
    %1810 = vmatpush1.bf16.msra.mxu0 %v1340
    %1811 = vmatprep.subr.bf16.mxu0 %v1345
    %1812 = vmatpush1.bf16.msra.mxu0 %v1344
    %1813 = vmatprep.subr.bf16.mxu0 %v1349
    %1814 = vmatpush1.bf16.msra.mxu0 %v1348
    %1815 = vmatprep.subr.bf16.mxu0 %v1353
    %1816 = vmatpush1.bf16.msra.mxu0 %v1352
    %1817 = vmatprep.subr.bf16.mxu0 %v1357
    %1818 = vmatpush1.bf16.msra.mxu0 %v1356
    %1819 = vmatprep.subr.bf16.mxu0 %v1361
    %1820 = vmatpush1.bf16.msra.mxu0 %v1360
    %1821 = vmatprep.mubr.bf16.mxu0 %v455
    %1822 = vmatmul.mubr.bf16.gmra.mrb[0].mxu0 %v454
    %v1823 = vpop.f32.mrb[0].mxu0
    %v1824 = vadd.f32 %v1783, %v1823
    %v1825 = vpop.f32.mrb[0].mxu0
    %v1826 = vadd.f32 %v1785, %v1825
    %v1827 = vpop.f32.mrb[0].mxu0
    %v1828 = vpop.f32.mrb[0].mxu0
    %1829 = vdwg.mxu0
    %1830 = vmatprep.subr.bf16.mxu0 %v1365
    %1831 = vmatpush1.bf16.msra.mxu0 %v1364
    %1832 = vmatprep.subr.bf16.mxu0 %v1369
    %1833 = vmatpush1.bf16.msra.mxu0 %v1368
    %1834 = vmatprep.subr.bf16.mxu0 %v1373
    %1835 = vmatpush1.bf16.msra.mxu0 %v1372
    %1836 = vmatprep.subr.bf16.mxu0 %v1377
    %1837 = vmatpush1.bf16.msra.mxu0 %v1376
    %1838 = vmatprep.subr.bf16.mxu0 %v1381
    %1839 = vmatpush1.bf16.msra.mxu0 %v1380
    %1840 = vmatprep.subr.bf16.mxu0 %v1385
    %1841 = vmatpush1.bf16.msra.mxu0 %v1384
    %1842 = vmatprep.subr.bf16.mxu0 %v1389
    %1843 = vmatpush1.bf16.msra.mxu0 %v1388
    %1844 = vmatprep.subr.bf16.mxu0 %v1393
    %1845 = vmatpush1.bf16.msra.mxu0 %v1392
    %1846 = vmatprep.subr.bf16.mxu0 %v1397
    %1847 = vmatpush1.bf16.msra.mxu0 %v1396
    %1848 = vmatprep.subr.bf16.mxu0 %v1401
    %1849 = vmatpush1.bf16.msra.mxu0 %v1400
    %1850 = vmatprep.subr.bf16.mxu0 %v1405
    %1851 = vmatpush1.bf16.msra.mxu0 %v1404
    %1852 = vmatprep.subr.bf16.mxu0 %v1409
    %1853 = vmatpush1.bf16.msra.mxu0 %v1408
    %1854 = vmatprep.subr.bf16.mxu0 %v1413
    %1855 = vmatpush1.bf16.msra.mxu0 %v1412
    %1856 = vmatprep.subr.bf16.mxu0 %v1417
    %1857 = vmatpush1.bf16.msra.mxu0 %v1416
    %1858 = vmatprep.subr.bf16.mxu0 %v1421
    %1859 = vmatpush1.bf16.msra.mxu0 %v1420
    %1860 = vmatprep.subr.bf16.mxu0 %v1425
    %1861 = vmatpush1.bf16.msra.mxu0 %v1424
    %1862 = vmatprep.mubr.bf16.mxu0 %v457
    %1863 = vmatmul.mubr.bf16.gmra.mrb[0].mxu0 %v456
    %v1864 = vpop.f32.mrb[0].mxu0
    %v1865 = vadd.f32 %v1824, %v1864
    %v1866 = vpop.f32.mrb[0].mxu0
    %v1867 = vadd.f32 %v1826, %v1866
    %v1868 = vpop.f32.mrb[0].mxu0
    %v1869 = vpop.f32.mrb[0].mxu0
    %1870 = vdwg.mxu0
    %1871 = vmatprep.subr.bf16.mxu0 %v1429
    %1872 = vmatpush1.bf16.msra.mxu0 %v1428
    %1873 = vmatprep.subr.bf16.mxu0 %v1433
    %1874 = vmatpush1.bf16.msra.mxu0 %v1432
    %1875 = vmatprep.subr.bf16.mxu0 %v1437
    %1876 = vmatpush1.bf16.msra.mxu0 %v1436
    %1877 = vmatprep.subr.bf16.mxu0 %v1441
    %1878 = vmatpush1.bf16.msra.mxu0 %v1440
    %1879 = vmatprep.subr.bf16.mxu0 %v1445
    %1880 = vmatpush1.bf16.msra.mxu0 %v1444
    %1881 = vmatprep.subr.bf16.mxu0 %v1449
    %1882 = vmatpush1.bf16.msra.mxu0 %v1448
    %1883 = vmatprep.subr.bf16.mxu0 %v1453
    %1884 = vmatpush1.bf16.msra.mxu0 %v1452
    %1885 = vmatprep.subr.bf16.mxu0 %v1457
    %1886 = vmatpush1.bf16.msra.mxu0 %v1456
    %1887 = vmatprep.subr.bf16.mxu0 %v1461
    %1888 = vmatpush1.bf16.msra.mxu0 %v1460
    %1889 = vmatprep.subr.bf16.mxu0 %v1465
    %1890 = vmatpush1.bf16.msra.mxu0 %v1464
    %1891 = vmatprep.subr.bf16.mxu0 %v1469
    %1892 = vmatpush1.bf16.msra.mxu0 %v1468
    %1893 = vmatprep.subr.bf16.mxu0 %v1473
    %1894 = vmatpush1.bf16.msra.mxu0 %v1472
    %1895 = vmatprep.subr.bf16.mxu0 %v1477
    %1896 = vmatpush1.bf16.msra.mxu0 %v1476
    %1897 = vmatprep.subr.bf16.mxu0 %v1481
    %1898 = vmatpush1.bf16.msra.mxu0 %v1480
    %1899 = vmatprep.subr.bf16.mxu0 %v1485
    %1900 = vmatpush1.bf16.msra.mxu0 %v1484
    %1901 = vmatprep.subr.bf16.mxu0 %v1489
    %1902 = vmatpush1.bf16.msra.mxu0 %v1488
    %1903 = vmatprep.mubr.bf16.mxu0 %v459
    %1904 = vmatmul.mubr.bf16.gmra.mrb[0].mxu0 %v458
    %v1905 = vpop.f32.mrb[0].mxu0
    %v1906 = vadd.f32 %v1865, %v1905
    %v1907 = vpop.f32.mrb[0].mxu0
    %v1908 = vadd.f32 %v1867, %v1907
    %v1909 = vpop.f32.mrb[0].mxu0
    %v1910 = vpop.f32.mrb[0].mxu0
    %1911 = vdwg.mxu0
    %1912 = vmatprep.subr.bf16.mxu0 %v1239
    %1913 = vmatpush1.bf16.msra.mxu0 %v1238
    %1914 = vmatprep.subr.bf16.mxu0 %v1243
    %1915 = vmatpush1.bf16.msra.mxu0 %v1242
    %1916 = vmatprep.subr.bf16.mxu0 %v1247
    %1917 = vmatpush1.bf16.msra.mxu0 %v1246
    %1918 = vmatprep.subr.bf16.mxu0 %v1251
    %1919 = vmatpush1.bf16.msra.mxu0 %v1250
    %1920 = vmatprep.subr.bf16.mxu0 %v1255
    %1921 = vmatpush1.bf16.msra.mxu0 %v1254
    %1922 = vmatprep.subr.bf16.mxu0 %v1259
    %1923 = vmatpush1.bf16.msra.mxu0 %v1258
    %1924 = vmatprep.subr.bf16.mxu0 %v1263
    %1925 = vmatpush1.bf16.msra.mxu0 %v1262
    %1926 = vmatprep.subr.bf16.mxu0 %v1267
    %1927 = vmatpush1.bf16.msra.mxu0 %v1266
    %1928 = vmatprep.subr.bf16.mxu0 %v1271
    %1929 = vmatpush1.bf16.msra.mxu0 %v1270
    %1930 = vmatprep.subr.bf16.mxu0 %v1275
    %1931 = vmatpush1.bf16.msra.mxu0 %v1274
    %1932 = vmatprep.subr.bf16.mxu0 %v1279
    %1933 = vmatpush1.bf16.msra.mxu0 %v1278
    %1934 = vmatprep.subr.bf16.mxu0 %v1283
    %1935 = vmatpush1.bf16.msra.mxu0 %v1282
    %1936 = vmatprep.subr.bf16.mxu0 %v1287
    %1937 = vmatpush1.bf16.msra.mxu0 %v1286
    %1938 = vmatprep.subr.bf16.mxu0 %v1291
    %1939 = vmatpush1.bf16.msra.mxu0 %v1290
    %1940 = vmatprep.subr.bf16.mxu0 %v1295
    %1941 = vmatpush1.bf16.msra.mxu0 %v1294
    %1942 = vmatprep.subr.bf16.mxu0 %v1299
    %1943 = vmatpush1.bf16.msra.mxu0 %v1298
    %1944 = vmatprep.mubr.bf16.mxu0 %v453
    %1945 = vmatmul.mubr.bf16.gmra.mrb[0].mxu0 %v452
    %v1946 = vpop.f32.mrb[0].mxu0
    %v1947 = vadd.f32 %v431, %v1946
    %v1948 = vpop.f32.mrb[0].mxu0
    %v1949 = vadd.f32 %v435, %v1948
    %v1950 = vpop.f32.mrb[0].mxu0
    %v1951 = vpop.f32.mrb[0].mxu0
    %1952 = vdwg.mxu0
    %1953 = vmatprep.subr.bf16.mxu0 %v1303
    %1954 = vmatpush1.bf16.msra.mxu0 %v1302
    %1955 = vmatprep.subr.bf16.mxu0 %v1307
    %1956 = vmatpush1.bf16.msra.mxu0 %v1306
    %1957 = vmatprep.subr.bf16.mxu0 %v1311
    %1958 = vmatpush1.bf16.msra.mxu0 %v1310
    %1959 = vmatprep.subr.bf16.mxu0 %v1315
    %1960 = vmatpush1.bf16.msra.mxu0 %v1314
    %1961 = vmatprep.subr.bf16.mxu0 %v1319
    %1962 = vmatpush1.bf16.msra.mxu0 %v1318
    %1963 = vmatprep.subr.bf16.mxu0 %v1323
    %1964 = vmatpush1.bf16.msra.mxu0 %v1322
    %1965 = vmatprep.subr.bf16.mxu0 %v1327
    %1966 = vmatpush1.bf16.msra.mxu0 %v1326
    %1967 = vmatprep.subr.bf16.mxu0 %v1331
    %1968 = vmatpush1.bf16.msra.mxu0 %v1330
    %1969 = vmatprep.subr.bf16.mxu0 %v1335
    %1970 = vmatpush1.bf16.msra.mxu0 %v1334
    %1971 = vmatprep.subr.bf16.mxu0 %v1339
    %1972 = vmatpush1.bf16.msra.mxu0 %v1338
    %1973 = vmatprep.subr.bf16.mxu0 %v1343
    %1974 = vmatpush1.bf16.msra.mxu0 %v1342
    %1975 = vmatprep.subr.bf16.mxu0 %v1347
    %1976 = vmatpush1.bf16.msra.mxu0 %v1346
    %1977 = vmatprep.subr.bf16.mxu0 %v1351
    %1978 = vmatpush1.bf16.msra.mxu0 %v1350
    %1979 = vmatprep.subr.bf16.mxu0 %v1355
    %1980 = vmatpush1.bf16.msra.mxu0 %v1354
    %1981 = vmatprep.subr.bf16.mxu0 %v1359
    %1982 = vmatpush1.bf16.msra.mxu0 %v1358
    %1983 = vmatprep.subr.bf16.mxu0 %v1363
    %1984 = vmatpush1.bf16.msra.mxu0 %v1362
    %1985 = vmatprep.mubr.bf16.mxu0 %v455
    %1986 = vmatmul.mubr.bf16.gmra.mrb[0].mxu0 %v454
    %v1987 = vpop.f32.mrb[0].mxu0
    %v1988 = vadd.f32 %v1947, %v1987
    %v1989 = vpop.f32.mrb[0].mxu0
    %v1990 = vadd.f32 %v1949, %v1989
    %v1991 = vpop.f32.mrb[0].mxu0
    %v1992 = vpop.f32.mrb[0].mxu0
    %1993 = vdwg.mxu0
    %1994 = vmatprep.subr.bf16.mxu0 %v1367
    %1995 = vmatpush1.bf16.msra.mxu0 %v1366
    %1996 = vmatprep.subr.bf16.mxu0 %v1371
    %1997 = vmatpush1.bf16.msra.mxu0 %v1370
    %1998 = vmatprep.subr.bf16.mxu0 %v1375
    %1999 = vmatpush1.bf16.msra.mxu0 %v1374
    %2000 = vmatprep.subr.bf16.mxu0 %v1379
    %2001 = vmatpush1.bf16.msra.mxu0 %v1378
    %2002 = vmatprep.subr.bf16.mxu0 %v1383
    %2003 = vmatpush1.bf16.msra.mxu0 %v1382
    %2004 = vmatprep.subr.bf16.mxu0 %v1387
    %2005 = vmatpush1.bf16.msra.mxu0 %v1386
    %2006 = vmatprep.subr.bf16.mxu0 %v1391
    %2007 = vmatpush1.bf16.msra.mxu0 %v1390
    %2008 = vmatprep.subr.bf16.mxu0 %v1395
    %2009 = vmatpush1.bf16.msra.mxu0 %v1394
    %2010 = vmatprep.subr.bf16.mxu0 %v1399
    %2011 = vmatpush1.bf16.msra.mxu0 %v1398
    %2012 = vmatprep.subr.bf16.mxu0 %v1403
    %2013 = vmatpush1.bf16.msra.mxu0 %v1402
    %2014 = vmatprep.subr.bf16.mxu0 %v1407
    %2015 = vmatpush1.bf16.msra.mxu0 %v1406
    %2016 = vmatprep.subr.bf16.mxu0 %v1411
    %2017 = vmatpush1.bf16.msra.mxu0 %v1410
    %2018 = vmatprep.subr.bf16.mxu0 %v1415
    %2019 = vmatpush1.bf16.msra.mxu0 %v1414
    %2020 = vmatprep.subr.bf16.mxu0 %v1419
    %2021 = vmatpush1.bf16.msra.mxu0 %v1418
    %2022 = vmatprep.subr.bf16.mxu0 %v1423
    %2023 = vmatpush1.bf16.msra.mxu0 %v1422
    %2024 = vmatprep.subr.bf16.mxu0 %v1427
    %2025 = vmatpush1.bf16.msra.mxu0 %v1426
    %2026 = vmatprep.mubr.bf16.mxu0 %v457
    %2027 = vmatmul.mubr.bf16.gmra.mrb[0].mxu0 %v456
    %v2028 = vpop.f32.mrb[0].mxu0
    %v2029 = vadd.f32 %v1988, %v2028
    %v2030 = vpop.f32.mrb[0].mxu0
    %v2031 = vadd.f32 %v1990, %v2030
    %v2032 = vpop.f32.mrb[0].mxu0
    %v2033 = vpop.f32.mrb[0].mxu0
    %2034 = vdwg.mxu0
    %2035 = vmatprep.subr.bf16.mxu0 %v1431
    %2036 = vmatpush1.bf16.msra.mxu0 %v1430
    %2037 = vmatprep.subr.bf16.mxu0 %v1435
    %2038 = vmatpush1.bf16.msra.mxu0 %v1434
    %2039 = vmatprep.subr.bf16.mxu0 %v1439
    %2040 = vmatpush1.bf16.msra.mxu0 %v1438
    %2041 = vmatprep.subr.bf16.mxu0 %v1443
    %2042 = vmatpush1.bf16.msra.mxu0 %v1442
    %2043 = vmatprep.subr.bf16.mxu0 %v1447
    %2044 = vmatpush1.bf16.msra.mxu0 %v1446
    %2045 = vmatprep.subr.bf16.mxu0 %v1451
    %2046 = vmatpush1.bf16.msra.mxu0 %v1450
    %2047 = vmatprep.subr.bf16.mxu0 %v1455
    %2048 = vmatpush1.bf16.msra.mxu0 %v1454
    %2049 = vmatprep.subr.bf16.mxu0 %v1459
    %2050 = vmatpush1.bf16.msra.mxu0 %v1458
    %2051 = vmatprep.subr.bf16.mxu0 %v1463
    %2052 = vmatpush1.bf16.msra.mxu0 %v1462
    %2053 = vmatprep.subr.bf16.mxu0 %v1467
    %2054 = vmatpush1.bf16.msra.mxu0 %v1466
    %2055 = vmatprep.subr.bf16.mxu0 %v1471
    %2056 = vmatpush1.bf16.msra.mxu0 %v1470
    %2057 = vmatprep.subr.bf16.mxu0 %v1475
    %2058 = vmatpush1.bf16.msra.mxu0 %v1474
    %2059 = vmatprep.subr.bf16.mxu0 %v1479
    %2060 = vmatpush1.bf16.msra.mxu0 %v1478
    %2061 = vmatprep.subr.bf16.mxu0 %v1483
    %2062 = vmatpush1.bf16.msra.mxu0 %v1482
    %2063 = vmatprep.subr.bf16.mxu0 %v1487
    %2064 = vmatpush1.bf16.msra.mxu0 %v1486
    %2065 = vmatprep.subr.bf16.mxu0 %v1491
    %2066 = vmatpush1.bf16.msra.mxu0 %v1490
    %2067 = vmatprep.mubr.bf16.mxu0 %v459
    %2068 = vmatmul.mubr.bf16.gmra.mrb[0].mxu0 %v458
    %v2069 = vpop.f32.mrb[0].mxu0
    %v2070 = vadd.f32 %v2029, %v2069
    %v2071 = vpop.f32.mrb[0].mxu0
    %v2072 = vadd.f32 %v2031, %v2071
    %v2073 = vpop.f32.mrb[0].mxu0
    %v2074 = vpop.f32.mrb[0].mxu0
    %2075 = vdwg.mxu0
    %v2076 = vmax.f32 %v1906, 0.0
    %v2077 = vmax.f32 %v1908, 0.0
    %v2078 = vmax.f32 %v2070, 0.0
    %v2079 = vmax.f32 %v2072, 0.0
    %v2080 = vpack.c.bf16 %v2076, %v2076
    %v2081 = vpack.c.bf16 %v2077, %v2077
    %v2082 = vpack.c.bf16 %v2078, %v2078
    %v2083 = vpack.c.bf16 %v2079, %v2079
    %v2084 = vld [vmem:[#allocation8] sm:$0xff]
    %v2085 = vld [vmem:[#allocation8 + $0x8] sm:$0xff]
    %v2086 = vld [vmem:[#allocation8 + $0x10] sm:$0xff]
    %v2087 = vld [vmem:[#allocation8 + $0x18] sm:$0xff]
    %v2088 = vld [vmem:[#allocation8 + $0x20] sm:$0xff]
    %v2089 = vld [vmem:[#allocation8 + $0x28] sm:$0xff]
    %v2090 = vld [vmem:[#allocation8 + $0x30] sm:$0xff]
    %v2091 = vld [vmem:[#allocation8 + $0x38] sm:$0xff]
    %v2092 = vld [vmem:[#allocation8 + $0x40] sm:$0xff]
    %v2093 = vld [vmem:[#allocation8 + $0x48] sm:$0xff]
    %v2094 = vld [vmem:[#allocation8 + $0x50] sm:$0xff]
    %v2095 = vld [vmem:[#allocation8 + $0x58] sm:$0xff]
    %v2096 = vld [vmem:[#allocation8 + $0x60] sm:$0xff]
    %v2097 = vld [vmem:[#allocation8 + $0x68] sm:$0xff]
    %v2098 = vld [vmem:[#allocation8 + $0x70] sm:$0xff]
    %v2099 = vld [vmem:[#allocation8 + $0x78] sm:$0xff]
    %v2100 = vld [vmem:[#allocation8 + $0x80] sm:$0xff]
    %v2101 = vld [vmem:[#allocation8 + $0x88] sm:$0xff]
    %v2102 = vld [vmem:[#allocation8 + $0x90] sm:$0xff]
    %v2103 = vld [vmem:[#allocation8 + $0x98] sm:$0xff]
    %v2104 = vld [vmem:[#allocation8 + $0xa0] sm:$0xff]
    %v2105 = vld [vmem:[#allocation8 + $0xa8] sm:$0xff]
    %v2106 = vld [vmem:[#allocation8 + $0xb0] sm:$0xff]
    %v2107 = vld [vmem:[#allocation8 + $0xb8] sm:$0xff]
    %v2108 = vld [vmem:[#allocation8 + $0xc0] sm:$0xff]
    %v2109 = vld [vmem:[#allocation8 + $0xc8] sm:$0xff]
    %v2110 = vld [vmem:[#allocation8 + $0xd0] sm:$0xff]
    %v2111 = vld [vmem:[#allocation8 + $0xd8] sm:$0xff]
    %v2112 = vld [vmem:[#allocation8 + $0xe0] sm:$0xff]
    %v2113 = vld [vmem:[#allocation8 + $0xe8] sm:$0xff]
    %v2114 = vld [vmem:[#allocation8 + $0xf0] sm:$0xff]
    %v2115 = vld [vmem:[#allocation8 + $0xf8] sm:$0xff]
    %v2116 = vld [vmem:[#allocation8 + $0x100] sm:$0xff]
    %v2117 = vld [vmem:[#allocation8 + $0x108] sm:$0xff]
    %v2118 = vld [vmem:[#allocation8 + $0x110] sm:$0xff]
    %v2119 = vld [vmem:[#allocation8 + $0x118] sm:$0xff]
    %v2120 = vld [vmem:[#allocation8 + $0x120] sm:$0xff]
    %v2121 = vld [vmem:[#allocation8 + $0x128] sm:$0xff]
    %v2122 = vld [vmem:[#allocation8 + $0x130] sm:$0xff]
    %v2123 = vld [vmem:[#allocation8 + $0x138] sm:$0xff]
    %v2124 = vld [vmem:[#allocation8 + $0x140] sm:$0xff]
    %v2125 = vld [vmem:[#allocation8 + $0x148] sm:$0xff]
    %v2126 = vld [vmem:[#allocation8 + $0x150] sm:$0xff]
    %v2127 = vld [vmem:[#allocation8 + $0x158] sm:$0xff]
    %v2128 = vld [vmem:[#allocation8 + $0x160] sm:$0xff]
    %v2129 = vld [vmem:[#allocation8 + $0x168] sm:$0xff]
    %v2130 = vld [vmem:[#allocation8 + $0x170] sm:$0xff]
    %v2131 = vld [vmem:[#allocation8 + $0x178] sm:$0xff]
    %v2132 = vld [vmem:[#allocation8 + $0x180] sm:$0xff]
    %v2133 = vld [vmem:[#allocation8 + $0x188] sm:$0xff]
    %v2134 = vld [vmem:[#allocation8 + $0x190] sm:$0xff]
    %v2135 = vld [vmem:[#allocation8 + $0x198] sm:$0xff]
    %v2136 = vld [vmem:[#allocation8 + $0x1a0] sm:$0xff]
    %v2137 = vld [vmem:[#allocation8 + $0x1a8] sm:$0xff]
    %v2138 = vld [vmem:[#allocation8 + $0x1b0] sm:$0xff]
    %v2139 = vld [vmem:[#allocation8 + $0x1b8] sm:$0xff]
    %v2140 = vld [vmem:[#allocation8 + $0x1c0] sm:$0xff]
    %v2141 = vld [vmem:[#allocation8 + $0x1c8] sm:$0xff]
    %v2142 = vld [vmem:[#allocation8 + $0x1d0] sm:$0xff]
    %v2143 = vld [vmem:[#allocation8 + $0x1d8] sm:$0xff]
    %v2144 = vld [vmem:[#allocation8 + $0x1e0] sm:$0xff]
    %v2145 = vld [vmem:[#allocation8 + $0x1e8] sm:$0xff]
    %v2146 = vld [vmem:[#allocation8 + $0x1f0] sm:$0xff]
    %v2147 = vld [vmem:[#allocation8 + $0x1f8] sm:$0xff]
    %v2148 = vld [vmem:[%s5] sm:$0x3]
    %v2150 = vlaneseq
    %v2151 = vshrl.u32 %v2150, 7
    %v2152 = vsub.s32 0, %v2151
    %v2153 = vrot.slane %v2148, %v2152
    %v2154 = vlaneseq
    %v2155 = vshrl.u32 %v2154, 7
    %v2156 = vsub.s32 1, %v2155
    %v2157 = vrot.slane %v2148, %v2156
    %v2224 = vunpack.c.l.b16 %v2084
    %v2225 = vunpack.c.h.b16 %v2084
    %v2226 = vunpack.c.l.b16 %v2085
    %v2227 = vunpack.c.h.b16 %v2085
    %v2228 = vunpack.c.l.b16 %v2086
    %v2229 = vunpack.c.h.b16 %v2086
    %v2230 = vunpack.c.l.b16 %v2087
    %v2231 = vunpack.c.h.b16 %v2087
    %v2232 = vunpack.c.l.b16 %v2088
    %v2233 = vunpack.c.h.b16 %v2088
    %v2234 = vunpack.c.l.b16 %v2089
    %v2235 = vunpack.c.h.b16 %v2089
    %v2236 = vunpack.c.l.b16 %v2090
    %v2237 = vunpack.c.h.b16 %v2090
    %v2238 = vunpack.c.l.b16 %v2091
    %v2239 = vunpack.c.h.b16 %v2091
    %v2240 = vunpack.c.l.b16 %v2092
    %v2241 = vunpack.c.h.b16 %v2092
    %v2242 = vunpack.c.l.b16 %v2093
    %v2243 = vunpack.c.h.b16 %v2093
    %v2244 = vunpack.c.l.b16 %v2094
    %v2245 = vunpack.c.h.b16 %v2094
    %v2246 = vunpack.c.l.b16 %v2095
    %v2247 = vunpack.c.h.b16 %v2095
    %v2248 = vunpack.c.l.b16 %v2096
    %v2249 = vunpack.c.h.b16 %v2096
    %v2250 = vunpack.c.l.b16 %v2097
    %v2251 = vunpack.c.h.b16 %v2097
    %v2252 = vunpack.c.l.b16 %v2098
    %v2253 = vunpack.c.h.b16 %v2098
    %v2254 = vunpack.c.l.b16 %v2099
    %v2255 = vunpack.c.h.b16 %v2099
    %v2256 = vunpack.c.l.b16 %v2100
    %v2257 = vunpack.c.h.b16 %v2100
    %v2258 = vunpack.c.l.b16 %v2101
    %v2259 = vunpack.c.h.b16 %v2101
    %v2260 = vunpack.c.l.b16 %v2102
    %v2261 = vunpack.c.h.b16 %v2102
    %v2262 = vunpack.c.l.b16 %v2103
    %v2263 = vunpack.c.h.b16 %v2103
    %v2264 = vunpack.c.l.b16 %v2104
    %v2265 = vunpack.c.h.b16 %v2104
    %v2266 = vunpack.c.l.b16 %v2105
    %v2267 = vunpack.c.h.b16 %v2105
    %v2268 = vunpack.c.l.b16 %v2106
    %v2269 = vunpack.c.h.b16 %v2106
    %v2270 = vunpack.c.l.b16 %v2107
    %v2271 = vunpack.c.h.b16 %v2107
    %v2272 = vunpack.c.l.b16 %v2108
    %v2273 = vunpack.c.h.b16 %v2108
    %v2274 = vunpack.c.l.b16 %v2109
    %v2275 = vunpack.c.h.b16 %v2109
    %v2276 = vunpack.c.l.b16 %v2110
    %v2277 = vunpack.c.h.b16 %v2110
    %v2278 = vunpack.c.l.b16 %v2111
    %v2279 = vunpack.c.h.b16 %v2111
    %v2280 = vunpack.c.l.b16 %v2112
    %v2281 = vunpack.c.h.b16 %v2112
    %v2282 = vunpack.c.l.b16 %v2113
    %v2283 = vunpack.c.h.b16 %v2113
    %v2284 = vunpack.c.l.b16 %v2114
    %v2285 = vunpack.c.h.b16 %v2114
    %v2286 = vunpack.c.l.b16 %v2115
    %v2287 = vunpack.c.h.b16 %v2115
    %v2288 = vunpack.c.l.b16 %v2116
    %v2289 = vunpack.c.h.b16 %v2116
    %v2290 = vunpack.c.l.b16 %v2117
    %v2291 = vunpack.c.h.b16 %v2117
    %v2292 = vunpack.c.l.b16 %v2118
    %v2293 = vunpack.c.h.b16 %v2118
    %v2294 = vunpack.c.l.b16 %v2119
    %v2295 = vunpack.c.h.b16 %v2119
    %v2296 = vunpack.c.l.b16 %v2120
    %v2297 = vunpack.c.h.b16 %v2120
    %v2298 = vunpack.c.l.b16 %v2121
    %v2299 = vunpack.c.h.b16 %v2121
    %v2300 = vunpack.c.l.b16 %v2122
    %v2301 = vunpack.c.h.b16 %v2122
    %v2302 = vunpack.c.l.b16 %v2123
    %v2303 = vunpack.c.h.b16 %v2123
    %v2304 = vunpack.c.l.b16 %v2124
    %v2305 = vunpack.c.h.b16 %v2124
    %v2306 = vunpack.c.l.b16 %v2125
    %v2307 = vunpack.c.h.b16 %v2125
    %v2308 = vunpack.c.l.b16 %v2126
    %v2309 = vunpack.c.h.b16 %v2126
    %v2310 = vunpack.c.l.b16 %v2127
    %v2311 = vunpack.c.h.b16 %v2127
    %v2312 = vunpack.c.l.b16 %v2128
    %v2313 = vunpack.c.h.b16 %v2128
    %v2314 = vunpack.c.l.b16 %v2129
    %v2315 = vunpack.c.h.b16 %v2129
    %v2316 = vunpack.c.l.b16 %v2130
    %v2317 = vunpack.c.h.b16 %v2130
    %v2318 = vunpack.c.l.b16 %v2131
    %v2319 = vunpack.c.h.b16 %v2131
    %v2320 = vunpack.c.l.b16 %v2132
    %v2321 = vunpack.c.h.b16 %v2132
    %v2322 = vunpack.c.l.b16 %v2133
    %v2323 = vunpack.c.h.b16 %v2133
    %v2324 = vunpack.c.l.b16 %v2134
    %v2325 = vunpack.c.h.b16 %v2134
    %v2326 = vunpack.c.l.b16 %v2135
    %v2327 = vunpack.c.h.b16 %v2135
    %v2328 = vunpack.c.l.b16 %v2136
    %v2329 = vunpack.c.h.b16 %v2136
    %v2330 = vunpack.c.l.b16 %v2137
    %v2331 = vunpack.c.h.b16 %v2137
    %v2332 = vunpack.c.l.b16 %v2138
    %v2333 = vunpack.c.h.b16 %v2138
    %v2334 = vunpack.c.l.b16 %v2139
    %v2335 = vunpack.c.h.b16 %v2139
    %v2336 = vunpack.c.l.b16 %v2140
    %v2337 = vunpack.c.h.b16 %v2140
    %v2338 = vunpack.c.l.b16 %v2141
    %v2339 = vunpack.c.h.b16 %v2141
    %v2340 = vunpack.c.l.b16 %v2142
    %v2341 = vunpack.c.h.b16 %v2142
    %v2342 = vunpack.c.l.b16 %v2143
    %v2343 = vunpack.c.h.b16 %v2143
    %v2344 = vunpack.c.l.b16 %v2144
    %v2345 = vunpack.c.h.b16 %v2144
    %v2346 = vunpack.c.l.b16 %v2145
    %v2347 = vunpack.c.h.b16 %v2145
    %v2348 = vunpack.c.l.b16 %v2146
    %v2349 = vunpack.c.h.b16 %v2146
    %v2350 = vunpack.c.l.b16 %v2147
    %v2351 = vunpack.c.h.b16 %v2147
    %v2352 = vpack.c.b16 %v2226, %v2224
    %v2353 = vpack.c.b16 %v2227, %v2225
    %v2354 = vpack.c.b16 %v2230, %v2228
    %v2355 = vpack.c.b16 %v2231, %v2229
    %v2356 = vpack.c.b16 %v2234, %v2232
    %v2357 = vpack.c.b16 %v2235, %v2233
    %v2358 = vpack.c.b16 %v2238, %v2236
    %v2359 = vpack.c.b16 %v2239, %v2237
    %v2360 = vpack.c.b16 %v2242, %v2240
    %v2361 = vpack.c.b16 %v2243, %v2241
    %v2362 = vpack.c.b16 %v2246, %v2244
    %v2363 = vpack.c.b16 %v2247, %v2245
    %v2364 = vpack.c.b16 %v2250, %v2248
    %v2365 = vpack.c.b16 %v2251, %v2249
    %v2366 = vpack.c.b16 %v2254, %v2252
    %v2367 = vpack.c.b16 %v2255, %v2253
    %v2368 = vpack.c.b16 %v2258, %v2256
    %v2369 = vpack.c.b16 %v2259, %v2257
    %v2370 = vpack.c.b16 %v2262, %v2260
    %v2371 = vpack.c.b16 %v2263, %v2261
    %v2372 = vpack.c.b16 %v2266, %v2264
    %v2373 = vpack.c.b16 %v2267, %v2265
    %v2374 = vpack.c.b16 %v2270, %v2268
    %v2375 = vpack.c.b16 %v2271, %v2269
    %v2376 = vpack.c.b16 %v2274, %v2272
    %v2377 = vpack.c.b16 %v2275, %v2273
    %v2378 = vpack.c.b16 %v2278, %v2276
    %v2379 = vpack.c.b16 %v2279, %v2277
    %v2380 = vpack.c.b16 %v2282, %v2280
    %v2381 = vpack.c.b16 %v2283, %v2281
    %v2382 = vpack.c.b16 %v2286, %v2284
    %v2383 = vpack.c.b16 %v2287, %v2285
    %v2384 = vpack.c.b16 %v2290, %v2288
    %v2385 = vpack.c.b16 %v2291, %v2289
    %v2386 = vpack.c.b16 %v2294, %v2292
    %v2387 = vpack.c.b16 %v2295, %v2293
    %v2388 = vpack.c.b16 %v2298, %v2296
    %v2389 = vpack.c.b16 %v2299, %v2297
    %v2390 = vpack.c.b16 %v2302, %v2300
    %v2391 = vpack.c.b16 %v2303, %v2301
    %v2392 = vpack.c.b16 %v2306, %v2304
    %v2393 = vpack.c.b16 %v2307, %v2305
    %v2394 = vpack.c.b16 %v2310, %v2308
    %v2395 = vpack.c.b16 %v2311, %v2309
    %v2396 = vpack.c.b16 %v2314, %v2312
    %v2397 = vpack.c.b16 %v2315, %v2313
    %v2398 = vpack.c.b16 %v2318, %v2316
    %v2399 = vpack.c.b16 %v2319, %v2317
    %v2400 = vpack.c.b16 %v2322, %v2320
    %v2401 = vpack.c.b16 %v2323, %v2321
    %v2402 = vpack.c.b16 %v2326, %v2324
    %v2403 = vpack.c.b16 %v2327, %v2325
    %v2404 = vpack.c.b16 %v2330, %v2328
    %v2405 = vpack.c.b16 %v2331, %v2329
    %v2406 = vpack.c.b16 %v2334, %v2332
    %v2407 = vpack.c.b16 %v2335, %v2333
    %v2408 = vpack.c.b16 %v2338, %v2336
    %v2409 = vpack.c.b16 %v2339, %v2337
    %v2410 = vpack.c.b16 %v2342, %v2340
    %v2411 = vpack.c.b16 %v2343, %v2341
    %v2412 = vpack.c.b16 %v2346, %v2344
    %v2413 = vpack.c.b16 %v2347, %v2345
    %v2414 = vpack.c.b16 %v2350, %v2348
    %v2415 = vpack.c.b16 %v2351, %v2349
    %2480 = vmatprep.subr.bf16.mxu0 %v2353
    %2481 = vmatpush1.bf16.msra.mxu0 %v2352
    %2482 = vmatprep.subr.bf16.mxu0 %v2355
    %2483 = vmatpush1.bf16.msra.mxu0 %v2354
    %2484 = vmatprep.subr.bf16.mxu0 %v2357
    %2485 = vmatpush1.bf16.msra.mxu0 %v2356
    %2486 = vmatprep.subr.bf16.mxu0 %v2359
    %2487 = vmatpush1.bf16.msra.mxu0 %v2358
    %2488 = vmatprep.subr.bf16.mxu0 %v2361
    %2489 = vmatpush1.bf16.msra.mxu0 %v2360
    %2490 = vmatprep.subr.bf16.mxu0 %v2363
    %2491 = vmatpush1.bf16.msra.mxu0 %v2362
    %2492 = vmatprep.subr.bf16.mxu0 %v2365
    %2493 = vmatpush1.bf16.msra.mxu0 %v2364
    %2494 = vmatprep.subr.bf16.mxu0 %v2367
    %2495 = vmatpush1.bf16.msra.mxu0 %v2366
    %2496 = vmatprep.subr.bf16.mxu0 %v2369
    %2497 = vmatpush1.bf16.msra.mxu0 %v2368
    %2498 = vmatprep.subr.bf16.mxu0 %v2371
    %2499 = vmatpush1.bf16.msra.mxu0 %v2370
    %2500 = vmatprep.subr.bf16.mxu0 %v2373
    %2501 = vmatpush1.bf16.msra.mxu0 %v2372
    %2502 = vmatprep.subr.bf16.mxu0 %v2375
    %2503 = vmatpush1.bf16.msra.mxu0 %v2374
    %2504 = vmatprep.subr.bf16.mxu0 %v2377
    %2505 = vmatpush1.bf16.msra.mxu0 %v2376
    %2506 = vmatprep.subr.bf16.mxu0 %v2379
    %2507 = vmatpush1.bf16.msra.mxu0 %v2378
    %2508 = vmatprep.subr.bf16.mxu0 %v2381
    %2509 = vmatpush1.bf16.msra.mxu0 %v2380
    %2510 = vmatprep.subr.bf16.mxu0 %v2383
    %2511 = vmatpush1.bf16.msra.mxu0 %v2382
    %2512 = vmatprep.mubr.bf16.mxu0 %v2081
    %2513 = vmatmul.mubr.bf16.gmra.mrb[0].mxu0 %v2080
    %v2514 = vpop.f32.mrb[0].mxu0
    %v2515 = vadd.f32 %v2153, %v2514
    %v2516 = vpop.f32.mrb[0].mxu0
    %v2517 = vadd.f32 %v2157, %v2516
    %v2518 = vpop.f32.mrb[0].mxu0
    %v2519 = vpop.f32.mrb[0].mxu0
    %2520 = vdwg.mxu0
    %2521 = vmatprep.subr.bf16.mxu0 %v2385
    %2522 = vmatpush1.bf16.msra.mxu0 %v2384
    %2523 = vmatprep.subr.bf16.mxu0 %v2387
    %2524 = vmatpush1.bf16.msra.mxu0 %v2386
    %2525 = vmatprep.subr.bf16.mxu0 %v2389
    %2526 = vmatpush1.bf16.msra.mxu0 %v2388
    %2527 = vmatprep.subr.bf16.mxu0 %v2391
    %2528 = vmatpush1.bf16.msra.mxu0 %v2390
    %2529 = vmatprep.subr.bf16.mxu0 %v2393
    %2530 = vmatpush1.bf16.msra.mxu0 %v2392
    %2531 = vmatprep.subr.bf16.mxu0 %v2395
    %2532 = vmatpush1.bf16.msra.mxu0 %v2394
    %2533 = vmatprep.subr.bf16.mxu0 %v2397
    %2534 = vmatpush1.bf16.msra.mxu0 %v2396
    %2535 = vmatprep.subr.bf16.mxu0 %v2399
    %2536 = vmatpush1.bf16.msra.mxu0 %v2398
    %2537 = vmatprep.subr.bf16.mxu0 %v2401
    %2538 = vmatpush1.bf16.msra.mxu0 %v2400
    %2539 = vmatprep.subr.bf16.mxu0 %v2403
    %2540 = vmatpush1.bf16.msra.mxu0 %v2402
    %2541 = vmatprep.subr.bf16.mxu0 %v2405
    %2542 = vmatpush1.bf16.msra.mxu0 %v2404
    %2543 = vmatprep.subr.bf16.mxu0 %v2407
    %2544 = vmatpush1.bf16.msra.mxu0 %v2406
    %2545 = vmatprep.subr.bf16.mxu0 %v2409
    %2546 = vmatpush1.bf16.msra.mxu0 %v2408
    %2547 = vmatprep.subr.bf16.mxu0 %v2411
    %2548 = vmatpush1.bf16.msra.mxu0 %v2410
    %2549 = vmatprep.subr.bf16.mxu0 %v2413
    %2550 = vmatpush1.bf16.msra.mxu0 %v2412
    %2551 = vmatprep.subr.bf16.mxu0 %v2415
    %2552 = vmatpush1.bf16.msra.mxu0 %v2414
    %2553 = vmatprep.mubr.bf16.mxu0 %v2083
    %2554 = vmatmul.mubr.bf16.gmra.mrb[0].mxu0 %v2082
    %v2555 = vpop.f32.mrb[0].mxu0
    %v2556 = vadd.f32 %v2515, %v2555
    %v2557 = vpop.f32.mrb[0].mxu0
    %v2558 = vadd.f32 %v2517, %v2557
    %v2559 = vpop.f32.mrb[0].mxu0
    %v2560 = vpop.f32.mrb[0].mxu0
    %2561 = vdwg.mxu0
    %v2562 = vmax.f32 %v2556, 0.0
    %v2563 = vmax.f32 %v2558, 0.0
    %v2564 = vpack.c.bf16 %v2562, %v2562
    %v2565 = vpack.c.bf16 %v2563, %v2563
    %v2566 = vld [vmem:[#allocation10] sm:$0xff]
    %v2567 = vld [vmem:[#allocation10 + $0x8] sm:$0xff]
    %v2568 = vld [vmem:[#allocation10 + $0x10] sm:$0xff]
    %v2569 = vld [vmem:[#allocation10 + $0x18] sm:$0xff]
    %v2570 = vld [vmem:[#allocation10 + $0x20] sm:$0xff]
    %v2571 = vld [vmem:[#allocation10 + $0x28] sm:$0xff]
    %v2572 = vld [vmem:[#allocation10 + $0x30] sm:$0xff]
    %v2573 = vld [vmem:[#allocation10 + $0x38] sm:$0xff]
    %v2574 = vld [vmem:[#allocation10 + $0x40] sm:$0xff]
    %v2575 = vld [vmem:[#allocation10 + $0x48] sm:$0xff]
    %v2576 = vld [vmem:[#allocation10 + $0x50] sm:$0xff]
    %v2577 = vld [vmem:[#allocation10 + $0x58] sm:$0xff]
    %v2578 = vld [vmem:[#allocation10 + $0x60] sm:$0xff]
    %v2579 = vld [vmem:[#allocation10 + $0x68] sm:$0xff]
    %v2580 = vld [vmem:[#allocation10 + $0x70] sm:$0xff]
    %v2581 = vld [vmem:[#allocation10 + $0x78] sm:$0xff]
    %v2582 = vld [vmem:[#allocation10 + $0x80] sm:$0xff]
    %v2583 = vld [vmem:[#allocation10 + $0x88] sm:$0xff]
    %v2584 = vld [vmem:[#allocation10 + $0x90] sm:$0xff]
    %v2585 = vld [vmem:[#allocation10 + $0x98] sm:$0xff]
    %v2586 = vld [vmem:[#allocation10 + $0xa0] sm:$0xff]
    %v2587 = vld [vmem:[#allocation10 + $0xa8] sm:$0xff]
    %v2588 = vld [vmem:[#allocation10 + $0xb0] sm:$0xff]
    %v2589 = vld [vmem:[#allocation10 + $0xb8] sm:$0xff]
    %v2590 = vld [vmem:[#allocation10 + $0xc0] sm:$0xff]
    %v2591 = vld [vmem:[#allocation10 + $0xc8] sm:$0xff]
    %v2592 = vld [vmem:[#allocation10 + $0xd0] sm:$0xff]
    %v2593 = vld [vmem:[#allocation10 + $0xd8] sm:$0xff]
    %v2594 = vld [vmem:[#allocation10 + $0xe0] sm:$0xff]
    %v2595 = vld [vmem:[#allocation10 + $0xe8] sm:$0xff]
    %v2596 = vld [vmem:[#allocation10 + $0xf0] sm:$0xff]
    %v2597 = vld [vmem:[#allocation10 + $0xf8] sm:$0xff]
    %v2598 = vld [vmem:[%s7] sm:$0x3]
    %v2600 = vlaneseq
    %v2601 = vshrl.u32 %v2600, 7
    %v2602 = vsub.s32 0, %v2601
    %v2603 = vrot.slane %v2598, %v2602
    %v2604 = vlaneseq
    %v2605 = vshrl.u32 %v2604, 7
    %v2606 = vsub.s32 1, %v2605
    %v2607 = vrot.slane %v2598, %v2606
    %v2642 = vunpack.c.l.b16 %v2566
    %v2643 = vunpack.c.h.b16 %v2566
    %v2644 = vunpack.c.l.b16 %v2567
    %v2645 = vunpack.c.h.b16 %v2567
    %v2646 = vunpack.c.l.b16 %v2568
    %v2647 = vunpack.c.h.b16 %v2568
    %v2648 = vunpack.c.l.b16 %v2569
    %v2649 = vunpack.c.h.b16 %v2569
    %v2650 = vunpack.c.l.b16 %v2570
    %v2651 = vunpack.c.h.b16 %v2570
    %v2652 = vunpack.c.l.b16 %v2571
    %v2653 = vunpack.c.h.b16 %v2571
    %v2654 = vunpack.c.l.b16 %v2572
    %v2655 = vunpack.c.h.b16 %v2572
    %v2656 = vunpack.c.l.b16 %v2573
    %v2657 = vunpack.c.h.b16 %v2573
    %v2658 = vunpack.c.l.b16 %v2574
    %v2659 = vunpack.c.h.b16 %v2574
    %v2660 = vunpack.c.l.b16 %v2575
    %v2661 = vunpack.c.h.b16 %v2575
    %v2662 = vunpack.c.l.b16 %v2576
    %v2663 = vunpack.c.h.b16 %v2576
    %v2664 = vunpack.c.l.b16 %v2577
    %v2665 = vunpack.c.h.b16 %v2577
    %v2666 = vunpack.c.l.b16 %v2578
    %v2667 = vunpack.c.h.b16 %v2578
    %v2668 = vunpack.c.l.b16 %v2579
    %v2669 = vunpack.c.h.b16 %v2579
    %v2670 = vunpack.c.l.b16 %v2580
    %v2671 = vunpack.c.h.b16 %v2580
    %v2672 = vunpack.c.l.b16 %v2581
    %v2673 = vunpack.c.h.b16 %v2581
    %v2674 = vunpack.c.l.b16 %v2582
    %v2675 = vunpack.c.h.b16 %v2582
    %v2676 = vunpack.c.l.b16 %v2583
    %v2677 = vunpack.c.h.b16 %v2583
    %v2678 = vunpack.c.l.b16 %v2584
    %v2679 = vunpack.c.h.b16 %v2584
    %v2680 = vunpack.c.l.b16 %v2585
    %v2681 = vunpack.c.h.b16 %v2585
    %v2682 = vunpack.c.l.b16 %v2586
    %v2683 = vunpack.c.h.b16 %v2586
    %v2684 = vunpack.c.l.b16 %v2587
    %v2685 = vunpack.c.h.b16 %v2587
    %v2686 = vunpack.c.l.b16 %v2588
    %v2687 = vunpack.c.h.b16 %v2588
    %v2688 = vunpack.c.l.b16 %v2589
    %v2689 = vunpack.c.h.b16 %v2589
    %v2690 = vunpack.c.l.b16 %v2590
    %v2691 = vunpack.c.h.b16 %v2590
    %v2692 = vunpack.c.l.b16 %v2591
    %v2693 = vunpack.c.h.b16 %v2591
    %v2694 = vunpack.c.l.b16 %v2592
    %v2695 = vunpack.c.h.b16 %v2592
    %v2696 = vunpack.c.l.b16 %v2593
    %v2697 = vunpack.c.h.b16 %v2593
    %v2698 = vunpack.c.l.b16 %v2594
    %v2699 = vunpack.c.h.b16 %v2594
    %v2700 = vunpack.c.l.b16 %v2595
    %v2701 = vunpack.c.h.b16 %v2595
    %v2702 = vunpack.c.l.b16 %v2596
    %v2703 = vunpack.c.h.b16 %v2596
    %v2704 = vunpack.c.l.b16 %v2597
    %v2705 = vunpack.c.h.b16 %v2597
    %v2706 = vpack.c.b16 %v2644, %v2642
    %v2707 = vpack.c.b16 %v2645, %v2643
    %v2708 = vpack.c.b16 %v2648, %v2646
    %v2709 = vpack.c.b16 %v2649, %v2647
    %v2710 = vpack.c.b16 %v2652, %v2650
    %v2711 = vpack.c.b16 %v2653, %v2651
    %v2712 = vpack.c.b16 %v2656, %v2654
    %v2713 = vpack.c.b16 %v2657, %v2655
    %v2714 = vpack.c.b16 %v2660, %v2658
    %v2715 = vpack.c.b16 %v2661, %v2659
    %v2716 = vpack.c.b16 %v2664, %v2662
    %v2717 = vpack.c.b16 %v2665, %v2663
    %v2718 = vpack.c.b16 %v2668, %v2666
    %v2719 = vpack.c.b16 %v2669, %v2667
    %v2720 = vpack.c.b16 %v2672, %v2670
    %v2721 = vpack.c.b16 %v2673, %v2671
    %v2722 = vpack.c.b16 %v2676, %v2674
    %v2723 = vpack.c.b16 %v2677, %v2675
    %v2724 = vpack.c.b16 %v2680, %v2678
    %v2725 = vpack.c.b16 %v2681, %v2679
    %v2726 = vpack.c.b16 %v2684, %v2682
    %v2727 = vpack.c.b16 %v2685, %v2683
    %v2728 = vpack.c.b16 %v2688, %v2686
    %v2729 = vpack.c.b16 %v2689, %v2687
    %v2730 = vpack.c.b16 %v2692, %v2690
    %v2731 = vpack.c.b16 %v2693, %v2691
    %v2732 = vpack.c.b16 %v2696, %v2694
    %v2733 = vpack.c.b16 %v2697, %v2695
    %v2734 = vpack.c.b16 %v2700, %v2698
    %v2735 = vpack.c.b16 %v2701, %v2699
    %v2736 = vpack.c.b16 %v2704, %v2702
    %v2737 = vpack.c.b16 %v2705, %v2703
    %2770 = vmatprep.subr.bf16.mxu0 %v2707
    %2771 = vmatpush1.bf16.msra.mxu0 %v2706
    %2772 = vmatprep.subr.bf16.mxu0 %v2709
    %2773 = vmatpush1.bf16.msra.mxu0 %v2708
    %2774 = vmatprep.subr.bf16.mxu0 %v2711
    %2775 = vmatpush1.bf16.msra.mxu0 %v2710
    %2776 = vmatprep.subr.bf16.mxu0 %v2713
    %2777 = vmatpush1.bf16.msra.mxu0 %v2712
    %2778 = vmatprep.subr.bf16.mxu0 %v2715
    %2779 = vmatpush1.bf16.msra.mxu0 %v2714
    %2780 = vmatprep.subr.bf16.mxu0 %v2717
    %2781 = vmatpush1.bf16.msra.mxu0 %v2716
    %2782 = vmatprep.subr.bf16.mxu0 %v2719
    %2783 = vmatpush1.bf16.msra.mxu0 %v2718
    %2784 = vmatprep.subr.bf16.mxu0 %v2721
    %2785 = vmatpush1.bf16.msra.mxu0 %v2720
    %2786 = vmatprep.subr.bf16.mxu0 %v2723
    %2787 = vmatpush1.bf16.msra.mxu0 %v2722
    %2788 = vmatprep.subr.bf16.mxu0 %v2725
    %2789 = vmatpush1.bf16.msra.mxu0 %v2724
    %2790 = vmatprep.subr.bf16.mxu0 %v2727
    %2791 = vmatpush1.bf16.msra.mxu0 %v2726
    %2792 = vmatprep.subr.bf16.mxu0 %v2729
    %2793 = vmatpush1.bf16.msra.mxu0 %v2728
    %2794 = vmatprep.subr.bf16.mxu0 %v2731
    %2795 = vmatpush1.bf16.msra.mxu0 %v2730
    %2796 = vmatprep.subr.bf16.mxu0 %v2733
    %2797 = vmatpush1.bf16.msra.mxu0 %v2732
    %2798 = vmatprep.subr.bf16.mxu0 %v2735
    %2799 = vmatpush1.bf16.msra.mxu0 %v2734
    %2800 = vmatprep.subr.bf16.mxu0 %v2737
    %2801 = vmatpush1.bf16.msra.mxu0 %v2736
    %2802 = vmatprep.mubr.bf16.mxu0 %v2565
    %2803 = vmatmul.mubr.bf16.gmra.mrb[0].mxu0 %v2564
    %v2804 = vpop.f32.mrb[0].mxu0
    %v2805 = vadd.f32 %v2603, %v2804
    %v2806 = vpop.f32.mrb[0].mxu0
    %v2807 = vadd.f32 %v2607, %v2806
    %v2808 = vpop.f32.mrb[0].mxu0
    %v2809 = vpop.f32.mrb[0].mxu0
    %2810 = vdwg.mxu0
    %v2811 = vmul.f32 %v2807, 0.5
    %v2812 = vmul.f32 %v2811, 1.442695
    %v2813 = vpow.pop %v2812
    %v2814 = vld [vmem:[#allocation5] sm:$0xff]
    %v2815 = vmul.f32 %v2814, %v2813
    %v2816 = vadd.f32 %v2805, %v2815
    %v2817 = vpack.c.bf16 %v2816, %v2816
    %v2818 = vld [vmem:[#allocation11] sm:$0xff]
    %v2819 = vld [vmem:[#allocation11 + $0x8] sm:$0xff]
    %v2820 = vld [vmem:[#allocation11 + $0x10] sm:$0xff]
    %v2821 = vld [vmem:[#allocation11 + $0x18] sm:$0xff]
    %v2822 = vld [vmem:[#allocation11 + $0x20] sm:$0xff]
    %v2823 = vld [vmem:[#allocation11 + $0x28] sm:$0xff]
    %v2824 = vld [vmem:[#allocation11 + $0x30] sm:$0xff]
    %v2825 = vld [vmem:[#allocation11 + $0x38] sm:$0xff]
    %v2826 = vld [vmem:[#allocation11 + $0x40] sm:$0xff]
    %v2827 = vld [vmem:[#allocation11 + $0x48] sm:$0xff]
    %v2828 = vld [vmem:[#allocation11 + $0x50] sm:$0xff]
    %v2829 = vld [vmem:[#allocation11 + $0x58] sm:$0xff]
    %v2830 = vld [vmem:[#allocation11 + $0x60] sm:$0xff]
    %v2831 = vld [vmem:[#allocation11 + $0x68] sm:$0xff]
    %v2832 = vld [vmem:[#allocation11 + $0x70] sm:$0xff]
    %v2833 = vld [vmem:[#allocation11 + $0x78] sm:$0xff]
    %v2834 = vld [vmem:[%s9] sm:$0x3]
    %v2836 = vlaneseq
    %v2837 = vshrl.u32 %v2836, 7
    %v2838 = vsub.s32 0, %v2837
    %v2839 = vrot.slane %v2834, %v2838
    %v2840 = vlaneseq
    %v2841 = vshrl.u32 %v2840, 7
    %v2842 = vsub.s32 1, %v2841
    %v2843 = vrot.slane %v2834, %v2842
    %v2862 = vunpack.c.l.b16 %v2818
    %v2863 = vunpack.c.h.b16 %v2818
    %v2864 = vunpack.c.l.b16 %v2819
    %v2865 = vunpack.c.h.b16 %v2819
    %v2866 = vunpack.c.l.b16 %v2820
    %v2867 = vunpack.c.h.b16 %v2820
    %v2868 = vunpack.c.l.b16 %v2821
    %v2869 = vunpack.c.h.b16 %v2821
    %v2870 = vunpack.c.l.b16 %v2822
    %v2871 = vunpack.c.h.b16 %v2822
    %v2872 = vunpack.c.l.b16 %v2823
    %v2873 = vunpack.c.h.b16 %v2823
    %v2874 = vunpack.c.l.b16 %v2824
    %v2875 = vunpack.c.h.b16 %v2824
    %v2876 = vunpack.c.l.b16 %v2825
    %v2877 = vunpack.c.h.b16 %v2825
    %v2878 = vunpack.c.l.b16 %v2826
    %v2879 = vunpack.c.h.b16 %v2826
    %v2880 = vunpack.c.l.b16 %v2827
    %v2881 = vunpack.c.h.b16 %v2827
    %v2882 = vunpack.c.l.b16 %v2828
    %v2883 = vunpack.c.h.b16 %v2828
    %v2884 = vunpack.c.l.b16 %v2829
    %v2885 = vunpack.c.h.b16 %v2829
    %v2886 = vunpack.c.l.b16 %v2830
    %v2887 = vunpack.c.h.b16 %v2830
    %v2888 = vunpack.c.l.b16 %v2831
    %v2889 = vunpack.c.h.b16 %v2831
    %v2890 = vunpack.c.l.b16 %v2832
    %v2891 = vunpack.c.h.b16 %v2832
    %v2892 = vunpack.c.l.b16 %v2833
    %v2893 = vunpack.c.h.b16 %v2833
    %v2894 = vpack.c.b16 %v2864, %v2862
    %v2895 = vpack.c.b16 %v2865, %v2863
    %v2896 = vpack.c.b16 %v2868, %v2866
    %v2897 = vpack.c.b16 %v2869, %v2867
    %v2898 = vpack.c.b16 %v2872, %v2870
    %v2899 = vpack.c.b16 %v2873, %v2871
    %v2900 = vpack.c.b16 %v2876, %v2874
    %v2901 = vpack.c.b16 %v2877, %v2875
    %v2902 = vpack.c.b16 %v2880, %v2878
    %v2903 = vpack.c.b16 %v2881, %v2879
    %v2904 = vpack.c.b16 %v2884, %v2882
    %v2905 = vpack.c.b16 %v2885, %v2883
    %v2906 = vpack.c.b16 %v2888, %v2886
    %v2907 = vpack.c.b16 %v2889, %v2887
    %v2908 = vpack.c.b16 %v2892, %v2890
    %v2909 = vpack.c.b16 %v2893, %v2891
    %2926 = vmatprep.subr.bf16.mxu0 %v2895
    %2927 = vmatpush1.bf16.msra.mxu0 %v2894
    %2928 = vmatprep.subr.bf16.mxu0 %v2897
    %2929 = vmatpush1.bf16.msra.mxu0 %v2896
    %2930 = vmatprep.subr.bf16.mxu0 %v2899
    %2931 = vmatpush1.bf16.msra.mxu0 %v2898
    %2932 = vmatprep.subr.bf16.mxu0 %v2901
    %2933 = vmatpush1.bf16.msra.mxu0 %v2900
    %2934 = vmatprep.subr.bf16.mxu0 %v2903
    %2935 = vmatpush1.bf16.msra.mxu0 %v2902
    %2936 = vmatprep.subr.bf16.mxu0 %v2905
    %2937 = vmatpush1.bf16.msra.mxu0 %v2904
    %2938 = vmatprep.subr.bf16.mxu0 %v2907
    %2939 = vmatpush1.bf16.msra.mxu0 %v2906
    %2940 = vmatprep.subr.bf16.mxu0 %v2909
    %2941 = vmatpush1.bf16.msra.mxu0 %v2908
    %2942 = vmatprep.subr.bf16.mxu0 0
    %2943 = vmatpush1.bf16.msra.mxu0 0
    %2944 = vmatprep.subr.bf16.mxu0 0
    %2945 = vmatpush1.bf16.msra.mxu0 0
    %2946 = vmatprep.subr.bf16.mxu0 0
    %2947 = vmatpush1.bf16.msra.mxu0 0
    %2948 = vmatprep.subr.bf16.mxu0 0
    %2949 = vmatpush1.bf16.msra.mxu0 0
    %2950 = vmatprep.subr.bf16.mxu0 0
    %2951 = vmatpush1.bf16.msra.mxu0 0
    %2952 = vmatprep.subr.bf16.mxu0 0
    %2953 = vmatpush1.bf16.msra.mxu0 0
    %2954 = vmatprep.subr.bf16.mxu0 0
    %2955 = vmatpush1.bf16.msra.mxu0 0
    %2956 = vmatprep.subr.bf16.mxu0 0
    %2957 = vmatpush1.bf16.msra.mxu0 0
    %2958 = vmatprep.mubr.bf16.mxu0 0
    %2959 = vmatmul.mubr.bf16.gmra.mrb[0].mxu0 %v2817
    %v2960 = vpop.f32.mrb[0].mxu0
    %v2961 = vadd.f32 %v2839, %v2960
    %v2962 = vpop.f32.mrb[0].mxu0
    %v2963 = vadd.f32 %v2843, %v2962
    %v2964 = vpop.f32.mrb[0].mxu0
    %v2965 = vpop.f32.mrb[0].mxu0
    %2966 = vdwg.mxu0
    %v2967 = vmax.f32 %v2961, 0.0
    %v2968 = vmax.f32 %v2963, 0.0
    %v2969 = vpack.c.bf16 %v2967, %v2967
    %v2970 = vpack.c.bf16 %v2968, %v2968
    %v2971 = vld [vmem:[#allocation13] sm:$0xff]
    %v2972 = vld [vmem:[#allocation13 + $0x8] sm:$0xff]
    %v2973 = vld [vmem:[#allocation13 + $0x10] sm:$0xff]
    %v2974 = vld [vmem:[#allocation13 + $0x18] sm:$0xff]
    %v2975 = vld [vmem:[#allocation13 + $0x20] sm:$0xff]
    %v2976 = vld [vmem:[#allocation13 + $0x28] sm:$0xff]
    %v2977 = vld [vmem:[#allocation13 + $0x30] sm:$0xff]
    %v2978 = vld [vmem:[#allocation13 + $0x38] sm:$0xff]
    %v2979 = vld [vmem:[#allocation13 + $0x40] sm:$0xff]
    %v2980 = vld [vmem:[#allocation13 + $0x48] sm:$0xff]
    %v2981 = vld [vmem:[#allocation13 + $0x50] sm:$0xff]
    %v2982 = vld [vmem:[#allocation13 + $0x58] sm:$0xff]
    %v2983 = vld [vmem:[#allocation13 + $0x60] sm:$0xff]
    %v2984 = vld [vmem:[#allocation13 + $0x68] sm:$0xff]
    %v2985 = vld [vmem:[#allocation13 + $0x70] sm:$0xff]
    %v2986 = vld [vmem:[#allocation13 + $0x78] sm:$0xff]
    %v2987 = vld [vmem:[#allocation13 + $0x80] sm:$0xff]
    %v2988 = vld [vmem:[#allocation13 + $0x88] sm:$0xff]
    %v2989 = vld [vmem:[#allocation13 + $0x90] sm:$0xff]
    %v2990 = vld [vmem:[#allocation13 + $0x98] sm:$0xff]
    %v2991 = vld [vmem:[#allocation13 + $0xa0] sm:$0xff]
    %v2992 = vld [vmem:[#allocation13 + $0xa8] sm:$0xff]
    %v2993 = vld [vmem:[#allocation13 + $0xb0] sm:$0xff]
    %v2994 = vld [vmem:[#allocation13 + $0xb8] sm:$0xff]
    %v2995 = vld [vmem:[#allocation13 + $0xc0] sm:$0xff]
    %v2996 = vld [vmem:[#allocation13 + $0xc8] sm:$0xff]
    %v2997 = vld [vmem:[#allocation13 + $0xd0] sm:$0xff]
    %v2998 = vld [vmem:[#allocation13 + $0xd8] sm:$0xff]
    %v2999 = vld [vmem:[#allocation13 + $0xe0] sm:$0xff]
    %v3000 = vld [vmem:[#allocation13 + $0xe8] sm:$0xff]
    %v3001 = vld [vmem:[#allocation13 + $0xf0] sm:$0xff]
    %v3002 = vld [vmem:[#allocation13 + $0xf8] sm:$0xff]
    %v3003 = vld [vmem:[#allocation13 + $0x100] sm:$0xff]
    %v3004 = vld [vmem:[#allocation13 + $0x108] sm:$0xff]
    %v3005 = vld [vmem:[#allocation13 + $0x110] sm:$0xff]
    %v3006 = vld [vmem:[#allocation13 + $0x118] sm:$0xff]
    %v3007 = vld [vmem:[#allocation13 + $0x120] sm:$0xff]
    %v3008 = vld [vmem:[#allocation13 + $0x128] sm:$0xff]
    %v3009 = vld [vmem:[#allocation13 + $0x130] sm:$0xff]
    %v3010 = vld [vmem:[#allocation13 + $0x138] sm:$0xff]
    %v3011 = vld [vmem:[#allocation13 + $0x140] sm:$0xff]
    %v3012 = vld [vmem:[#allocation13 + $0x148] sm:$0xff]
    %v3013 = vld [vmem:[#allocation13 + $0x150] sm:$0xff]
    %v3014 = vld [vmem:[#allocation13 + $0x158] sm:$0xff]
    %v3015 = vld [vmem:[#allocation13 + $0x160] sm:$0xff]
    %v3016 = vld [vmem:[#allocation13 + $0x168] sm:$0xff]
    %v3017 = vld [vmem:[#allocation13 + $0x170] sm:$0xff]
    %v3018 = vld [vmem:[#allocation13 + $0x178] sm:$0xff]
    %v3019 = vld [vmem:[#allocation13 + $0x180] sm:$0xff]
    %v3020 = vld [vmem:[#allocation13 + $0x188] sm:$0xff]
    %v3021 = vld [vmem:[#allocation13 + $0x190] sm:$0xff]
    %v3022 = vld [vmem:[#allocation13 + $0x198] sm:$0xff]
    %v3023 = vld [vmem:[#allocation13 + $0x1a0] sm:$0xff]
    %v3024 = vld [vmem:[#allocation13 + $0x1a8] sm:$0xff]
    %v3025 = vld [vmem:[#allocation13 + $0x1b0] sm:$0xff]
    %v3026 = vld [vmem:[#allocation13 + $0x1b8] sm:$0xff]
    %v3027 = vld [vmem:[#allocation13 + $0x1c0] sm:$0xff]
    %v3028 = vld [vmem:[#allocation13 + $0x1c8] sm:$0xff]
    %v3029 = vld [vmem:[#allocation13 + $0x1d0] sm:$0xff]
    %v3030 = vld [vmem:[#allocation13 + $0x1d8] sm:$0xff]
    %v3031 = vld [vmem:[#allocation13 + $0x1e0] sm:$0xff]
    %v3032 = vld [vmem:[#allocation13 + $0x1e8] sm:$0xff]
    %v3033 = vld [vmem:[#allocation13 + $0x1f0] sm:$0xff]
    %v3034 = vld [vmem:[#allocation13 + $0x1f8] sm:$0xff]
    %v3035 = vld [vmem:[%s11] sm:$0xf]
    %v3037 = vlaneseq
    %v3038 = vshrl.u32 %v3037, 7
    %v3039 = vsub.s32 0, %v3038
    %v3040 = vrot.slane %v3035, %v3039
    %v3041 = vlaneseq
    %v3042 = vshrl.u32 %v3041, 7
    %v3043 = vsub.s32 1, %v3042
    %v3044 = vrot.slane %v3035, %v3043
    %v3045 = vlaneseq
    %v3046 = vshrl.u32 %v3045, 7
    %v3047 = vsub.s32 2, %v3046
    %v3048 = vrot.slane %v3035, %v3047
    %v3049 = vlaneseq
    %v3050 = vshrl.u32 %v3049, 7
    %v3051 = vsub.s32 3, %v3050
    %v3052 = vrot.slane %v3035, %v3051
    %v3121 = vunpack.c.l.b16 %v2971
    %v3122 = vunpack.c.h.b16 %v2971
    %v3123 = vunpack.c.l.b16 %v2972
    %v3124 = vunpack.c.h.b16 %v2972
    %v3125 = vunpack.c.l.b16 %v2973
    %v3126 = vunpack.c.h.b16 %v2973
    %v3127 = vunpack.c.l.b16 %v2974
    %v3128 = vunpack.c.h.b16 %v2974
    %v3129 = vunpack.c.l.b16 %v2975
    %v3130 = vunpack.c.h.b16 %v2975
    %v3131 = vunpack.c.l.b16 %v2976
    %v3132 = vunpack.c.h.b16 %v2976
    %v3133 = vunpack.c.l.b16 %v2977
    %v3134 = vunpack.c.h.b16 %v2977
    %v3135 = vunpack.c.l.b16 %v2978
    %v3136 = vunpack.c.h.b16 %v2978
    %v3137 = vunpack.c.l.b16 %v2979
    %v3138 = vunpack.c.h.b16 %v2979
    %v3139 = vunpack.c.l.b16 %v2980
    %v3140 = vunpack.c.h.b16 %v2980
    %v3141 = vunpack.c.l.b16 %v2981
    %v3142 = vunpack.c.h.b16 %v2981
    %v3143 = vunpack.c.l.b16 %v2982
    %v3144 = vunpack.c.h.b16 %v2982
    %v3145 = vunpack.c.l.b16 %v2983
    %v3146 = vunpack.c.h.b16 %v2983
    %v3147 = vunpack.c.l.b16 %v2984
    %v3148 = vunpack.c.h.b16 %v2984
    %v3149 = vunpack.c.l.b16 %v2985
    %v3150 = vunpack.c.h.b16 %v2985
    %v3151 = vunpack.c.l.b16 %v2986
    %v3152 = vunpack.c.h.b16 %v2986
    %v3153 = vunpack.c.l.b16 %v2987
    %v3154 = vunpack.c.h.b16 %v2987
    %v3155 = vunpack.c.l.b16 %v2988
    %v3156 = vunpack.c.h.b16 %v2988
    %v3157 = vunpack.c.l.b16 %v2989
    %v3158 = vunpack.c.h.b16 %v2989
    %v3159 = vunpack.c.l.b16 %v2990
    %v3160 = vunpack.c.h.b16 %v2990
    %v3161 = vunpack.c.l.b16 %v2991
    %v3162 = vunpack.c.h.b16 %v2991
    %v3163 = vunpack.c.l.b16 %v2992
    %v3164 = vunpack.c.h.b16 %v2992
    %v3165 = vunpack.c.l.b16 %v2993
    %v3166 = vunpack.c.h.b16 %v2993
    %v3167 = vunpack.c.l.b16 %v2994
    %v3168 = vunpack.c.h.b16 %v2994
    %v3169 = vunpack.c.l.b16 %v2995
    %v3170 = vunpack.c.h.b16 %v2995
    %v3171 = vunpack.c.l.b16 %v2996
    %v3172 = vunpack.c.h.b16 %v2996
    %v3173 = vunpack.c.l.b16 %v2997
    %v3174 = vunpack.c.h.b16 %v2997
    %v3175 = vunpack.c.l.b16 %v2998
    %v3176 = vunpack.c.h.b16 %v2998
    %v3177 = vunpack.c.l.b16 %v2999
    %v3178 = vunpack.c.h.b16 %v2999
    %v3179 = vunpack.c.l.b16 %v3000
    %v3180 = vunpack.c.h.b16 %v3000
    %v3181 = vunpack.c.l.b16 %v3001
    %v3182 = vunpack.c.h.b16 %v3001
    %v3183 = vunpack.c.l.b16 %v3002
    %v3184 = vunpack.c.h.b16 %v3002
    %v3185 = vunpack.c.l.b16 %v3003
    %v3186 = vunpack.c.h.b16 %v3003
    %v3187 = vunpack.c.l.b16 %v3004
    %v3188 = vunpack.c.h.b16 %v3004
    %v3189 = vunpack.c.l.b16 %v3005
    %v3190 = vunpack.c.h.b16 %v3005
    %v3191 = vunpack.c.l.b16 %v3006
    %v3192 = vunpack.c.h.b16 %v3006
    %v3193 = vunpack.c.l.b16 %v3007
    %v3194 = vunpack.c.h.b16 %v3007
    %v3195 = vunpack.c.l.b16 %v3008
    %v3196 = vunpack.c.h.b16 %v3008
    %v3197 = vunpack.c.l.b16 %v3009
    %v3198 = vunpack.c.h.b16 %v3009
    %v3199 = vunpack.c.l.b16 %v3010
    %v3200 = vunpack.c.h.b16 %v3010
    %v3201 = vunpack.c.l.b16 %v3011
    %v3202 = vunpack.c.h.b16 %v3011
    %v3203 = vunpack.c.l.b16 %v3012
    %v3204 = vunpack.c.h.b16 %v3012
    %v3205 = vunpack.c.l.b16 %v3013
    %v3206 = vunpack.c.h.b16 %v3013
    %v3207 = vunpack.c.l.b16 %v3014
    %v3208 = vunpack.c.h.b16 %v3014
    %v3209 = vunpack.c.l.b16 %v3015
    %v3210 = vunpack.c.h.b16 %v3015
    %v3211 = vunpack.c.l.b16 %v3016
    %v3212 = vunpack.c.h.b16 %v3016
    %v3213 = vunpack.c.l.b16 %v3017
    %v3214 = vunpack.c.h.b16 %v3017
    %v3215 = vunpack.c.l.b16 %v3018
    %v3216 = vunpack.c.h.b16 %v3018
    %v3217 = vunpack.c.l.b16 %v3019
    %v3218 = vunpack.c.h.b16 %v3019
    %v3219 = vunpack.c.l.b16 %v3020
    %v3220 = vunpack.c.h.b16 %v3020
    %v3221 = vunpack.c.l.b16 %v3021
    %v3222 = vunpack.c.h.b16 %v3021
    %v3223 = vunpack.c.l.b16 %v3022
    %v3224 = vunpack.c.h.b16 %v3022
    %v3225 = vunpack.c.l.b16 %v3023
    %v3226 = vunpack.c.h.b16 %v3023
    %v3227 = vunpack.c.l.b16 %v3024
    %v3228 = vunpack.c.h.b16 %v3024
    %v3229 = vunpack.c.l.b16 %v3025
    %v3230 = vunpack.c.h.b16 %v3025
    %v3231 = vunpack.c.l.b16 %v3026
    %v3232 = vunpack.c.h.b16 %v3026
    %v3233 = vunpack.c.l.b16 %v3027
    %v3234 = vunpack.c.h.b16 %v3027
    %v3235 = vunpack.c.l.b16 %v3028
    %v3236 = vunpack.c.h.b16 %v3028
    %v3237 = vunpack.c.l.b16 %v3029
    %v3238 = vunpack.c.h.b16 %v3029
    %v3239 = vunpack.c.l.b16 %v3030
    %v3240 = vunpack.c.h.b16 %v3030
    %v3241 = vunpack.c.l.b16 %v3031
    %v3242 = vunpack.c.h.b16 %v3031
    %v3243 = vunpack.c.l.b16 %v3032
    %v3244 = vunpack.c.h.b16 %v3032
    %v3245 = vunpack.c.l.b16 %v3033
    %v3246 = vunpack.c.h.b16 %v3033
    %v3247 = vunpack.c.l.b16 %v3034
    %v3248 = vunpack.c.h.b16 %v3034
    %v3249 = vpack.c.b16 %v3125, %v3121
    %v3250 = vpack.c.b16 %v3126, %v3122
    %v3251 = vpack.c.b16 %v3127, %v3123
    %v3252 = vpack.c.b16 %v3128, %v3124
    %v3253 = vpack.c.b16 %v3133, %v3129
    %v3254 = vpack.c.b16 %v3134, %v3130
    %v3255 = vpack.c.b16 %v3135, %v3131
    %v3256 = vpack.c.b16 %v3136, %v3132
    %v3257 = vpack.c.b16 %v3141, %v3137
    %v3258 = vpack.c.b16 %v3142, %v3138
    %v3259 = vpack.c.b16 %v3143, %v3139
    %v3260 = vpack.c.b16 %v3144, %v3140
    %v3261 = vpack.c.b16 %v3149, %v3145
    %v3262 = vpack.c.b16 %v3150, %v3146
    %v3263 = vpack.c.b16 %v3151, %v3147
    %v3264 = vpack.c.b16 %v3152, %v3148
    %v3265 = vpack.c.b16 %v3157, %v3153
    %v3266 = vpack.c.b16 %v3158, %v3154
    %v3267 = vpack.c.b16 %v3159, %v3155
    %v3268 = vpack.c.b16 %v3160, %v3156
    %v3269 = vpack.c.b16 %v3165, %v3161
    %v3270 = vpack.c.b16 %v3166, %v3162
    %v3271 = vpack.c.b16 %v3167, %v3163
    %v3272 = vpack.c.b16 %v3168, %v3164
    %v3273 = vpack.c.b16 %v3173, %v3169
    %v3274 = vpack.c.b16 %v3174, %v3170
    %v3275 = vpack.c.b16 %v3175, %v3171
    %v3276 = vpack.c.b16 %v3176, %v3172
    %v3277 = vpack.c.b16 %v3181, %v3177
    %v3278 = vpack.c.b16 %v3182, %v3178
    %v3279 = vpack.c.b16 %v3183, %v3179
    %v3280 = vpack.c.b16 %v3184, %v3180
    %v3281 = vpack.c.b16 %v3189, %v3185
    %v3282 = vpack.c.b16 %v3190, %v3186
    %v3283 = vpack.c.b16 %v3191, %v3187
    %v3284 = vpack.c.b16 %v3192, %v3188
    %v3285 = vpack.c.b16 %v3197, %v3193
    %v3286 = vpack.c.b16 %v3198, %v3194
    %v3287 = vpack.c.b16 %v3199, %v3195
    %v3288 = vpack.c.b16 %v3200, %v3196
    %v3289 = vpack.c.b16 %v3205, %v3201
    %v3290 = vpack.c.b16 %v3206, %v3202
    %v3291 = vpack.c.b16 %v3207, %v3203
    %v3292 = vpack.c.b16 %v3208, %v3204
    %v3293 = vpack.c.b16 %v3213, %v3209
    %v3294 = vpack.c.b16 %v3214, %v3210
    %v3295 = vpack.c.b16 %v3215, %v3211
    %v3296 = vpack.c.b16 %v3216, %v3212
    %v3297 = vpack.c.b16 %v3221, %v3217
    %v3298 = vpack.c.b16 %v3222, %v3218
    %v3299 = vpack.c.b16 %v3223, %v3219
    %v3300 = vpack.c.b16 %v3224, %v3220
    %v3301 = vpack.c.b16 %v3229, %v3225
    %v3302 = vpack.c.b16 %v3230, %v3226
    %v3303 = vpack.c.b16 %v3231, %v3227
    %v3304 = vpack.c.b16 %v3232, %v3228
    %v3305 = vpack.c.b16 %v3237, %v3233
    %v3306 = vpack.c.b16 %v3238, %v3234
    %v3307 = vpack.c.b16 %v3239, %v3235
    %v3308 = vpack.c.b16 %v3240, %v3236
    %v3309 = vpack.c.b16 %v3245, %v3241
    %v3310 = vpack.c.b16 %v3246, %v3242
    %v3311 = vpack.c.b16 %v3247, %v3243
    %v3312 = vpack.c.b16 %v3248, %v3244
    %3377 = vmatprep.subr.bf16.mxu0 %v3250
    %3378 = vmatpush1.bf16.msra.mxu0 %v3249
    %3379 = vmatprep.subr.bf16.mxu0 %v3254
    %3380 = vmatpush1.bf16.msra.mxu0 %v3253
    %3381 = vmatprep.subr.bf16.mxu0 %v3258
    %3382 = vmatpush1.bf16.msra.mxu0 %v3257
    %3383 = vmatprep.subr.bf16.mxu0 %v3262
    %3384 = vmatpush1.bf16.msra.mxu0 %v3261
    %3385 = vmatprep.subr.bf16.mxu0 %v3266
    %3386 = vmatpush1.bf16.msra.mxu0 %v3265
    %3387 = vmatprep.subr.bf16.mxu0 %v3270
    %3388 = vmatpush1.bf16.msra.mxu0 %v3269
    %3389 = vmatprep.subr.bf16.mxu0 %v3274
    %3390 = vmatpush1.bf16.msra.mxu0 %v3273
    %3391 = vmatprep.subr.bf16.mxu0 %v3278
    %3392 = vmatpush1.bf16.msra.mxu0 %v3277
    %3393 = vmatprep.subr.bf16.mxu0 %v3282
    %3394 = vmatpush1.bf16.msra.mxu0 %v3281
    %3395 = vmatprep.subr.bf16.mxu0 %v3286
    %3396 = vmatpush1.bf16.msra.mxu0 %v3285
    %3397 = vmatprep.subr.bf16.mxu0 %v3290
    %3398 = vmatpush1.bf16.msra.mxu0 %v3289
    %3399 = vmatprep.subr.bf16.mxu0 %v3294
    %3400 = vmatpush1.bf16.msra.mxu0 %v3293
    %3401 = vmatprep.subr.bf16.mxu0 %v3298
    %3402 = vmatpush1.bf16.msra.mxu0 %v3297
    %3403 = vmatprep.subr.bf16.mxu0 %v3302
    %3404 = vmatpush1.bf16.msra.mxu0 %v3301
    %3405 = vmatprep.subr.bf16.mxu0 %v3306
    %3406 = vmatpush1.bf16.msra.mxu0 %v3305
    %3407 = vmatprep.subr.bf16.mxu0 %v3310
    %3408 = vmatpush1.bf16.msra.mxu0 %v3309
    %3409 = vmatprep.mubr.bf16.mxu0 %v2970
    %3410 = vmatmul.mubr.bf16.gmra.mrb[0].mxu0 %v2969
    %v3411 = vpop.f32.mrb[0].mxu0
    %v3412 = vadd.f32 %v3040, %v3411
    %v3413 = vpop.f32.mrb[0].mxu0
    %v3414 = vadd.f32 %v3044, %v3413
    %v3415 = vpop.f32.mrb[0].mxu0
    %v3416 = vpop.f32.mrb[0].mxu0
    %3417 = vdwg.mxu0
    %3418 = vmatprep.subr.bf16.mxu0 %v3252
    %3419 = vmatpush1.bf16.msra.mxu0 %v3251
    %3420 = vmatprep.subr.bf16.mxu0 %v3256
    %3421 = vmatpush1.bf16.msra.mxu0 %v3255
    %3422 = vmatprep.subr.bf16.mxu0 %v3260
    %3423 = vmatpush1.bf16.msra.mxu0 %v3259
    %3424 = vmatprep.subr.bf16.mxu0 %v3264
    %3425 = vmatpush1.bf16.msra.mxu0 %v3263
    %3426 = vmatprep.subr.bf16.mxu0 %v3268
    %3427 = vmatpush1.bf16.msra.mxu0 %v3267
    %3428 = vmatprep.subr.bf16.mxu0 %v3272
    %3429 = vmatpush1.bf16.msra.mxu0 %v3271
    %3430 = vmatprep.subr.bf16.mxu0 %v3276
    %3431 = vmatpush1.bf16.msra.mxu0 %v3275
    %3432 = vmatprep.subr.bf16.mxu0 %v3280
    %3433 = vmatpush1.bf16.msra.mxu0 %v3279
    %3434 = vmatprep.subr.bf16.mxu0 %v3284
    %3435 = vmatpush1.bf16.msra.mxu0 %v3283
    %3436 = vmatprep.subr.bf16.mxu0 %v3288
    %3437 = vmatpush1.bf16.msra.mxu0 %v3287
    %3438 = vmatprep.subr.bf16.mxu0 %v3292
    %3439 = vmatpush1.bf16.msra.mxu0 %v3291
    %3440 = vmatprep.subr.bf16.mxu0 %v3296
    %3441 = vmatpush1.bf16.msra.mxu0 %v3295
    %3442 = vmatprep.subr.bf16.mxu0 %v3300
    %3443 = vmatpush1.bf16.msra.mxu0 %v3299
    %3444 = vmatprep.subr.bf16.mxu0 %v3304
    %3445 = vmatpush1.bf16.msra.mxu0 %v3303
    %3446 = vmatprep.subr.bf16.mxu0 %v3308
    %3447 = vmatpush1.bf16.msra.mxu0 %v3307
    %3448 = vmatprep.subr.bf16.mxu0 %v3312
    %3449 = vmatpush1.bf16.msra.mxu0 %v3311
    %3450 = vmatprep.mubr.bf16.mxu0 %v2970
    %3451 = vmatmul.mubr.bf16.gmra.mrb[0].mxu0 %v2969
    %v3452 = vpop.f32.mrb[0].mxu0
    %v3453 = vadd.f32 %v3048, %v3452
    %v3454 = vpop.f32.mrb[0].mxu0
    %v3455 = vadd.f32 %v3052, %v3454
    %v3456 = vpop.f32.mrb[0].mxu0
    %v3457 = vpop.f32.mrb[0].mxu0
    %3458 = vdwg.mxu0
    %v3459 = vmax.f32 %v3412, 0.0
    %v3460 = vmax.f32 %v3414, 0.0
    %v3461 = vmax.f32 %v3453, 0.0
    %v3462 = vmax.f32 %v3455, 0.0
    %v3463 = vpack.c.bf16 %v3459, %v3459
    %v3464 = vpack.c.bf16 %v3460, %v3460
    %v3465 = vpack.c.bf16 %v3461, %v3461
    %v3466 = vpack.c.bf16 %v3462, %v3462
    %v3467 = vld [vmem:[#allocation14] sm:$0xff]
    %v3468 = vld [vmem:[#allocation14 + $0x8] sm:$0xff]
    %v3469 = vld [vmem:[#allocation14 + $0x10] sm:$0xff]
    %v3470 = vld [vmem:[#allocation14 + $0x18] sm:$0xff]
    %v3471 = vld [vmem:[#allocation14 + $0x20] sm:$0xff]
    %v3472 = vld [vmem:[#allocation14 + $0x28] sm:$0xff]
    %v3473 = vld [vmem:[#allocation14 + $0x30] sm:$0xff]
    %v3474 = vld [vmem:[#allocation14 + $0x38] sm:$0xff]
    %v3475 = vld [vmem:[#allocation14 + $0x40] sm:$0xff]
    %v3476 = vld [vmem:[#allocation14 + $0x48] sm:$0xff]
    %v3477 = vld [vmem:[#allocation14 + $0x50] sm:$0xff]
    %v3478 = vld [vmem:[#allocation14 + $0x58] sm:$0xff]
    %v3479 = vld [vmem:[#allocation14 + $0x60] sm:$0xff]
    %v3480 = vld [vmem:[#allocation14 + $0x68] sm:$0xff]
    %v3481 = vld [vmem:[#allocation14 + $0x70] sm:$0xff]
    %v3482 = vld [vmem:[#allocation14 + $0x78] sm:$0xff]
    %v3483 = vld [vmem:[#allocation14 + $0x80] sm:$0xff]
    %v3484 = vld [vmem:[#allocation14 + $0x88] sm:$0xff]
    %v3485 = vld [vmem:[#allocation14 + $0x90] sm:$0xff]
    %v3486 = vld [vmem:[#allocation14 + $0x98] sm:$0xff]
    %v3487 = vld [vmem:[#allocation14 + $0xa0] sm:$0xff]
    %v3488 = vld [vmem:[#allocation14 + $0xa8] sm:$0xff]
    %v3489 = vld [vmem:[#allocation14 + $0xb0] sm:$0xff]
    %v3490 = vld [vmem:[#allocation14 + $0xb8] sm:$0xff]
    %v3491 = vld [vmem:[#allocation14 + $0xc0] sm:$0xff]
    %v3492 = vld [vmem:[#allocation14 + $0xc8] sm:$0xff]
    %v3493 = vld [vmem:[#allocation14 + $0xd0] sm:$0xff]
    %v3494 = vld [vmem:[#allocation14 + $0xd8] sm:$0xff]
    %v3495 = vld [vmem:[#allocation14 + $0xe0] sm:$0xff]
    %v3496 = vld [vmem:[#allocation14 + $0xe8] sm:$0xff]
    %v3497 = vld [vmem:[#allocation14 + $0xf0] sm:$0xff]
    %v3498 = vld [vmem:[#allocation14 + $0xf8] sm:$0xff]
    %v3499 = vld [vmem:[#allocation14 + $0x100] sm:$0xff]
    %v3500 = vld [vmem:[#allocation14 + $0x108] sm:$0xff]
    %v3501 = vld [vmem:[#allocation14 + $0x110] sm:$0xff]
    %v3502 = vld [vmem:[#allocation14 + $0x118] sm:$0xff]
    %v3503 = vld [vmem:[#allocation14 + $0x120] sm:$0xff]
    %v3504 = vld [vmem:[#allocation14 + $0x128] sm:$0xff]
    %v3505 = vld [vmem:[#allocation14 + $0x130] sm:$0xff]
    %v3506 = vld [vmem:[#allocation14 + $0x138] sm:$0xff]
    %v3507 = vld [vmem:[#allocation14 + $0x140] sm:$0xff]
    %v3508 = vld [vmem:[#allocation14 + $0x148] sm:$0xff]
    %v3509 = vld [vmem:[#allocation14 + $0x150] sm:$0xff]
    %v3510 = vld [vmem:[#allocation14 + $0x158] sm:$0xff]
    %v3511 = vld [vmem:[#allocation14 + $0x160] sm:$0xff]
    %v3512 = vld [vmem:[#allocation14 + $0x168] sm:$0xff]
    %v3513 = vld [vmem:[#allocation14 + $0x170] sm:$0xff]
    %v3514 = vld [vmem:[#allocation14 + $0x178] sm:$0xff]
    %v3515 = vld [vmem:[#allocation14 + $0x180] sm:$0xff]
    %v3516 = vld [vmem:[#allocation14 + $0x188] sm:$0xff]
    %v3517 = vld [vmem:[#allocation14 + $0x190] sm:$0xff]
    %v3518 = vld [vmem:[#allocation14 + $0x198] sm:$0xff]
    %v3519 = vld [vmem:[#allocation14 + $0x1a0] sm:$0xff]
    %v3520 = vld [vmem:[#allocation14 + $0x1a8] sm:$0xff]
    %v3521 = vld [vmem:[#allocation14 + $0x1b0] sm:$0xff]
    %v3522 = vld [vmem:[#allocation14 + $0x1b8] sm:$0xff]
    %v3523 = vld [vmem:[#allocation14 + $0x1c0] sm:$0xff]
    %v3524 = vld [vmem:[#allocation14 + $0x1c8] sm:$0xff]
    %v3525 = vld [vmem:[#allocation14 + $0x1d0] sm:$0xff]
    %v3526 = vld [vmem:[#allocation14 + $0x1d8] sm:$0xff]
    %v3527 = vld [vmem:[#allocation14 + $0x1e0] sm:$0xff]
    %v3528 = vld [vmem:[#allocation14 + $0x1e8] sm:$0xff]
    %v3529 = vld [vmem:[#allocation14 + $0x1f0] sm:$0xff]
    %v3530 = vld [vmem:[#allocation14 + $0x1f8] sm:$0xff]
    %v3531 = vld [vmem:[#allocation14 + $0x200] sm:$0xff]
    %v3532 = vld [vmem:[#allocation14 + $0x208] sm:$0xff]
    %v3533 = vld [vmem:[#allocation14 + $0x210] sm:$0xff]
    %v3534 = vld [vmem:[#allocation14 + $0x218] sm:$0xff]
    %v3535 = vld [vmem:[#allocation14 + $0x220] sm:$0xff]
    %v3536 = vld [vmem:[#allocation14 + $0x228] sm:$0xff]
    %v3537 = vld [vmem:[#allocation14 + $0x230] sm:$0xff]
    %v3538 = vld [vmem:[#allocation14 + $0x238] sm:$0xff]
    %v3539 = vld [vmem:[#allocation14 + $0x240] sm:$0xff]
    %v3540 = vld [vmem:[#allocation14 + $0x248] sm:$0xff]
    %v3541 = vld [vmem:[#allocation14 + $0x250] sm:$0xff]
    %v3542 = vld [vmem:[#allocation14 + $0x258] sm:$0xff]
    %v3543 = vld [vmem:[#allocation14 + $0x260] sm:$0xff]
    %v3544 = vld [vmem:[#allocation14 + $0x268] sm:$0xff]
    %v3545 = vld [vmem:[#allocation14 + $0x270] sm:$0xff]
    %v3546 = vld [vmem:[#allocation14 + $0x278] sm:$0xff]
    %v3547 = vld [vmem:[#allocation14 + $0x280] sm:$0xff]
    %v3548 = vld [vmem:[#allocation14 + $0x288] sm:$0xff]
    %v3549 = vld [vmem:[#allocation14 + $0x290] sm:$0xff]
    %v3550 = vld [vmem:[#allocation14 + $0x298] sm:$0xff]
    %v3551 = vld [vmem:[#allocation14 + $0x2a0] sm:$0xff]
    %v3552 = vld [vmem:[#allocation14 + $0x2a8] sm:$0xff]
    %v3553 = vld [vmem:[#allocation14 + $0x2b0] sm:$0xff]
    %v3554 = vld [vmem:[#allocation14 + $0x2b8] sm:$0xff]
    %v3555 = vld [vmem:[#allocation14 + $0x2c0] sm:$0xff]
    %v3556 = vld [vmem:[#allocation14 + $0x2c8] sm:$0xff]
    %v3557 = vld [vmem:[#allocation14 + $0x2d0] sm:$0xff]
    %v3558 = vld [vmem:[#allocation14 + $0x2d8] sm:$0xff]
    %v3559 = vld [vmem:[#allocation14 + $0x2e0] sm:$0xff]
    %v3560 = vld [vmem:[#allocation14 + $0x2e8] sm:$0xff]
    %v3561 = vld [vmem:[#allocation14 + $0x2f0] sm:$0xff]
    %v3562 = vld [vmem:[#allocation14 + $0x2f8] sm:$0xff]
    %v3563 = vld [vmem:[#allocation14 + $0x300] sm:$0xff]
    %v3564 = vld [vmem:[#allocation14 + $0x308] sm:$0xff]
    %v3565 = vld [vmem:[#allocation14 + $0x310] sm:$0xff]
    %v3566 = vld [vmem:[#allocation14 + $0x318] sm:$0xff]
    %v3567 = vld [vmem:[#allocation14 + $0x320] sm:$0xff]
    %v3568 = vld [vmem:[#allocation14 + $0x328] sm:$0xff]
    %v3569 = vld [vmem:[#allocation14 + $0x330] sm:$0xff]
    %v3570 = vld [vmem:[#allocation14 + $0x338] sm:$0xff]
    %v3571 = vld [vmem:[#allocation14 + $0x340] sm:$0xff]
    %v3572 = vld [vmem:[#allocation14 + $0x348] sm:$0xff]
    %v3573 = vld [vmem:[#allocation14 + $0x350] sm:$0xff]
    %v3574 = vld [vmem:[#allocation14 + $0x358] sm:$0xff]
    %v3575 = vld [vmem:[#allocation14 + $0x360] sm:$0xff]
    %v3576 = vld [vmem:[#allocation14 + $0x368] sm:$0xff]
    %v3577 = vld [vmem:[#allocation14 + $0x370] sm:$0xff]
    %v3578 = vld [vmem:[#allocation14 + $0x378] sm:$0xff]
    %v3579 = vld [vmem:[#allocation14 + $0x380] sm:$0xff]
    %v3580 = vld [vmem:[#allocation14 + $0x388] sm:$0xff]
    %v3581 = vld [vmem:[#allocation14 + $0x390] sm:$0xff]
    %v3582 = vld [vmem:[#allocation14 + $0x398] sm:$0xff]
    %v3583 = vld [vmem:[#allocation14 + $0x3a0] sm:$0xff]
    %v3584 = vld [vmem:[#allocation14 + $0x3a8] sm:$0xff]
    %v3585 = vld [vmem:[#allocation14 + $0x3b0] sm:$0xff]
    %v3586 = vld [vmem:[#allocation14 + $0x3b8] sm:$0xff]
    %v3587 = vld [vmem:[#allocation14 + $0x3c0] sm:$0xff]
    %v3588 = vld [vmem:[#allocation14 + $0x3c8] sm:$0xff]
    %v3589 = vld [vmem:[#allocation14 + $0x3d0] sm:$0xff]
    %v3590 = vld [vmem:[#allocation14 + $0x3d8] sm:$0xff]
    %v3591 = vld [vmem:[#allocation14 + $0x3e0] sm:$0xff]
    %v3592 = vld [vmem:[#allocation14 + $0x3e8] sm:$0xff]
    %v3593 = vld [vmem:[#allocation14 + $0x3f0] sm:$0xff]
    %v3594 = vld [vmem:[#allocation14 + $0x3f8] sm:$0xff]
    %v3595 = vld [vmem:[#allocation14 + $0x400] sm:$0xff]
    %v3596 = vld [vmem:[#allocation14 + $0x408] sm:$0xff]
    %v3597 = vld [vmem:[#allocation14 + $0x410] sm:$0xff]
    %v3598 = vld [vmem:[#allocation14 + $0x418] sm:$0xff]
    %v3599 = vld [vmem:[#allocation14 + $0x420] sm:$0xff]
    %v3600 = vld [vmem:[#allocation14 + $0x428] sm:$0xff]
    %v3601 = vld [vmem:[#allocation14 + $0x430] sm:$0xff]
    %v3602 = vld [vmem:[#allocation14 + $0x438] sm:$0xff]
    %v3603 = vld [vmem:[#allocation14 + $0x440] sm:$0xff]
    %v3604 = vld [vmem:[#allocation14 + $0x448] sm:$0xff]
    %v3605 = vld [vmem:[#allocation14 + $0x450] sm:$0xff]
    %v3606 = vld [vmem:[#allocation14 + $0x458] sm:$0xff]
    %v3607 = vld [vmem:[#allocation14 + $0x460] sm:$0xff]
    %v3608 = vld [vmem:[#allocation14 + $0x468] sm:$0xff]
    %v3609 = vld [vmem:[#allocation14 + $0x470] sm:$0xff]
    %v3610 = vld [vmem:[#allocation14 + $0x478] sm:$0xff]
    %v3611 = vld [vmem:[#allocation14 + $0x480] sm:$0xff]
    %v3612 = vld [vmem:[#allocation14 + $0x488] sm:$0xff]
    %v3613 = vld [vmem:[#allocation14 + $0x490] sm:$0xff]
    %v3614 = vld [vmem:[#allocation14 + $0x498] sm:$0xff]
    %v3615 = vld [vmem:[#allocation14 + $0x4a0] sm:$0xff]
    %v3616 = vld [vmem:[#allocation14 + $0x4a8] sm:$0xff]
    %v3617 = vld [vmem:[#allocation14 + $0x4b0] sm:$0xff]
    %v3618 = vld [vmem:[#allocation14 + $0x4b8] sm:$0xff]
    %v3619 = vld [vmem:[#allocation14 + $0x4c0] sm:$0xff]
    %v3620 = vld [vmem:[#allocation14 + $0x4c8] sm:$0xff]
    %v3621 = vld [vmem:[#allocation14 + $0x4d0] sm:$0xff]
    %v3622 = vld [vmem:[#allocation14 + $0x4d8] sm:$0xff]
    %v3623 = vld [vmem:[#allocation14 + $0x4e0] sm:$0xff]
    %v3624 = vld [vmem:[#allocation14 + $0x4e8] sm:$0xff]
    %v3625 = vld [vmem:[#allocation14 + $0x4f0] sm:$0xff]
    %v3626 = vld [vmem:[#allocation14 + $0x4f8] sm:$0xff]
    %v3627 = vld [vmem:[#allocation14 + $0x500] sm:$0xff]
    %v3628 = vld [vmem:[#allocation14 + $0x508] sm:$0xff]
    %v3629 = vld [vmem:[#allocation14 + $0x510] sm:$0xff]
    %v3630 = vld [vmem:[#allocation14 + $0x518] sm:$0xff]
    %v3631 = vld [vmem:[#allocation14 + $0x520] sm:$0xff]
    %v3632 = vld [vmem:[#allocation14 + $0x528] sm:$0xff]
    %v3633 = vld [vmem:[#allocation14 + $0x530] sm:$0xff]
    %v3634 = vld [vmem:[#allocation14 + $0x538] sm:$0xff]
    %v3635 = vld [vmem:[#allocation14 + $0x540] sm:$0xff]
    %v3636 = vld [vmem:[#allocation14 + $0x548] sm:$0xff]
    %v3637 = vld [vmem:[#allocation14 + $0x550] sm:$0xff]
    %v3638 = vld [vmem:[#allocation14 + $0x558] sm:$0xff]
    %v3639 = vld [vmem:[#allocation14 + $0x560] sm:$0xff]
    %v3640 = vld [vmem:[#allocation14 + $0x568] sm:$0xff]
    %v3641 = vld [vmem:[#allocation14 + $0x570] sm:$0xff]
    %v3642 = vld [vmem:[#allocation14 + $0x578] sm:$0xff]
    %v3643 = vld [vmem:[#allocation14 + $0x580] sm:$0xff]
    %v3644 = vld [vmem:[#allocation14 + $0x588] sm:$0xff]
    %v3645 = vld [vmem:[#allocation14 + $0x590] sm:$0xff]
    %v3646 = vld [vmem:[#allocation14 + $0x598] sm:$0xff]
    %v3647 = vld [vmem:[#allocation14 + $0x5a0] sm:$0xff]
    %v3648 = vld [vmem:[#allocation14 + $0x5a8] sm:$0xff]
    %v3649 = vld [vmem:[#allocation14 + $0x5b0] sm:$0xff]
    %v3650 = vld [vmem:[#allocation14 + $0x5b8] sm:$0xff]
    %v3651 = vld [vmem:[#allocation14 + $0x5c0] sm:$0xff]
    %v3652 = vld [vmem:[#allocation14 + $0x5c8] sm:$0xff]
    %v3653 = vld [vmem:[#allocation14 + $0x5d0] sm:$0xff]
    %v3654 = vld [vmem:[#allocation14 + $0x5d8] sm:$0xff]
    %v3655 = vld [vmem:[#allocation14 + $0x5e0] sm:$0xff]
    %v3656 = vld [vmem:[#allocation14 + $0x5e8] sm:$0xff]
    %v3657 = vld [vmem:[#allocation14 + $0x5f0] sm:$0xff]
    %v3658 = vld [vmem:[#allocation14 + $0x5f8] sm:$0xff]
    %v3659 = vld [vmem:[#allocation14 + $0x600] sm:$0xff]
    %v3660 = vld [vmem:[#allocation14 + $0x608] sm:$0xff]
    %v3661 = vld [vmem:[#allocation14 + $0x610] sm:$0xff]
    %v3662 = vld [vmem:[#allocation14 + $0x618] sm:$0xff]
    %v3663 = vld [vmem:[#allocation14 + $0x620] sm:$0xff]
    %v3664 = vld [vmem:[#allocation14 + $0x628] sm:$0xff]
    %v3665 = vld [vmem:[#allocation14 + $0x630] sm:$0xff]
    %v3666 = vld [vmem:[#allocation14 + $0x638] sm:$0xff]
    %v3667 = vld [vmem:[#allocation14 + $0x640] sm:$0xff]
    %v3668 = vld [vmem:[#allocation14 + $0x648] sm:$0xff]
    %v3669 = vld [vmem:[#allocation14 + $0x650] sm:$0xff]
    %v3670 = vld [vmem:[#allocation14 + $0x658] sm:$0xff]
    %v3671 = vld [vmem:[#allocation14 + $0x660] sm:$0xff]
    %v3672 = vld [vmem:[#allocation14 + $0x668] sm:$0xff]
    %v3673 = vld [vmem:[#allocation14 + $0x670] sm:$0xff]
    %v3674 = vld [vmem:[#allocation14 + $0x678] sm:$0xff]
    %v3675 = vld [vmem:[#allocation14 + $0x680] sm:$0xff]
    %v3676 = vld [vmem:[#allocation14 + $0x688] sm:$0xff]
    %v3677 = vld [vmem:[#allocation14 + $0x690] sm:$0xff]
    %v3678 = vld [vmem:[#allocation14 + $0x698] sm:$0xff]
    %v3679 = vld [vmem:[#allocation14 + $0x6a0] sm:$0xff]
    %v3680 = vld [vmem:[#allocation14 + $0x6a8] sm:$0xff]
    %v3681 = vld [vmem:[#allocation14 + $0x6b0] sm:$0xff]
    %v3682 = vld [vmem:[#allocation14 + $0x6b8] sm:$0xff]
    %v3683 = vld [vmem:[#allocation14 + $0x6c0] sm:$0xff]
    %v3684 = vld [vmem:[#allocation14 + $0x6c8] sm:$0xff]
    %v3685 = vld [vmem:[#allocation14 + $0x6d0] sm:$0xff]
    %v3686 = vld [vmem:[#allocation14 + $0x6d8] sm:$0xff]
    %v3687 = vld [vmem:[#allocation14 + $0x6e0] sm:$0xff]
    %v3688 = vld [vmem:[#allocation14 + $0x6e8] sm:$0xff]
    %v3689 = vld [vmem:[#allocation14 + $0x6f0] sm:$0xff]
    %v3690 = vld [vmem:[#allocation14 + $0x6f8] sm:$0xff]
    %v3691 = vld [vmem:[#allocation14 + $0x700] sm:$0xff]
    %v3692 = vld [vmem:[#allocation14 + $0x708] sm:$0xff]
    %v3693 = vld [vmem:[#allocation14 + $0x710] sm:$0xff]
    %v3694 = vld [vmem:[#allocation14 + $0x718] sm:$0xff]
    %v3695 = vld [vmem:[#allocation14 + $0x720] sm:$0xff]
    %v3696 = vld [vmem:[#allocation14 + $0x728] sm:$0xff]
    %v3697 = vld [vmem:[#allocation14 + $0x730] sm:$0xff]
    %v3698 = vld [vmem:[#allocation14 + $0x738] sm:$0xff]
    %v3699 = vld [vmem:[#allocation14 + $0x740] sm:$0xff]
    %v3700 = vld [vmem:[#allocation14 + $0x748] sm:$0xff]
    %v3701 = vld [vmem:[#allocation14 + $0x750] sm:$0xff]
    %v3702 = vld [vmem:[#allocation14 + $0x758] sm:$0xff]
    %v3703 = vld [vmem:[#allocation14 + $0x760] sm:$0xff]
    %v3704 = vld [vmem:[#allocation14 + $0x768] sm:$0xff]
    %v3705 = vld [vmem:[#allocation14 + $0x770] sm:$0xff]
    %v3706 = vld [vmem:[#allocation14 + $0x778] sm:$0xff]
    %v3707 = vld [vmem:[#allocation14 + $0x780] sm:$0xff]
    %v3708 = vld [vmem:[#allocation14 + $0x788] sm:$0xff]
    %v3709 = vld [vmem:[#allocation14 + $0x790] sm:$0xff]
    %v3710 = vld [vmem:[#allocation14 + $0x798] sm:$0xff]
    %v3711 = vld [vmem:[#allocation14 + $0x7a0] sm:$0xff]
    %v3712 = vld [vmem:[#allocation14 + $0x7a8] sm:$0xff]
    %v3713 = vld [vmem:[#allocation14 + $0x7b0] sm:$0xff]
    %v3714 = vld [vmem:[#allocation14 + $0x7b8] sm:$0xff]
    %v3715 = vld [vmem:[#allocation14 + $0x7c0] sm:$0xff]
    %v3716 = vld [vmem:[#allocation14 + $0x7c8] sm:$0xff]
    %v3717 = vld [vmem:[#allocation14 + $0x7d0] sm:$0xff]
    %v3718 = vld [vmem:[#allocation14 + $0x7d8] sm:$0xff]
    %v3719 = vld [vmem:[#allocation14 + $0x7e0] sm:$0xff]
    %v3720 = vld [vmem:[#allocation14 + $0x7e8] sm:$0xff]
    %v3721 = vld [vmem:[#allocation14 + $0x7f0] sm:$0xff]
    %v3722 = vld [vmem:[#allocation14 + $0x7f8] sm:$0xff]
    %v3723 = vld [vmem:[%s13] sm:$0xff]
    %v3725 = vlaneseq
    %v3726 = vshrl.u32 %v3725, 7
    %v3727 = vsub.s32 0, %v3726
    %v3728 = vrot.slane %v3723, %v3727
    %v3729 = vlaneseq
    %v3730 = vshrl.u32 %v3729, 7
    %v3731 = vsub.s32 1, %v3730
    %v3732 = vrot.slane %v3723, %v3731
    %v3733 = vlaneseq
    %v3734 = vshrl.u32 %v3733, 7
    %v3735 = vsub.s32 2, %v3734
    %v3736 = vrot.slane %v3723, %v3735
    %v3737 = vlaneseq
    %v3738 = vshrl.u32 %v3737, 7
    %v3739 = vsub.s32 3, %v3738
    %v3740 = vrot.slane %v3723, %v3739
    %v3741 = vlaneseq
    %v3742 = vshrl.u32 %v3741, 7
    %v3743 = vsub.s32 4, %v3742
    %v3744 = vrot.slane %v3723, %v3743
    %v3745 = vlaneseq
    %v3746 = vshrl.u32 %v3745, 7
    %v3747 = vsub.s32 5, %v3746
    %v3748 = vrot.slane %v3723, %v3747
    %v3749 = vlaneseq
    %v3750 = vshrl.u32 %v3749, 7
    %v3751 = vsub.s32 6, %v3750
    %v3752 = vrot.slane %v3723, %v3751
    %v3753 = vlaneseq
    %v3754 = vshrl.u32 %v3753, 7
    %v3755 = vsub.s32 7, %v3754
    %v3756 = vrot.slane %v3723, %v3755
    %v4021 = vunpack.c.l.b16 %v3467
    %v4022 = vunpack.c.h.b16 %v3467
    %v4023 = vunpack.c.l.b16 %v3468
    %v4024 = vunpack.c.h.b16 %v3468
    %v4025 = vunpack.c.l.b16 %v3469
    %v4026 = vunpack.c.h.b16 %v3469
    %v4027 = vunpack.c.l.b16 %v3470
    %v4028 = vunpack.c.h.b16 %v3470
    %v4029 = vunpack.c.l.b16 %v3471
    %v4030 = vunpack.c.h.b16 %v3471
    %v4031 = vunpack.c.l.b16 %v3472
    %v4032 = vunpack.c.h.b16 %v3472
    %v4033 = vunpack.c.l.b16 %v3473
    %v4034 = vunpack.c.h.b16 %v3473
    %v4035 = vunpack.c.l.b16 %v3474
    %v4036 = vunpack.c.h.b16 %v3474
    %v4037 = vunpack.c.l.b16 %v3475
    %v4038 = vunpack.c.h.b16 %v3475
    %v4039 = vunpack.c.l.b16 %v3476
    %v4040 = vunpack.c.h.b16 %v3476
    %v4041 = vunpack.c.l.b16 %v3477
    %v4042 = vunpack.c.h.b16 %v3477
    %v4043 = vunpack.c.l.b16 %v3478
    %v4044 = vunpack.c.h.b16 %v3478
    %v4045 = vunpack.c.l.b16 %v3479
    %v4046 = vunpack.c.h.b16 %v3479
    %v4047 = vunpack.c.l.b16 %v3480
    %v4048 = vunpack.c.h.b16 %v3480
    %v4049 = vunpack.c.l.b16 %v3481
    %v4050 = vunpack.c.h.b16 %v3481
    %v4051 = vunpack.c.l.b16 %v3482
    %v4052 = vunpack.c.h.b16 %v3482
    %v4053 = vunpack.c.l.b16 %v3483
    %v4054 = vunpack.c.h.b16 %v3483
    %v4055 = vunpack.c.l.b16 %v3484
    %v4056 = vunpack.c.h.b16 %v3484
    %v4057 = vunpack.c.l.b16 %v3485
    %v4058 = vunpack.c.h.b16 %v3485
    %v4059 = vunpack.c.l.b16 %v3486
    %v4060 = vunpack.c.h.b16 %v3486
    %v4061 = vunpack.c.l.b16 %v3487
    %v4062 = vunpack.c.h.b16 %v3487
    %v4063 = vunpack.c.l.b16 %v3488
    %v4064 = vunpack.c.h.b16 %v3488
    %v4065 = vunpack.c.l.b16 %v3489
    %v4066 = vunpack.c.h.b16 %v3489
    %v4067 = vunpack.c.l.b16 %v3490
    %v4068 = vunpack.c.h.b16 %v3490
    %v4069 = vunpack.c.l.b16 %v3491
    %v4070 = vunpack.c.h.b16 %v3491
    %v4071 = vunpack.c.l.b16 %v3492
    %v4072 = vunpack.c.h.b16 %v3492
    %v4073 = vunpack.c.l.b16 %v3493
    %v4074 = vunpack.c.h.b16 %v3493
    %v4075 = vunpack.c.l.b16 %v3494
    %v4076 = vunpack.c.h.b16 %v3494
    %v4077 = vunpack.c.l.b16 %v3495
    %v4078 = vunpack.c.h.b16 %v3495
    %v4079 = vunpack.c.l.b16 %v3496
    %v4080 = vunpack.c.h.b16 %v3496
    %v4081 = vunpack.c.l.b16 %v3497
    %v4082 = vunpack.c.h.b16 %v3497
    %v4083 = vunpack.c.l.b16 %v3498
    %v4084 = vunpack.c.h.b16 %v3498
    %v4085 = vunpack.c.l.b16 %v3499
    %v4086 = vunpack.c.h.b16 %v3499
    %v4087 = vunpack.c.l.b16 %v3500
    %v4088 = vunpack.c.h.b16 %v3500
    %v4089 = vunpack.c.l.b16 %v3501
    %v4090 = vunpack.c.h.b16 %v3501
    %v4091 = vunpack.c.l.b16 %v3502
    %v4092 = vunpack.c.h.b16 %v3502
    %v4093 = vunpack.c.l.b16 %v3503
    %v4094 = vunpack.c.h.b16 %v3503
    %v4095 = vunpack.c.l.b16 %v3504
    %v4096 = vunpack.c.h.b16 %v3504
    %v4097 = vunpack.c.l.b16 %v3505
    %v4098 = vunpack.c.h.b16 %v3505
    %v4099 = vunpack.c.l.b16 %v3506
    %v4100 = vunpack.c.h.b16 %v3506
    %v4101 = vunpack.c.l.b16 %v3507
    %v4102 = vunpack.c.h.b16 %v3507
    %v4103 = vunpack.c.l.b16 %v3508
    %v4104 = vunpack.c.h.b16 %v3508
    %v4105 = vunpack.c.l.b16 %v3509
    %v4106 = vunpack.c.h.b16 %v3509
    %v4107 = vunpack.c.l.b16 %v3510
    %v4108 = vunpack.c.h.b16 %v3510
    %v4109 = vunpack.c.l.b16 %v3511
    %v4110 = vunpack.c.h.b16 %v3511
    %v4111 = vunpack.c.l.b16 %v3512
    %v4112 = vunpack.c.h.b16 %v3512
    %v4113 = vunpack.c.l.b16 %v3513
    %v4114 = vunpack.c.h.b16 %v3513
    %v4115 = vunpack.c.l.b16 %v3514
    %v4116 = vunpack.c.h.b16 %v3514
    %v4117 = vunpack.c.l.b16 %v3515
    %v4118 = vunpack.c.h.b16 %v3515
    %v4119 = vunpack.c.l.b16 %v3516
    %v4120 = vunpack.c.h.b16 %v3516
    %v4121 = vunpack.c.l.b16 %v3517
    %v4122 = vunpack.c.h.b16 %v3517
    %v4123 = vunpack.c.l.b16 %v3518
    %v4124 = vunpack.c.h.b16 %v3518
    %v4125 = vunpack.c.l.b16 %v3519
    %v4126 = vunpack.c.h.b16 %v3519
    %v4127 = vunpack.c.l.b16 %v3520
    %v4128 = vunpack.c.h.b16 %v3520
    %v4129 = vunpack.c.l.b16 %v3521
    %v4130 = vunpack.c.h.b16 %v3521
    %v4131 = vunpack.c.l.b16 %v3522
    %v4132 = vunpack.c.h.b16 %v3522
    %v4133 = vunpack.c.l.b16 %v3523
    %v4134 = vunpack.c.h.b16 %v3523
    %v4135 = vunpack.c.l.b16 %v3524
    %v4136 = vunpack.c.h.b16 %v3524
    %v4137 = vunpack.c.l.b16 %v3525
    %v4138 = vunpack.c.h.b16 %v3525
    %v4139 = vunpack.c.l.b16 %v3526
    %v4140 = vunpack.c.h.b16 %v3526
    %v4141 = vunpack.c.l.b16 %v3527
    %v4142 = vunpack.c.h.b16 %v3527
    %v4143 = vunpack.c.l.b16 %v3528
    %v4144 = vunpack.c.h.b16 %v3528
    %v4145 = vunpack.c.l.b16 %v3529
    %v4146 = vunpack.c.h.b16 %v3529
    %v4147 = vunpack.c.l.b16 %v3530
    %v4148 = vunpack.c.h.b16 %v3530
    %v4149 = vunpack.c.l.b16 %v3531
    %v4150 = vunpack.c.h.b16 %v3531
    %v4151 = vunpack.c.l.b16 %v3532
    %v4152 = vunpack.c.h.b16 %v3532
    %v4153 = vunpack.c.l.b16 %v3533
    %v4154 = vunpack.c.h.b16 %v3533
    %v4155 = vunpack.c.l.b16 %v3534
    %v4156 = vunpack.c.h.b16 %v3534
    %v4157 = vunpack.c.l.b16 %v3535
    %v4158 = vunpack.c.h.b16 %v3535
    %v4159 = vunpack.c.l.b16 %v3536
    %v4160 = vunpack.c.h.b16 %v3536
    %v4161 = vunpack.c.l.b16 %v3537
    %v4162 = vunpack.c.h.b16 %v3537
    %v4163 = vunpack.c.l.b16 %v3538
    %v4164 = vunpack.c.h.b16 %v3538
    %v4165 = vunpack.c.l.b16 %v3539
    %v4166 = vunpack.c.h.b16 %v3539
    %v4167 = vunpack.c.l.b16 %v3540
    %v4168 = vunpack.c.h.b16 %v3540
    %v4169 = vunpack.c.l.b16 %v3541
    %v4170 = vunpack.c.h.b16 %v3541
    %v4171 = vunpack.c.l.b16 %v3542
    %v4172 = vunpack.c.h.b16 %v3542
    %v4173 = vunpack.c.l.b16 %v3543
    %v4174 = vunpack.c.h.b16 %v3543
    %v4175 = vunpack.c.l.b16 %v3544
    %v4176 = vunpack.c.h.b16 %v3544
    %v4177 = vunpack.c.l.b16 %v3545
    %v4178 = vunpack.c.h.b16 %v3545
    %v4179 = vunpack.c.l.b16 %v3546
    %v4180 = vunpack.c.h.b16 %v3546
    %v4181 = vunpack.c.l.b16 %v3547
    %v4182 = vunpack.c.h.b16 %v3547
    %v4183 = vunpack.c.l.b16 %v3548
    %v4184 = vunpack.c.h.b16 %v3548
    %v4185 = vunpack.c.l.b16 %v3549
    %v4186 = vunpack.c.h.b16 %v3549
    %v4187 = vunpack.c.l.b16 %v3550
    %v4188 = vunpack.c.h.b16 %v3550
    %v4189 = vunpack.c.l.b16 %v3551
    %v4190 = vunpack.c.h.b16 %v3551
    %v4191 = vunpack.c.l.b16 %v3552
    %v4192 = vunpack.c.h.b16 %v3552
    %v4193 = vunpack.c.l.b16 %v3553
    %v4194 = vunpack.c.h.b16 %v3553
    %v4195 = vunpack.c.l.b16 %v3554
    %v4196 = vunpack.c.h.b16 %v3554
    %v4197 = vunpack.c.l.b16 %v3555
    %v4198 = vunpack.c.h.b16 %v3555
    %v4199 = vunpack.c.l.b16 %v3556
    %v4200 = vunpack.c.h.b16 %v3556
    %v4201 = vunpack.c.l.b16 %v3557
    %v4202 = vunpack.c.h.b16 %v3557
    %v4203 = vunpack.c.l.b16 %v3558
    %v4204 = vunpack.c.h.b16 %v3558
    %v4205 = vunpack.c.l.b16 %v3559
    %v4206 = vunpack.c.h.b16 %v3559
    %v4207 = vunpack.c.l.b16 %v3560
    %v4208 = vunpack.c.h.b16 %v3560
    %v4209 = vunpack.c.l.b16 %v3561
    %v4210 = vunpack.c.h.b16 %v3561
    %v4211 = vunpack.c.l.b16 %v3562
    %v4212 = vunpack.c.h.b16 %v3562
    %v4213 = vunpack.c.l.b16 %v3563
    %v4214 = vunpack.c.h.b16 %v3563
    %v4215 = vunpack.c.l.b16 %v3564
    %v4216 = vunpack.c.h.b16 %v3564
    %v4217 = vunpack.c.l.b16 %v3565
    %v4218 = vunpack.c.h.b16 %v3565
    %v4219 = vunpack.c.l.b16 %v3566
    %v4220 = vunpack.c.h.b16 %v3566
    %v4221 = vunpack.c.l.b16 %v3567
    %v4222 = vunpack.c.h.b16 %v3567
    %v4223 = vunpack.c.l.b16 %v3568
    %v4224 = vunpack.c.h.b16 %v3568
    %v4225 = vunpack.c.l.b16 %v3569
    %v4226 = vunpack.c.h.b16 %v3569
    %v4227 = vunpack.c.l.b16 %v3570
    %v4228 = vunpack.c.h.b16 %v3570
    %v4229 = vunpack.c.l.b16 %v3571
    %v4230 = vunpack.c.h.b16 %v3571
    %v4231 = vunpack.c.l.b16 %v3572
    %v4232 = vunpack.c.h.b16 %v3572
    %v4233 = vunpack.c.l.b16 %v3573
    %v4234 = vunpack.c.h.b16 %v3573
    %v4235 = vunpack.c.l.b16 %v3574
    %v4236 = vunpack.c.h.b16 %v3574
    %v4237 = vunpack.c.l.b16 %v3575
    %v4238 = vunpack.c.h.b16 %v3575
    %v4239 = vunpack.c.l.b16 %v3576
    %v4240 = vunpack.c.h.b16 %v3576
    %v4241 = vunpack.c.l.b16 %v3577
    %v4242 = vunpack.c.h.b16 %v3577
    %v4243 = vunpack.c.l.b16 %v3578
    %v4244 = vunpack.c.h.b16 %v3578
    %v4245 = vunpack.c.l.b16 %v3579
    %v4246 = vunpack.c.h.b16 %v3579
    %v4247 = vunpack.c.l.b16 %v3580
    %v4248 = vunpack.c.h.b16 %v3580
    %v4249 = vunpack.c.l.b16 %v3581
    %v4250 = vunpack.c.h.b16 %v3581
    %v4251 = vunpack.c.l.b16 %v3582
    %v4252 = vunpack.c.h.b16 %v3582
    %v4253 = vunpack.c.l.b16 %v3583
    %v4254 = vunpack.c.h.b16 %v3583
    %v4255 = vunpack.c.l.b16 %v3584
    %v4256 = vunpack.c.h.b16 %v3584
    %v4257 = vunpack.c.l.b16 %v3585
    %v4258 = vunpack.c.h.b16 %v3585
    %v4259 = vunpack.c.l.b16 %v3586
    %v4260 = vunpack.c.h.b16 %v3586
    %v4261 = vunpack.c.l.b16 %v3587
    %v4262 = vunpack.c.h.b16 %v3587
    %v4263 = vunpack.c.l.b16 %v3588
    %v4264 = vunpack.c.h.b16 %v3588
    %v4265 = vunpack.c.l.b16 %v3589
    %v4266 = vunpack.c.h.b16 %v3589
    %v4267 = vunpack.c.l.b16 %v3590
    %v4268 = vunpack.c.h.b16 %v3590
    %v4269 = vunpack.c.l.b16 %v3591
    %v4270 = vunpack.c.h.b16 %v3591
    %v4271 = vunpack.c.l.b16 %v3592
    %v4272 = vunpack.c.h.b16 %v3592
    %v4273 = vunpack.c.l.b16 %v3593
    %v4274 = vunpack.c.h.b16 %v3593
    %v4275 = vunpack.c.l.b16 %v3594
    %v4276 = vunpack.c.h.b16 %v3594
    %v4277 = vunpack.c.l.b16 %v3595
    %v4278 = vunpack.c.h.b16 %v3595
    %v4279 = vunpack.c.l.b16 %v3596
    %v4280 = vunpack.c.h.b16 %v3596
    %v4281 = vunpack.c.l.b16 %v3597
    %v4282 = vunpack.c.h.b16 %v3597
    %v4283 = vunpack.c.l.b16 %v3598
    %v4284 = vunpack.c.h.b16 %v3598
    %v4285 = vunpack.c.l.b16 %v3599
    %v4286 = vunpack.c.h.b16 %v3599
    %v4287 = vunpack.c.l.b16 %v3600
    %v4288 = vunpack.c.h.b16 %v3600
    %v4289 = vunpack.c.l.b16 %v3601
    %v4290 = vunpack.c.h.b16 %v3601
    %v4291 = vunpack.c.l.b16 %v3602
    %v4292 = vunpack.c.h.b16 %v3602
    %v4293 = vunpack.c.l.b16 %v3603
    %v4294 = vunpack.c.h.b16 %v3603
    %v4295 = vunpack.c.l.b16 %v3604
    %v4296 = vunpack.c.h.b16 %v3604
    %v4297 = vunpack.c.l.b16 %v3605
    %v4298 = vunpack.c.h.b16 %v3605
    %v4299 = vunpack.c.l.b16 %v3606
    %v4300 = vunpack.c.h.b16 %v3606
    %v4301 = vunpack.c.l.b16 %v3607
    %v4302 = vunpack.c.h.b16 %v3607
    %v4303 = vunpack.c.l.b16 %v3608
    %v4304 = vunpack.c.h.b16 %v3608
    %v4305 = vunpack.c.l.b16 %v3609
    %v4306 = vunpack.c.h.b16 %v3609
    %v4307 = vunpack.c.l.b16 %v3610
    %v4308 = vunpack.c.h.b16 %v3610
    %v4309 = vunpack.c.l.b16 %v3611
    %v4310 = vunpack.c.h.b16 %v3611
    %v4311 = vunpack.c.l.b16 %v3612
    %v4312 = vunpack.c.h.b16 %v3612
    %v4313 = vunpack.c.l.b16 %v3613
    %v4314 = vunpack.c.h.b16 %v3613
    %v4315 = vunpack.c.l.b16 %v3614
    %v4316 = vunpack.c.h.b16 %v3614
    %v4317 = vunpack.c.l.b16 %v3615
    %v4318 = vunpack.c.h.b16 %v3615
    %v4319 = vunpack.c.l.b16 %v3616
    %v4320 = vunpack.c.h.b16 %v3616
    %v4321 = vunpack.c.l.b16 %v3617
    %v4322 = vunpack.c.h.b16 %v3617
    %v4323 = vunpack.c.l.b16 %v3618
    %v4324 = vunpack.c.h.b16 %v3618
    %v4325 = vunpack.c.l.b16 %v3619
    %v4326 = vunpack.c.h.b16 %v3619
    %v4327 = vunpack.c.l.b16 %v3620
    %v4328 = vunpack.c.h.b16 %v3620
    %v4329 = vunpack.c.l.b16 %v3621
    %v4330 = vunpack.c.h.b16 %v3621
    %v4331 = vunpack.c.l.b16 %v3622
    %v4332 = vunpack.c.h.b16 %v3622
    %v4333 = vunpack.c.l.b16 %v3623
    %v4334 = vunpack.c.h.b16 %v3623
    %v4335 = vunpack.c.l.b16 %v3624
    %v4336 = vunpack.c.h.b16 %v3624
    %v4337 = vunpack.c.l.b16 %v3625
    %v4338 = vunpack.c.h.b16 %v3625
    %v4339 = vunpack.c.l.b16 %v3626
    %v4340 = vunpack.c.h.b16 %v3626
    %v4341 = vunpack.c.l.b16 %v3627
    %v4342 = vunpack.c.h.b16 %v3627
    %v4343 = vunpack.c.l.b16 %v3628
    %v4344 = vunpack.c.h.b16 %v3628
    %v4345 = vunpack.c.l.b16 %v3629
    %v4346 = vunpack.c.h.b16 %v3629
    %v4347 = vunpack.c.l.b16 %v3630
    %v4348 = vunpack.c.h.b16 %v3630
    %v4349 = vunpack.c.l.b16 %v3631
    %v4350 = vunpack.c.h.b16 %v3631
    %v4351 = vunpack.c.l.b16 %v3632
    %v4352 = vunpack.c.h.b16 %v3632
    %v4353 = vunpack.c.l.b16 %v3633
    %v4354 = vunpack.c.h.b16 %v3633
    %v4355 = vunpack.c.l.b16 %v3634
    %v4356 = vunpack.c.h.b16 %v3634
    %v4357 = vunpack.c.l.b16 %v3635
    %v4358 = vunpack.c.h.b16 %v3635
    %v4359 = vunpack.c.l.b16 %v3636
    %v4360 = vunpack.c.h.b16 %v3636
    %v4361 = vunpack.c.l.b16 %v3637
    %v4362 = vunpack.c.h.b16 %v3637
    %v4363 = vunpack.c.l.b16 %v3638
    %v4364 = vunpack.c.h.b16 %v3638
    %v4365 = vunpack.c.l.b16 %v3639
    %v4366 = vunpack.c.h.b16 %v3639
    %v4367 = vunpack.c.l.b16 %v3640
    %v4368 = vunpack.c.h.b16 %v3640
    %v4369 = vunpack.c.l.b16 %v3641
    %v4370 = vunpack.c.h.b16 %v3641
    %v4371 = vunpack.c.l.b16 %v3642
    %v4372 = vunpack.c.h.b16 %v3642
    %v4373 = vunpack.c.l.b16 %v3643
    %v4374 = vunpack.c.h.b16 %v3643
    %v4375 = vunpack.c.l.b16 %v3644
    %v4376 = vunpack.c.h.b16 %v3644
    %v4377 = vunpack.c.l.b16 %v3645
    %v4378 = vunpack.c.h.b16 %v3645
    %v4379 = vunpack.c.l.b16 %v3646
    %v4380 = vunpack.c.h.b16 %v3646
    %v4381 = vunpack.c.l.b16 %v3647
    %v4382 = vunpack.c.h.b16 %v3647
    %v4383 = vunpack.c.l.b16 %v3648
    %v4384 = vunpack.c.h.b16 %v3648
    %v4385 = vunpack.c.l.b16 %v3649
    %v4386 = vunpack.c.h.b16 %v3649
    %v4387 = vunpack.c.l.b16 %v3650
    %v4388 = vunpack.c.h.b16 %v3650
    %v4389 = vunpack.c.l.b16 %v3651
    %v4390 = vunpack.c.h.b16 %v3651
    %v4391 = vunpack.c.l.b16 %v3652
    %v4392 = vunpack.c.h.b16 %v3652
    %v4393 = vunpack.c.l.b16 %v3653
    %v4394 = vunpack.c.h.b16 %v3653
    %v4395 = vunpack.c.l.b16 %v3654
    %v4396 = vunpack.c.h.b16 %v3654
    %v4397 = vunpack.c.l.b16 %v3655
    %v4398 = vunpack.c.h.b16 %v3655
    %v4399 = vunpack.c.l.b16 %v3656
    %v4400 = vunpack.c.h.b16 %v3656
    %v4401 = vunpack.c.l.b16 %v3657
    %v4402 = vunpack.c.h.b16 %v3657
    %v4403 = vunpack.c.l.b16 %v3658
    %v4404 = vunpack.c.h.b16 %v3658
    %v4405 = vunpack.c.l.b16 %v3659
    %v4406 = vunpack.c.h.b16 %v3659
    %v4407 = vunpack.c.l.b16 %v3660
    %v4408 = vunpack.c.h.b16 %v3660
    %v4409 = vunpack.c.l.b16 %v3661
    %v4410 = vunpack.c.h.b16 %v3661
    %v4411 = vunpack.c.l.b16 %v3662
    %v4412 = vunpack.c.h.b16 %v3662
    %v4413 = vunpack.c.l.b16 %v3663
    %v4414 = vunpack.c.h.b16 %v3663
    %v4415 = vunpack.c.l.b16 %v3664
    %v4416 = vunpack.c.h.b16 %v3664
    %v4417 = vunpack.c.l.b16 %v3665
    %v4418 = vunpack.c.h.b16 %v3665
    %v4419 = vunpack.c.l.b16 %v3666
    %v4420 = vunpack.c.h.b16 %v3666
    %v4421 = vunpack.c.l.b16 %v3667
    %v4422 = vunpack.c.h.b16 %v3667
    %v4423 = vunpack.c.l.b16 %v3668
    %v4424 = vunpack.c.h.b16 %v3668
    %v4425 = vunpack.c.l.b16 %v3669
    %v4426 = vunpack.c.h.b16 %v3669
    %v4427 = vunpack.c.l.b16 %v3670
    %v4428 = vunpack.c.h.b16 %v3670
    %v4429 = vunpack.c.l.b16 %v3671
    %v4430 = vunpack.c.h.b16 %v3671
    %v4431 = vunpack.c.l.b16 %v3672
    %v4432 = vunpack.c.h.b16 %v3672
    %v4433 = vunpack.c.l.b16 %v3673
    %v4434 = vunpack.c.h.b16 %v3673
    %v4435 = vunpack.c.l.b16 %v3674
    %v4436 = vunpack.c.h.b16 %v3674
    %v4437 = vunpack.c.l.b16 %v3675
    %v4438 = vunpack.c.h.b16 %v3675
    %v4439 = vunpack.c.l.b16 %v3676
    %v4440 = vunpack.c.h.b16 %v3676
    %v4441 = vunpack.c.l.b16 %v3677
    %v4442 = vunpack.c.h.b16 %v3677
    %v4443 = vunpack.c.l.b16 %v3678
    %v4444 = vunpack.c.h.b16 %v3678
    %v4445 = vunpack.c.l.b16 %v3679
    %v4446 = vunpack.c.h.b16 %v3679
    %v4447 = vunpack.c.l.b16 %v3680
    %v4448 = vunpack.c.h.b16 %v3680
    %v4449 = vunpack.c.l.b16 %v3681
    %v4450 = vunpack.c.h.b16 %v3681
    %v4451 = vunpack.c.l.b16 %v3682
    %v4452 = vunpack.c.h.b16 %v3682
    %v4453 = vunpack.c.l.b16 %v3683
    %v4454 = vunpack.c.h.b16 %v3683
    %v4455 = vunpack.c.l.b16 %v3684
    %v4456 = vunpack.c.h.b16 %v3684
    %v4457 = vunpack.c.l.b16 %v3685
    %v4458 = vunpack.c.h.b16 %v3685
    %v4459 = vunpack.c.l.b16 %v3686
    %v4460 = vunpack.c.h.b16 %v3686
    %v4461 = vunpack.c.l.b16 %v3687
    %v4462 = vunpack.c.h.b16 %v3687
    %v4463 = vunpack.c.l.b16 %v3688
    %v4464 = vunpack.c.h.b16 %v3688
    %v4465 = vunpack.c.l.b16 %v3689
    %v4466 = vunpack.c.h.b16 %v3689
    %v4467 = vunpack.c.l.b16 %v3690
    %v4468 = vunpack.c.h.b16 %v3690
    %v4469 = vunpack.c.l.b16 %v3691
    %v4470 = vunpack.c.h.b16 %v3691
    %v4471 = vunpack.c.l.b16 %v3692
    %v4472 = vunpack.c.h.b16 %v3692
    %v4473 = vunpack.c.l.b16 %v3693
    %v4474 = vunpack.c.h.b16 %v3693
    %v4475 = vunpack.c.l.b16 %v3694
    %v4476 = vunpack.c.h.b16 %v3694
    %v4477 = vunpack.c.l.b16 %v3695
    %v4478 = vunpack.c.h.b16 %v3695
    %v4479 = vunpack.c.l.b16 %v3696
    %v4480 = vunpack.c.h.b16 %v3696
    %v4481 = vunpack.c.l.b16 %v3697
    %v4482 = vunpack.c.h.b16 %v3697
    %v4483 = vunpack.c.l.b16 %v3698
    %v4484 = vunpack.c.h.b16 %v3698
    %v4485 = vunpack.c.l.b16 %v3699
    %v4486 = vunpack.c.h.b16 %v3699
    %v4487 = vunpack.c.l.b16 %v3700
    %v4488 = vunpack.c.h.b16 %v3700
    %v4489 = vunpack.c.l.b16 %v3701
    %v4490 = vunpack.c.h.b16 %v3701
    %v4491 = vunpack.c.l.b16 %v3702
    %v4492 = vunpack.c.h.b16 %v3702
    %v4493 = vunpack.c.l.b16 %v3703
    %v4494 = vunpack.c.h.b16 %v3703
    %v4495 = vunpack.c.l.b16 %v3704
    %v4496 = vunpack.c.h.b16 %v3704
    %v4497 = vunpack.c.l.b16 %v3705
    %v4498 = vunpack.c.h.b16 %v3705
    %v4499 = vunpack.c.l.b16 %v3706
    %v4500 = vunpack.c.h.b16 %v3706
    %v4501 = vunpack.c.l.b16 %v3707
    %v4502 = vunpack.c.h.b16 %v3707
    %v4503 = vunpack.c.l.b16 %v3708
    %v4504 = vunpack.c.h.b16 %v3708
    %v4505 = vunpack.c.l.b16 %v3709
    %v4506 = vunpack.c.h.b16 %v3709
    %v4507 = vunpack.c.l.b16 %v3710
    %v4508 = vunpack.c.h.b16 %v3710
    %v4509 = vunpack.c.l.b16 %v3711
    %v4510 = vunpack.c.h.b16 %v3711
    %v4511 = vunpack.c.l.b16 %v3712
    %v4512 = vunpack.c.h.b16 %v3712
    %v4513 = vunpack.c.l.b16 %v3713
    %v4514 = vunpack.c.h.b16 %v3713
    %v4515 = vunpack.c.l.b16 %v3714
    %v4516 = vunpack.c.h.b16 %v3714
    %v4517 = vunpack.c.l.b16 %v3715
    %v4518 = vunpack.c.h.b16 %v3715
    %v4519 = vunpack.c.l.b16 %v3716
    %v4520 = vunpack.c.h.b16 %v3716
    %v4521 = vunpack.c.l.b16 %v3717
    %v4522 = vunpack.c.h.b16 %v3717
    %v4523 = vunpack.c.l.b16 %v3718
    %v4524 = vunpack.c.h.b16 %v3718
    %v4525 = vunpack.c.l.b16 %v3719
    %v4526 = vunpack.c.h.b16 %v3719
    %v4527 = vunpack.c.l.b16 %v3720
    %v4528 = vunpack.c.h.b16 %v3720
    %v4529 = vunpack.c.l.b16 %v3721
    %v4530 = vunpack.c.h.b16 %v3721
    %v4531 = vunpack.c.l.b16 %v3722
    %v4532 = vunpack.c.h.b16 %v3722
    %v4533 = vpack.c.b16 %v4029, %v4021
    %v4534 = vpack.c.b16 %v4030, %v4022
    %v4535 = vpack.c.b16 %v4031, %v4023
    %v4536 = vpack.c.b16 %v4032, %v4024
    %v4537 = vpack.c.b16 %v4033, %v4025
    %v4538 = vpack.c.b16 %v4034, %v4026
    %v4539 = vpack.c.b16 %v4035, %v4027
    %v4540 = vpack.c.b16 %v4036, %v4028
    %v4541 = vpack.c.b16 %v4045, %v4037
    %v4542 = vpack.c.b16 %v4046, %v4038
    %v4543 = vpack.c.b16 %v4047, %v4039
    %v4544 = vpack.c.b16 %v4048, %v4040
    %v4545 = vpack.c.b16 %v4049, %v4041
    %v4546 = vpack.c.b16 %v4050, %v4042
    %v4547 = vpack.c.b16 %v4051, %v4043
    %v4548 = vpack.c.b16 %v4052, %v4044
    %v4549 = vpack.c.b16 %v4061, %v4053
    %v4550 = vpack.c.b16 %v4062, %v4054
    %v4551 = vpack.c.b16 %v4063, %v4055
    %v4552 = vpack.c.b16 %v4064, %v4056
    %v4553 = vpack.c.b16 %v4065, %v4057
    %v4554 = vpack.c.b16 %v4066, %v4058
    %v4555 = vpack.c.b16 %v4067, %v4059
    %v4556 = vpack.c.b16 %v4068, %v4060
    %v4557 = vpack.c.b16 %v4077, %v4069
    %v4558 = vpack.c.b16 %v4078, %v4070
    %v4559 = vpack.c.b16 %v4079, %v4071
    %v4560 = vpack.c.b16 %v4080, %v4072
    %v4561 = vpack.c.b16 %v4081, %v4073
    %v4562 = vpack.c.b16 %v4082, %v4074
    %v4563 = vpack.c.b16 %v4083, %v4075
    %v4564 = vpack.c.b16 %v4084, %v4076
    %v4565 = vpack.c.b16 %v4093, %v4085
    %v4566 = vpack.c.b16 %v4094, %v4086
    %v4567 = vpack.c.b16 %v4095, %v4087
    %v4568 = vpack.c.b16 %v4096, %v4088
    %v4569 = vpack.c.b16 %v4097, %v4089
    %v4570 = vpack.c.b16 %v4098, %v4090
    %v4571 = vpack.c.b16 %v4099, %v4091
    %v4572 = vpack.c.b16 %v4100, %v4092
    %v4573 = vpack.c.b16 %v4109, %v4101
    %v4574 = vpack.c.b16 %v4110, %v4102
    %v4575 = vpack.c.b16 %v4111, %v4103
    %v4576 = vpack.c.b16 %v4112, %v4104
    %v4577 = vpack.c.b16 %v4113, %v4105
    %v4578 = vpack.c.b16 %v4114, %v4106
    %v4579 = vpack.c.b16 %v4115, %v4107
    %v4580 = vpack.c.b16 %v4116, %v4108
    %v4581 = vpack.c.b16 %v4125, %v4117
    %v4582 = vpack.c.b16 %v4126, %v4118
    %v4583 = vpack.c.b16 %v4127, %v4119
    %v4584 = vpack.c.b16 %v4128, %v4120
    %v4585 = vpack.c.b16 %v4129, %v4121
    %v4586 = vpack.c.b16 %v4130, %v4122
    %v4587 = vpack.c.b16 %v4131, %v4123
    %v4588 = vpack.c.b16 %v4132, %v4124
    %v4589 = vpack.c.b16 %v4141, %v4133
    %v4590 = vpack.c.b16 %v4142, %v4134
    %v4591 = vpack.c.b16 %v4143, %v4135
    %v4592 = vpack.c.b16 %v4144, %v4136
    %v4593 = vpack.c.b16 %v4145, %v4137
    %v4594 = vpack.c.b16 %v4146, %v4138
    %v4595 = vpack.c.b16 %v4147, %v4139
    %v4596 = vpack.c.b16 %v4148, %v4140
    %v4597 = vpack.c.b16 %v4157, %v4149
    %v4598 = vpack.c.b16 %v4158, %v4150
    %v4599 = vpack.c.b16 %v4159, %v4151
    %v4600 = vpack.c.b16 %v4160, %v4152
    %v4601 = vpack.c.b16 %v4161, %v4153
    %v4602 = vpack.c.b16 %v4162, %v4154
    %v4603 = vpack.c.b16 %v4163, %v4155
    %v4604 = vpack.c.b16 %v4164, %v4156
    %v4605 = vpack.c.b16 %v4173, %v4165
    %v4606 = vpack.c.b16 %v4174, %v4166
    %v4607 = vpack.c.b16 %v4175, %v4167
    %v4608 = vpack.c.b16 %v4176, %v4168
    %v4609 = vpack.c.b16 %v4177, %v4169
    %v4610 = vpack.c.b16 %v4178, %v4170
    %v4611 = vpack.c.b16 %v4179, %v4171
    %v4612 = vpack.c.b16 %v4180, %v4172
    %v4613 = vpack.c.b16 %v4189, %v4181
    %v4614 = vpack.c.b16 %v4190, %v4182
    %v4615 = vpack.c.b16 %v4191, %v4183
    %v4616 = vpack.c.b16 %v4192, %v4184
    %v4617 = vpack.c.b16 %v4193, %v4185
    %v4618 = vpack.c.b16 %v4194, %v4186
    %v4619 = vpack.c.b16 %v4195, %v4187
    %v4620 = vpack.c.b16 %v4196, %v4188
    %v4621 = vpack.c.b16 %v4205, %v4197
    %v4622 = vpack.c.b16 %v4206, %v4198
    %v4623 = vpack.c.b16 %v4207, %v4199
    %v4624 = vpack.c.b16 %v4208, %v4200
    %v4625 = vpack.c.b16 %v4209, %v4201
    %v4626 = vpack.c.b16 %v4210, %v4202
    %v4627 = vpack.c.b16 %v4211, %v4203
    %v4628 = vpack.c.b16 %v4212, %v4204
    %v4629 = vpack.c.b16 %v4221, %v4213
    %v4630 = vpack.c.b16 %v4222, %v4214
    %v4631 = vpack.c.b16 %v4223, %v4215
    %v4632 = vpack.c.b16 %v4224, %v4216
    %v4633 = vpack.c.b16 %v4225, %v4217
    %v4634 = vpack.c.b16 %v4226, %v4218
    %v4635 = vpack.c.b16 %v4227, %v4219
    %v4636 = vpack.c.b16 %v4228, %v4220
    %v4637 = vpack.c.b16 %v4237, %v4229
    %v4638 = vpack.c.b16 %v4238, %v4230
    %v4639 = vpack.c.b16 %v4239, %v4231
    %v4640 = vpack.c.b16 %v4240, %v4232
    %v4641 = vpack.c.b16 %v4241, %v4233
    %v4642 = vpack.c.b16 %v4242, %v4234
    %v4643 = vpack.c.b16 %v4243, %v4235
    %v4644 = vpack.c.b16 %v4244, %v4236
    %v4645 = vpack.c.b16 %v4253, %v4245
    %v4646 = vpack.c.b16 %v4254, %v4246
    %v4647 = vpack.c.b16 %v4255, %v4247
    %v4648 = vpack.c.b16 %v4256, %v4248
    %v4649 = vpack.c.b16 %v4257, %v4249
    %v4650 = vpack.c.b16 %v4258, %v4250
    %v4651 = vpack.c.b16 %v4259, %v4251
    %v4652 = vpack.c.b16 %v4260, %v4252
    %v4653 = vpack.c.b16 %v4269, %v4261
    %v4654 = vpack.c.b16 %v4270, %v4262
    %v4655 = vpack.c.b16 %v4271, %v4263
    %v4656 = vpack.c.b16 %v4272, %v4264
    %v4657 = vpack.c.b16 %v4273, %v4265
    %v4658 = vpack.c.b16 %v4274, %v4266
    %v4659 = vpack.c.b16 %v4275, %v4267
    %v4660 = vpack.c.b16 %v4276, %v4268
    %v4661 = vpack.c.b16 %v4285, %v4277
    %v4662 = vpack.c.b16 %v4286, %v4278
    %v4663 = vpack.c.b16 %v4287, %v4279
    %v4664 = vpack.c.b16 %v4288, %v4280
    %v4665 = vpack.c.b16 %v4289, %v4281
    %v4666 = vpack.c.b16 %v4290, %v4282
    %v4667 = vpack.c.b16 %v4291, %v4283
    %v4668 = vpack.c.b16 %v4292, %v4284
    %v4669 = vpack.c.b16 %v4301, %v4293
    %v4670 = vpack.c.b16 %v4302, %v4294
    %v4671 = vpack.c.b16 %v4303, %v4295
    %v4672 = vpack.c.b16 %v4304, %v4296
    %v4673 = vpack.c.b16 %v4305, %v4297
    %v4674 = vpack.c.b16 %v4306, %v4298
    %v4675 = vpack.c.b16 %v4307, %v4299
    %v4676 = vpack.c.b16 %v4308, %v4300
    %v4677 = vpack.c.b16 %v4317, %v4309
    %v4678 = vpack.c.b16 %v4318, %v4310
    %v4679 = vpack.c.b16 %v4319, %v4311
    %v4680 = vpack.c.b16 %v4320, %v4312
    %v4681 = vpack.c.b16 %v4321, %v4313
    %v4682 = vpack.c.b16 %v4322, %v4314
    %v4683 = vpack.c.b16 %v4323, %v4315
    %v4684 = vpack.c.b16 %v4324, %v4316
    %v4685 = vpack.c.b16 %v4333, %v4325
    %v4686 = vpack.c.b16 %v4334, %v4326
    %v4687 = vpack.c.b16 %v4335, %v4327
    %v4688 = vpack.c.b16 %v4336, %v4328
    %v4689 = vpack.c.b16 %v4337, %v4329
    %v4690 = vpack.c.b16 %v4338, %v4330
    %v4691 = vpack.c.b16 %v4339, %v4331
    %v4692 = vpack.c.b16 %v4340, %v4332
    %v4693 = vpack.c.b16 %v4349, %v4341
    %v4694 = vpack.c.b16 %v4350, %v4342
    %v4695 = vpack.c.b16 %v4351, %v4343
    %v4696 = vpack.c.b16 %v4352, %v4344
    %v4697 = vpack.c.b16 %v4353, %v4345
    %v4698 = vpack.c.b16 %v4354, %v4346
    %v4699 = vpack.c.b16 %v4355, %v4347
    %v4700 = vpack.c.b16 %v4356, %v4348
    %v4701 = vpack.c.b16 %v4365, %v4357
    %v4702 = vpack.c.b16 %v4366, %v4358
    %v4703 = vpack.c.b16 %v4367, %v4359
    %v4704 = vpack.c.b16 %v4368, %v4360
    %v4705 = vpack.c.b16 %v4369, %v4361
    %v4706 = vpack.c.b16 %v4370, %v4362
    %v4707 = vpack.c.b16 %v4371, %v4363
    %v4708 = vpack.c.b16 %v4372, %v4364
    %v4709 = vpack.c.b16 %v4381, %v4373
    %v4710 = vpack.c.b16 %v4382, %v4374
    %v4711 = vpack.c.b16 %v4383, %v4375
    %v4712 = vpack.c.b16 %v4384, %v4376
    %v4713 = vpack.c.b16 %v4385, %v4377
    %v4714 = vpack.c.b16 %v4386, %v4378
    %v4715 = vpack.c.b16 %v4387, %v4379
    %v4716 = vpack.c.b16 %v4388, %v4380
    %v4717 = vpack.c.b16 %v4397, %v4389
    %v4718 = vpack.c.b16 %v4398, %v4390
    %v4719 = vpack.c.b16 %v4399, %v4391
    %v4720 = vpack.c.b16 %v4400, %v4392
    %v4721 = vpack.c.b16 %v4401, %v4393
    %v4722 = vpack.c.b16 %v4402, %v4394
    %v4723 = vpack.c.b16 %v4403, %v4395
    %v4724 = vpack.c.b16 %v4404, %v4396
    %v4725 = vpack.c.b16 %v4413, %v4405
    %v4726 = vpack.c.b16 %v4414, %v4406
    %v4727 = vpack.c.b16 %v4415, %v4407
    %v4728 = vpack.c.b16 %v4416, %v4408
    %v4729 = vpack.c.b16 %v4417, %v4409
    %v4730 = vpack.c.b16 %v4418, %v4410
    %v4731 = vpack.c.b16 %v4419, %v4411
    %v4732 = vpack.c.b16 %v4420, %v4412
    %v4733 = vpack.c.b16 %v4429, %v4421
    %v4734 = vpack.c.b16 %v4430, %v4422
    %v4735 = vpack.c.b16 %v4431, %v4423
    %v4736 = vpack.c.b16 %v4432, %v4424
    %v4737 = vpack.c.b16 %v4433, %v4425
    %v4738 = vpack.c.b16 %v4434, %v4426
    %v4739 = vpack.c.b16 %v4435, %v4427
    %v4740 = vpack.c.b16 %v4436, %v4428
    %v4741 = vpack.c.b16 %v4445, %v4437
    %v4742 = vpack.c.b16 %v4446, %v4438
    %v4743 = vpack.c.b16 %v4447, %v4439
    %v4744 = vpack.c.b16 %v4448, %v4440
    %v4745 = vpack.c.b16 %v4449, %v4441
    %v4746 = vpack.c.b16 %v4450, %v4442
    %v4747 = vpack.c.b16 %v4451, %v4443
    %v4748 = vpack.c.b16 %v4452, %v4444
    %v4749 = vpack.c.b16 %v4461, %v4453
    %v4750 = vpack.c.b16 %v4462, %v4454
    %v4751 = vpack.c.b16 %v4463, %v4455
    %v4752 = vpack.c.b16 %v4464, %v4456
    %v4753 = vpack.c.b16 %v4465, %v4457
    %v4754 = vpack.c.b16 %v4466, %v4458
    %v4755 = vpack.c.b16 %v4467, %v4459
    %v4756 = vpack.c.b16 %v4468, %v4460
    %v4757 = vpack.c.b16 %v4477, %v4469
    %v4758 = vpack.c.b16 %v4478, %v4470
    %v4759 = vpack.c.b16 %v4479, %v4471
    %v4760 = vpack.c.b16 %v4480, %v4472
    %v4761 = vpack.c.b16 %v4481, %v4473
    %v4762 = vpack.c.b16 %v4482, %v4474
    %v4763 = vpack.c.b16 %v4483, %v4475
    %v4764 = vpack.c.b16 %v4484, %v4476
    %v4765 = vpack.c.b16 %v4493, %v4485
    %v4766 = vpack.c.b16 %v4494, %v4486
    %v4767 = vpack.c.b16 %v4495, %v4487
    %v4768 = vpack.c.b16 %v4496, %v4488
    %v4769 = vpack.c.b16 %v4497, %v4489
    %v4770 = vpack.c.b16 %v4498, %v4490
    %v4771 = vpack.c.b16 %v4499, %v4491
    %v4772 = vpack.c.b16 %v4500, %v4492
    %v4773 = vpack.c.b16 %v4509, %v4501
    %v4774 = vpack.c.b16 %v4510, %v4502
    %v4775 = vpack.c.b16 %v4511, %v4503
    %v4776 = vpack.c.b16 %v4512, %v4504
    %v4777 = vpack.c.b16 %v4513, %v4505
    %v4778 = vpack.c.b16 %v4514, %v4506
    %v4779 = vpack.c.b16 %v4515, %v4507
    %v4780 = vpack.c.b16 %v4516, %v4508
    %v4781 = vpack.c.b16 %v4525, %v4517
    %v4782 = vpack.c.b16 %v4526, %v4518
    %v4783 = vpack.c.b16 %v4527, %v4519
    %v4784 = vpack.c.b16 %v4528, %v4520
    %v4785 = vpack.c.b16 %v4529, %v4521
    %v4786 = vpack.c.b16 %v4530, %v4522
    %v4787 = vpack.c.b16 %v4531, %v4523
    %v4788 = vpack.c.b16 %v4532, %v4524
    %5045 = vmatprep.subr.bf16.mxu0 %v4534
    %5046 = vmatpush1.bf16.msra.mxu0 %v4533
    %5047 = vmatprep.subr.bf16.mxu0 %v4542
    %5048 = vmatpush1.bf16.msra.mxu0 %v4541
    %5049 = vmatprep.subr.bf16.mxu0 %v4550
    %5050 = vmatpush1.bf16.msra.mxu0 %v4549
    %5051 = vmatprep.subr.bf16.mxu0 %v4558
    %5052 = vmatpush1.bf16.msra.mxu0 %v4557
    %5053 = vmatprep.subr.bf16.mxu0 %v4566
    %5054 = vmatpush1.bf16.msra.mxu0 %v4565
    %5055 = vmatprep.subr.bf16.mxu0 %v4574
    %5056 = vmatpush1.bf16.msra.mxu0 %v4573
    %5057 = vmatprep.subr.bf16.mxu0 %v4582
    %5058 = vmatpush1.bf16.msra.mxu0 %v4581
    %5059 = vmatprep.subr.bf16.mxu0 %v4590
    %5060 = vmatpush1.bf16.msra.mxu0 %v4589
    %5061 = vmatprep.subr.bf16.mxu0 %v4598
    %5062 = vmatpush1.bf16.msra.mxu0 %v4597
    %5063 = vmatprep.subr.bf16.mxu0 %v4606
    %5064 = vmatpush1.bf16.msra.mxu0 %v4605
    %5065 = vmatprep.subr.bf16.mxu0 %v4614
    %5066 = vmatpush1.bf16.msra.mxu0 %v4613
    %5067 = vmatprep.subr.bf16.mxu0 %v4622
    %5068 = vmatpush1.bf16.msra.mxu0 %v4621
    %5069 = vmatprep.subr.bf16.mxu0 %v4630
    %5070 = vmatpush1.bf16.msra.mxu0 %v4629
    %5071 = vmatprep.subr.bf16.mxu0 %v4638
    %5072 = vmatpush1.bf16.msra.mxu0 %v4637
    %5073 = vmatprep.subr.bf16.mxu0 %v4646
    %5074 = vmatpush1.bf16.msra.mxu0 %v4645
    %5075 = vmatprep.subr.bf16.mxu0 %v4654
    %5076 = vmatpush1.bf16.msra.mxu0 %v4653
    %5077 = vmatprep.mubr.bf16.mxu0 %v3464
    %5078 = vmatmul.mubr.bf16.gmra.mrb[0].mxu0 %v3463
    %v5079 = vpop.f32.mrb[0].mxu0
    %v5080 = vadd.f32 %v3728, %v5079
    %v5081 = vpop.f32.mrb[0].mxu0
    %v5082 = vadd.f32 %v3732, %v5081
    %v5083 = vpop.f32.mrb[0].mxu0
    %v5084 = vpop.f32.mrb[0].mxu0
    %5085 = vdwg.mxu0
    %5086 = vmatprep.subr.bf16.mxu0 %v4662
    %5087 = vmatpush1.bf16.msra.mxu0 %v4661
    %5088 = vmatprep.subr.bf16.mxu0 %v4670
    %5089 = vmatpush1.bf16.msra.mxu0 %v4669
    %5090 = vmatprep.subr.bf16.mxu0 %v4678
    %5091 = vmatpush1.bf16.msra.mxu0 %v4677
    %5092 = vmatprep.subr.bf16.mxu0 %v4686
    %5093 = vmatpush1.bf16.msra.mxu0 %v4685
    %5094 = vmatprep.subr.bf16.mxu0 %v4694
    %5095 = vmatpush1.bf16.msra.mxu0 %v4693
    %5096 = vmatprep.subr.bf16.mxu0 %v4702
    %5097 = vmatpush1.bf16.msra.mxu0 %v4701
    %5098 = vmatprep.subr.bf16.mxu0 %v4710
    %5099 = vmatpush1.bf16.msra.mxu0 %v4709
    %5100 = vmatprep.subr.bf16.mxu0 %v4718
    %5101 = vmatpush1.bf16.msra.mxu0 %v4717
    %5102 = vmatprep.subr.bf16.mxu0 %v4726
    %5103 = vmatpush1.bf16.msra.mxu0 %v4725
    %5104 = vmatprep.subr.bf16.mxu0 %v4734
    %5105 = vmatpush1.bf16.msra.mxu0 %v4733
    %5106 = vmatprep.subr.bf16.mxu0 %v4742
    %5107 = vmatpush1.bf16.msra.mxu0 %v4741
    %5108 = vmatprep.subr.bf16.mxu0 %v4750
    %5109 = vmatpush1.bf16.msra.mxu0 %v4749
    %5110 = vmatprep.subr.bf16.mxu0 %v4758
    %5111 = vmatpush1.bf16.msra.mxu0 %v4757
    %5112 = vmatprep.subr.bf16.mxu0 %v4766
    %5113 = vmatpush1.bf16.msra.mxu0 %v4765
    %5114 = vmatprep.subr.bf16.mxu0 %v4774
    %5115 = vmatpush1.bf16.msra.mxu0 %v4773
    %5116 = vmatprep.subr.bf16.mxu0 %v4782
    %5117 = vmatpush1.bf16.msra.mxu0 %v4781
    %5118 = vmatprep.mubr.bf16.mxu0 %v3466
    %5119 = vmatmul.mubr.bf16.gmra.mrb[0].mxu0 %v3465
    %v5120 = vpop.f32.mrb[0].mxu0
    %v5121 = vadd.f32 %v5080, %v5120
    %v5122 = vpop.f32.mrb[0].mxu0
    %v5123 = vadd.f32 %v5082, %v5122
    %v5124 = vpop.f32.mrb[0].mxu0
    %v5125 = vpop.f32.mrb[0].mxu0
    %5126 = vdwg.mxu0
    %5127 = vmatprep.subr.bf16.mxu0 %v4536
    %5128 = vmatpush1.bf16.msra.mxu0 %v4535
    %5129 = vmatprep.subr.bf16.mxu0 %v4544
    %5130 = vmatpush1.bf16.msra.mxu0 %v4543
    %5131 = vmatprep.subr.bf16.mxu0 %v4552
    %5132 = vmatpush1.bf16.msra.mxu0 %v4551
    %5133 = vmatprep.subr.bf16.mxu0 %v4560
    %5134 = vmatpush1.bf16.msra.mxu0 %v4559
    %5135 = vmatprep.subr.bf16.mxu0 %v4568
    %5136 = vmatpush1.bf16.msra.mxu0 %v4567
    %5137 = vmatprep.subr.bf16.mxu0 %v4576
    %5138 = vmatpush1.bf16.msra.mxu0 %v4575
    %5139 = vmatprep.subr.bf16.mxu0 %v4584
    %5140 = vmatpush1.bf16.msra.mxu0 %v4583
    %5141 = vmatprep.subr.bf16.mxu0 %v4592
    %5142 = vmatpush1.bf16.msra.mxu0 %v4591
    %5143 = vmatprep.subr.bf16.mxu0 %v4600
    %5144 = vmatpush1.bf16.msra.mxu0 %v4599
    %5145 = vmatprep.subr.bf16.mxu0 %v4608
    %5146 = vmatpush1.bf16.msra.mxu0 %v4607
    %5147 = vmatprep.subr.bf16.mxu0 %v4616
    %5148 = vmatpush1.bf16.msra.mxu0 %v4615
    %5149 = vmatprep.subr.bf16.mxu0 %v4624
    %5150 = vmatpush1.bf16.msra.mxu0 %v4623
    %5151 = vmatprep.subr.bf16.mxu0 %v4632
    %5152 = vmatpush1.bf16.msra.mxu0 %v4631
    %5153 = vmatprep.subr.bf16.mxu0 %v4640
    %5154 = vmatpush1.bf16.msra.mxu0 %v4639
    %5155 = vmatprep.subr.bf16.mxu0 %v4648
    %5156 = vmatpush1.bf16.msra.mxu0 %v4647
    %5157 = vmatprep.subr.bf16.mxu0 %v4656
    %5158 = vmatpush1.bf16.msra.mxu0 %v4655
    %5159 = vmatprep.mubr.bf16.mxu0 %v3464
    %5160 = vmatmul.mubr.bf16.gmra.mrb[0].mxu0 %v3463
    %v5161 = vpop.f32.mrb[0].mxu0
    %v5162 = vadd.f32 %v3736, %v5161
    %v5163 = vpop.f32.mrb[0].mxu0
    %v5164 = vadd.f32 %v3740, %v5163
    %v5165 = vpop.f32.mrb[0].mxu0
    %v5166 = vpop.f32.mrb[0].mxu0
    %5167 = vdwg.mxu0
    %5168 = vmatprep.subr.bf16.mxu0 %v4664
    %5169 = vmatpush1.bf16.msra.mxu0 %v4663
    %5170 = vmatprep.subr.bf16.mxu0 %v4672
    %5171 = vmatpush1.bf16.msra.mxu0 %v4671
    %5172 = vmatprep.subr.bf16.mxu0 %v4680
    %5173 = vmatpush1.bf16.msra.mxu0 %v4679
    %5174 = vmatprep.subr.bf16.mxu0 %v4688
    %5175 = vmatpush1.bf16.msra.mxu0 %v4687
    %5176 = vmatprep.subr.bf16.mxu0 %v4696
    %5177 = vmatpush1.bf16.msra.mxu0 %v4695
    %5178 = vmatprep.subr.bf16.mxu0 %v4704
    %5179 = vmatpush1.bf16.msra.mxu0 %v4703
    %5180 = vmatprep.subr.bf16.mxu0 %v4712
    %5181 = vmatpush1.bf16.msra.mxu0 %v4711
    %5182 = vmatprep.subr.bf16.mxu0 %v4720
    %5183 = vmatpush1.bf16.msra.mxu0 %v4719
    %5184 = vmatprep.subr.bf16.mxu0 %v4728
    %5185 = vmatpush1.bf16.msra.mxu0 %v4727
    %5186 = vmatprep.subr.bf16.mxu0 %v4736
    %5187 = vmatpush1.bf16.msra.mxu0 %v4735
    %5188 = vmatprep.subr.bf16.mxu0 %v4744
    %5189 = vmatpush1.bf16.msra.mxu0 %v4743
    %5190 = vmatprep.subr.bf16.mxu0 %v4752
    %5191 = vmatpush1.bf16.msra.mxu0 %v4751
    %5192 = vmatprep.subr.bf16.mxu0 %v4760
    %5193 = vmatpush1.bf16.msra.mxu0 %v4759
    %5194 = vmatprep.subr.bf16.mxu0 %v4768
    %5195 = vmatpush1.bf16.msra.mxu0 %v4767
    %5196 = vmatprep.subr.bf16.mxu0 %v4776
    %5197 = vmatpush1.bf16.msra.mxu0 %v4775
    %5198 = vmatprep.subr.bf16.mxu0 %v4784
    %5199 = vmatpush1.bf16.msra.mxu0 %v4783
    %5200 = vmatprep.mubr.bf16.mxu0 %v3466
    %5201 = vmatmul.mubr.bf16.gmra.mrb[0].mxu0 %v3465
    %v5202 = vpop.f32.mrb[0].mxu0
    %v5203 = vadd.f32 %v5162, %v5202
    %v5204 = vpop.f32.mrb[0].mxu0
    %v5205 = vadd.f32 %v5164, %v5204
    %v5206 = vpop.f32.mrb[0].mxu0
    %v5207 = vpop.f32.mrb[0].mxu0
    %5208 = vdwg.mxu0
    %5209 = vmatprep.subr.bf16.mxu0 %v4538
    %5210 = vmatpush1.bf16.msra.mxu0 %v4537
    %5211 = vmatprep.subr.bf16.mxu0 %v4546
    %5212 = vmatpush1.bf16.msra.mxu0 %v4545
    %5213 = vmatprep.subr.bf16.mxu0 %v4554
    %5214 = vmatpush1.bf16.msra.mxu0 %v4553
    %5215 = vmatprep.subr.bf16.mxu0 %v4562
    %5216 = vmatpush1.bf16.msra.mxu0 %v4561
    %5217 = vmatprep.subr.bf16.mxu0 %v4570
    %5218 = vmatpush1.bf16.msra.mxu0 %v4569
    %5219 = vmatprep.subr.bf16.mxu0 %v4578
    %5220 = vmatpush1.bf16.msra.mxu0 %v4577
    %5221 = vmatprep.subr.bf16.mxu0 %v4586
    %5222 = vmatpush1.bf16.msra.mxu0 %v4585
    %5223 = vmatprep.subr.bf16.mxu0 %v4594
    %5224 = vmatpush1.bf16.msra.mxu0 %v4593
    %5225 = vmatprep.subr.bf16.mxu0 %v4602
    %5226 = vmatpush1.bf16.msra.mxu0 %v4601
    %5227 = vmatprep.subr.bf16.mxu0 %v4610
    %5228 = vmatpush1.bf16.msra.mxu0 %v4609
    %5229 = vmatprep.subr.bf16.mxu0 %v4618
    %5230 = vmatpush1.bf16.msra.mxu0 %v4617
    %5231 = vmatprep.subr.bf16.mxu0 %v4626
    %5232 = vmatpush1.bf16.msra.mxu0 %v4625
    %5233 = vmatprep.subr.bf16.mxu0 %v4634
    %5234 = vmatpush1.bf16.msra.mxu0 %v4633
    %5235 = vmatprep.subr.bf16.mxu0 %v4642
    %5236 = vmatpush1.bf16.msra.mxu0 %v4641
    %5237 = vmatprep.subr.bf16.mxu0 %v4650
    %5238 = vmatpush1.bf16.msra.mxu0 %v4649
    %5239 = vmatprep.subr.bf16.mxu0 %v4658
    %5240 = vmatpush1.bf16.msra.mxu0 %v4657
    %5241 = vmatprep.mubr.bf16.mxu0 %v3464
    %5242 = vmatmul.mubr.bf16.gmra.mrb[0].mxu0 %v3463
    %v5243 = vpop.f32.mrb[0].mxu0
    %v5244 = vadd.f32 %v3744, %v5243
    %v5245 = vpop.f32.mrb[0].mxu0
    %v5246 = vadd.f32 %v3748, %v5245
    %v5247 = vpop.f32.mrb[0].mxu0
    %v5248 = vpop.f32.mrb[0].mxu0
    %5249 = vdwg.mxu0
    %5250 = vmatprep.subr.bf16.mxu0 %v4666
    %5251 = vmatpush1.bf16.msra.mxu0 %v4665
    %5252 = vmatprep.subr.bf16.mxu0 %v4674
    %5253 = vmatpush1.bf16.msra.mxu0 %v4673
    %5254 = vmatprep.subr.bf16.mxu0 %v4682
    %5255 = vmatpush1.bf16.msra.mxu0 %v4681
    %5256 = vmatprep.subr.bf16.mxu0 %v4690
    %5257 = vmatpush1.bf16.msra.mxu0 %v4689
    %5258 = vmatprep.subr.bf16.mxu0 %v4698
    %5259 = vmatpush1.bf16.msra.mxu0 %v4697
    %5260 = vmatprep.subr.bf16.mxu0 %v4706
    %5261 = vmatpush1.bf16.msra.mxu0 %v4705
    %5262 = vmatprep.subr.bf16.mxu0 %v4714
    %5263 = vmatpush1.bf16.msra.mxu0 %v4713
    %5264 = vmatprep.subr.bf16.mxu0 %v4722
    %5265 = vmatpush1.bf16.msra.mxu0 %v4721
    %5266 = vmatprep.subr.bf16.mxu0 %v4730
    %5267 = vmatpush1.bf16.msra.mxu0 %v4729
    %5268 = vmatprep.subr.bf16.mxu0 %v4738
    %5269 = vmatpush1.bf16.msra.mxu0 %v4737
    %5270 = vmatprep.subr.bf16.mxu0 %v4746
    %5271 = vmatpush1.bf16.msra.mxu0 %v4745
    %5272 = vmatprep.subr.bf16.mxu0 %v4754
    %5273 = vmatpush1.bf16.msra.mxu0 %v4753
    %5274 = vmatprep.subr.bf16.mxu0 %v4762
    %5275 = vmatpush1.bf16.msra.mxu0 %v4761
    %5276 = vmatprep.subr.bf16.mxu0 %v4770
    %5277 = vmatpush1.bf16.msra.mxu0 %v4769
    %5278 = vmatprep.subr.bf16.mxu0 %v4778
    %5279 = vmatpush1.bf16.msra.mxu0 %v4777
    %5280 = vmatprep.subr.bf16.mxu0 %v4786
    %5281 = vmatpush1.bf16.msra.mxu0 %v4785
    %5282 = vmatprep.mubr.bf16.mxu0 %v3466
    %5283 = vmatmul.mubr.bf16.gmra.mrb[0].mxu0 %v3465
    %v5284 = vpop.f32.mrb[0].mxu0
    %v5285 = vadd.f32 %v5244, %v5284
    %v5286 = vpop.f32.mrb[0].mxu0
    %v5287 = vadd.f32 %v5246, %v5286
    %v5288 = vpop.f32.mrb[0].mxu0
    %v5289 = vpop.f32.mrb[0].mxu0
    %5290 = vdwg.mxu0
    %5291 = vmatprep.subr.bf16.mxu0 %v4540
    %5292 = vmatpush1.bf16.msra.mxu0 %v4539
    %5293 = vmatprep.subr.bf16.mxu0 %v4548
    %5294 = vmatpush1.bf16.msra.mxu0 %v4547
    %5295 = vmatprep.subr.bf16.mxu0 %v4556
    %5296 = vmatpush1.bf16.msra.mxu0 %v4555
    %5297 = vmatprep.subr.bf16.mxu0 %v4564
    %5298 = vmatpush1.bf16.msra.mxu0 %v4563
    %5299 = vmatprep.subr.bf16.mxu0 %v4572
    %5300 = vmatpush1.bf16.msra.mxu0 %v4571
    %5301 = vmatprep.subr.bf16.mxu0 %v4580
    %5302 = vmatpush1.bf16.msra.mxu0 %v4579
    %5303 = vmatprep.subr.bf16.mxu0 %v4588
    %5304 = vmatpush1.bf16.msra.mxu0 %v4587
    %5305 = vmatprep.subr.bf16.mxu0 %v4596
    %5306 = vmatpush1.bf16.msra.mxu0 %v4595
    %5307 = vmatprep.subr.bf16.mxu0 %v4604
    %5308 = vmatpush1.bf16.msra.mxu0 %v4603
    %5309 = vmatprep.subr.bf16.mxu0 %v4612
    %5310 = vmatpush1.bf16.msra.mxu0 %v4611
    %5311 = vmatprep.subr.bf16.mxu0 %v4620
    %5312 = vmatpush1.bf16.msra.mxu0 %v4619
    %5313 = vmatprep.subr.bf16.mxu0 %v4628
    %5314 = vmatpush1.bf16.msra.mxu0 %v4627
    %5315 = vmatprep.subr.bf16.mxu0 %v4636
    %5316 = vmatpush1.bf16.msra.mxu0 %v4635
    %5317 = vmatprep.subr.bf16.mxu0 %v4644
    %5318 = vmatpush1.bf16.msra.mxu0 %v4643
    %5319 = vmatprep.subr.bf16.mxu0 %v4652
    %5320 = vmatpush1.bf16.msra.mxu0 %v4651
    %5321 = vmatprep.subr.bf16.mxu0 %v4660
    %5322 = vmatpush1.bf16.msra.mxu0 %v4659
    %5323 = vmatprep.mubr.bf16.mxu0 %v3464
    %5324 = vmatmul.mubr.bf16.gmra.mrb[0].mxu0 %v3463
    %v5325 = vpop.f32.mrb[0].mxu0
    %v5326 = vadd.f32 %v3752, %v5325
    %v5327 = vpop.f32.mrb[0].mxu0
    %v5328 = vadd.f32 %v3756, %v5327
    %v5329 = vpop.f32.mrb[0].mxu0
    %v5330 = vpop.f32.mrb[0].mxu0
    %5331 = vdwg.mxu0
    %5332 = vmatprep.subr.bf16.mxu0 %v4668
    %5333 = vmatpush1.bf16.msra.mxu0 %v4667
    %5334 = vmatprep.subr.bf16.mxu0 %v4676
    %5335 = vmatpush1.bf16.msra.mxu0 %v4675
    %5336 = vmatprep.subr.bf16.mxu0 %v4684
    %5337 = vmatpush1.bf16.msra.mxu0 %v4683
    %5338 = vmatprep.subr.bf16.mxu0 %v4692
    %5339 = vmatpush1.bf16.msra.mxu0 %v4691
    %5340 = vmatprep.subr.bf16.mxu0 %v4700
    %5341 = vmatpush1.bf16.msra.mxu0 %v4699
    %5342 = vmatprep.subr.bf16.mxu0 %v4708
    %5343 = vmatpush1.bf16.msra.mxu0 %v4707
    %5344 = vmatprep.subr.bf16.mxu0 %v4716
    %5345 = vmatpush1.bf16.msra.mxu0 %v4715
    %5346 = vmatprep.subr.bf16.mxu0 %v4724
    %5347 = vmatpush1.bf16.msra.mxu0 %v4723
    %5348 = vmatprep.subr.bf16.mxu0 %v4732
    %5349 = vmatpush1.bf16.msra.mxu0 %v4731
    %5350 = vmatprep.subr.bf16.mxu0 %v4740
    %5351 = vmatpush1.bf16.msra.mxu0 %v4739
    %5352 = vmatprep.subr.bf16.mxu0 %v4748
    %5353 = vmatpush1.bf16.msra.mxu0 %v4747
    %5354 = vmatprep.subr.bf16.mxu0 %v4756
    %5355 = vmatpush1.bf16.msra.mxu0 %v4755
    %5356 = vmatprep.subr.bf16.mxu0 %v4764
    %5357 = vmatpush1.bf16.msra.mxu0 %v4763
    %5358 = vmatprep.subr.bf16.mxu0 %v4772
    %5359 = vmatpush1.bf16.msra.mxu0 %v4771
    %5360 = vmatprep.subr.bf16.mxu0 %v4780
    %5361 = vmatpush1.bf16.msra.mxu0 %v4779
    %5362 = vmatprep.subr.bf16.mxu0 %v4788
    %5363 = vmatpush1.bf16.msra.mxu0 %v4787
    %5364 = vmatprep.mubr.bf16.mxu0 %v3466
    %5365 = vmatmul.mubr.bf16.gmra.mrb[0].mxu0 %v3465
    %v5366 = vpop.f32.mrb[0].mxu0
    %v5367 = vadd.f32 %v5326, %v5366
    %v5368 = vpop.f32.mrb[0].mxu0
    %v5369 = vadd.f32 %v5328, %v5368
    %v5370 = vpop.f32.mrb[0].mxu0
    %v5371 = vpop.f32.mrb[0].mxu0
    %5372 = vdwg.mxu0
    %v5373 = vxor.u32 %v5121, 2147483648
    %v5374 = vxor.u32 %v5123, 2147483648
    %v5375 = vxor.u32 %v5203, 2147483648
    %v5376 = vxor.u32 %v5205, 2147483648
    %v5377 = vxor.u32 %v5285, 2147483648
    %v5378 = vxor.u32 %v5287, 2147483648
    %v5379 = vxor.u32 %v5367, 2147483648
    %v5380 = vxor.u32 %v5369, 2147483648
    %v5381 = vmul.f32 %v5373, 1.442695
    %v5382 = vpow.pop %v5381
    %v5383 = vmul.f32 %v5374, 1.442695
    %v5384 = vpow.pop %v5383
    %v5385 = vmul.f32 %v5375, 1.442695
    %v5386 = vpow.pop %v5385
    %v5387 = vmul.f32 %v5376, 1.442695
    %v5388 = vpow.pop %v5387
    %v5389 = vmul.f32 %v5377, 1.442695
    %v5390 = vpow.pop %v5389
    %v5391 = vmul.f32 %v5378, 1.442695
    %v5392 = vpow.pop %v5391
    %v5393 = vmul.f32 %v5379, 1.442695
    %v5394 = vpow.pop %v5393
    %v5395 = vmul.f32 %v5380, 1.442695
    %v5396 = vpow.pop %v5395
    %v5397 = vadd.f32 %v5382, 1.0
    %v5398 = vadd.f32 %v5384, 1.0
    %v5399 = vadd.f32 %v5386, 1.0
    %v5400 = vadd.f32 %v5388, 1.0
    %v5401 = vadd.f32 %v5390, 1.0
    %v5402 = vadd.f32 %v5392, 1.0
    %v5403 = vadd.f32 %v5394, 1.0
    %v5404 = vadd.f32 %v5396, 1.0
    %v5405 = vrcp.pop %v5397
    %v5406 = vmul.f32 1.0, %v5405
    %v5407 = vrcp.pop %v5398
    %v5408 = vmul.f32 1.0, %v5407
    %v5409 = vrcp.pop %v5399
    %v5410 = vmul.f32 1.0, %v5409
    %v5411 = vrcp.pop %v5400
    %v5412 = vmul.f32 1.0, %v5411
    %v5413 = vrcp.pop %v5401
    %v5414 = vmul.f32 1.0, %v5413
    %v5415 = vrcp.pop %v5402
    %v5416 = vmul.f32 1.0, %v5415
    %v5417 = vrcp.pop %v5403
    %v5418 = vmul.f32 1.0, %v5417
    %v5419 = vrcp.pop %v5404
    %v5420 = vmul.f32 1.0, %v5419
    %5421 = vst [vmem:[#allocation16] sm:$0xff] %v5406
    %5422 = vst [vmem:[#allocation16 + $0x8] sm:$0xff] %v5408
    %5423 = vst [vmem:[#allocation16 + $0x10] sm:$0xff] %v5410
    %5424 = vst [vmem:[#allocation16 + $0x18] sm:$0xff] %v5412
    %5425 = vst [vmem:[#allocation16 + $0x20] sm:$0xff] %v5414
    %5426 = vst [vmem:[#allocation16 + $0x28] sm:$0xff] %v5416
    %5427 = vst [vmem:[#allocation16 + $0x30] sm:$0xff] %v5418
    %5428 = vst [vmem:[#allocation16 + $0x38] sm:$0xff] %v5420
    %5429 = vst [vmem:[#allocation17] sm:$0xff] %v2805
    %5430 = vst [vmem:[#allocation19] sm:$0xff] %v2807
    // Predicated region
    $region90: #{tpu_custom_call.1} parent=1 // pred_check
      _
    $region91: #{tpu_custom_call.1} parent=1 // pred_check_branch
      %5432 = sbr.rel (0) target = $region93
    $region92: #{tpu_custom_call.1} parent=1 // pred_region
      %s5434 = ssub.s32 1024, 1024
      %5435 = vsyncadd [#allocation4], %s5434
      %s5437 = sshll.u32 [#allocation16], 4
      %s5438 = int_to_ptr.vmem [resolvable:$true] %s5437
      %5440 = dma.vmem_to_hbm [thread:$0]  %s5438, 1024, %s14, [#allocation4]
    $region93: #{tpu_custom_call.1} parent=1 // pred_fallthru
      _
    // Predicated region
    $region94: #{tpu_custom_call.1} parent=1 // pred_check
      _
    $region95: #{tpu_custom_call.1} parent=1 // pred_check_branch
      %5442 = sbr.rel (0) target = $region97
    $region96: #{tpu_custom_call.1} parent=1 // pred_region
      %s5444 = ssub.s32 128, 128
      %5445 = vsyncadd [#allocation18], %s5444
      %s5447 = sshll.u32 [#allocation17], 4
      %s5448 = int_to_ptr.vmem [resolvable:$true] %s5447
      %5450 = dma.vmem_to_hbm [thread:$0]  %s5448, 128, %s15, [#allocation18]
    $region97: #{tpu_custom_call.1} parent=1 // pred_fallthru
      _
    // Predicated region
    $region98: #{tpu_custom_call.1} parent=1 // pred_check
      _
    $region99: #{tpu_custom_call.1} parent=1 // pred_check_branch
      %5452 = sbr.rel (0) target = $region101
    $region100: #{tpu_custom_call.1} parent=1 // pred_region
      %s5454 = ssub.s32 128, 128
      %5455 = vsyncadd [#allocation18], %s5454
      %s5457 = sshll.u32 [#allocation19], 4
      %s5458 = int_to_ptr.vmem [resolvable:$true] %s5457
      %5460 = dma.vmem_to_hbm [thread:$0]  %s5458, 128, %s16, [#allocation18]
    $region101: #{tpu_custom_call.1} parent=1 // pred_fallthru
      _
    // Predicated region
    $region102: #{tpu_custom_call.1} parent=1 // pred_check
      _
    $region103: #{tpu_custom_call.1} parent=1 // pred_check_branch
      %5462 = sbr.rel (0) target = $region105
    $region104: #{tpu_custom_call.1} parent=1 // pred_region
      %5463 = dma.done [#allocation4], 1024
    $region105: #{tpu_custom_call.1} parent=1 // pred_fallthru
      _
    // Predicated region
    $region106: #{tpu_custom_call.1} parent=1 // pred_check
      _
    $region107: #{tpu_custom_call.1} parent=1 // pred_check_branch
      %5465 = sbr.rel (0) target = $region109
    $region108: #{tpu_custom_call.1} parent=1 // pred_region
      %5466 = dma.done [#allocation18], 128
    $region109: #{tpu_custom_call.1} parent=1 // pred_fallthru
      _
    // Predicated region
    $region110: #{tpu_custom_call.1} parent=1 // pred_check
      _
    $region111: #{tpu_custom_call.1} parent=1 // pred_check_branch
      %5468 = sbr.rel (0) target = $region113
    $region112: #{tpu_custom_call.1} parent=1 // pred_region
      %5469 = dma.done [#allocation18], 128
    $region113: #{tpu_custom_call.1} parent=1 // pred_fallthru
      _
    %5470 = vsyncpa [#allocation3], 1
    %5471 = vsyncpa [#allocation6], 1
    %5472 = vsyncpa [#allocation9], 1
    %5473 = vsyncpa [#allocation12], 1
    %5474 = vsyncpa [#allocation15], 1
    %5475 = vsyncpa [#allocation4], 1
    %5476 = vsyncpa [#allocation18], 1

</llo_original>
